<compile_context>
chip_gen: v6e
topology: v6e:2x2x1
jax: 0.10.0
libtpu: 0.0.40
codegen_flags: <defaults>
</compile_context>

<pallas_src>
import jax
import jax.numpy as jnp
from jax.experimental import pallas as pl
from jax.experimental.pallas import tpu as pltpu  # noqa: F401

# ---------------- config (small, consistent with a BERT-style encoder) ----------------
BATCH = 2
SEQ = 8
HIDDEN = 32
HEADS = 4
HEAD_DIM = HIDDEN // HEADS
INTERMEDIATE = 64
LAYERS = 2
VOCAB = 64
MAX_POS = 16
LN_EPS = 1e-12

N_TOK = BATCH * SEQ
SLAB_LANES = 128


# ---------------- static slab layout (shared by init_params and the kernel) ----------------
def _build_layout():
    layout = {}
    row = [0]

    def add(name, rows, cols):
        layout[name] = (row[0], rows, cols)
        row[0] += rows

    add("word_emb", VOCAB, HIDDEN)
    add("pos_type", N_TOK, HIDDEN)           # precomputed pos+type embedding (const)
    for li in range(LAYERS):
        add(f"qkv_w{li}", HIDDEN, 3 * HIDDEN)
        add(f"o_w{li}", HIDDEN, HIDDEN)
        add(f"ff1_w{li}", HIDDEN, INTERMEDIATE)
        add(f"ff2_w{li}", INTERMEDIATE, HIDDEN)
        add(f"qkv_b{li}", 1, 3 * HIDDEN)
        add(f"o_b{li}", 1, HIDDEN)
        add(f"ln1_g{li}", 1, HIDDEN)
        add(f"ln1_b{li}", 1, HIDDEN)
        add(f"ff1_b{li}", 1, INTERMEDIATE)
        add(f"ff2_b{li}", 1, HIDDEN)
        add(f"ln2_g{li}", 1, HIDDEN)
        add(f"ln2_b{li}", 1, HIDDEN)
    add("emb_ln_g", 1, HIDDEN)
    add("emb_ln_b", 1, HIDDEN)
    add("pool_w", HIDDEN, HIDDEN)
    add("pool_b", 1, HIDDEN)
    add("fc_w", HIDDEN, 1)
    add("fc_b", 1, 1)
    add("cls_sel", BATCH, N_TOK)              # constant CLS row-selection matrix
    add("head_mask", HEADS, HIDDEN)           # constant per-head 0/1 lane masks
    add("batch_block", N_TOK, N_TOK)          # constant block-diagonal batch mask
    total_rows = -(-row[0] // 8) * 8
    return layout, total_rows


LAYOUT, SLAB_ROWS = _build_layout()

# Advisory cost hint for the XLA scheduler (overhead-dominated graph).
_FLOPS = (
    2 * N_TOK * VOCAB * HIDDEN
    + LAYERS * (
        2 * N_TOK * HIDDEN * 3 * HIDDEN
        + HEADS * (4 * N_TOK * N_TOK * HIDDEN)
        + 2 * N_TOK * HIDDEN * HIDDEN
        + 4 * N_TOK * HIDDEN * INTERMEDIATE
    )
    + 2 * BATCH * N_TOK * HIDDEN + 2 * BATCH * HIDDEN * HIDDEN + 2 * BATCH * HIDDEN
)
_TRANSCENDENTALS = LAYERS * (HEADS * N_TOK * N_TOK + N_TOK * INTERMEDIATE) + BATCH * (HIDDEN + 1)
_BYTES = (SLAB_ROWS * SLAB_LANES + 2 * N_TOK + BATCH) * 4
_COST = pl.CostEstimate(flops=_FLOPS, transcendentals=_TRANSCENDENTALS, bytes_accessed=_BYTES)


# ---------------- the single fused Pallas kernel ----------------
def _sentiment_kernel(ids_ref, keep_ref, slab_ref, out_ref):
    """Whole BERT-style forward pass; every tensor stays resident in VMEM."""
    f32 = jnp.float32
    scale = 1.0 / float(HEAD_DIM) ** 0.5

    def get(name):
        r0, nr, nc = LAYOUT[name]
        return slab_ref[r0:r0 + nr, 0:nc]

    def layer_norm(x, g, b):
        mu = jnp.mean(x, axis=-1, keepdims=True)
        c = x - mu
        var = jnp.mean(c * c, axis=-1, keepdims=True)
        return c * jax.lax.rsqrt(var + LN_EPS) * g + b

    # ---- embeddings: one-hot gather on the MXU, then LayerNorm ----
    ids = ids_ref[...]                                               # (N_TOK, 1) int32
    vocab_iota = jax.lax.broadcasted_iota(jnp.int32, (N_TOK, VOCAB), 1)
    one_hot = jnp.where(ids == vocab_iota, 1.0, 0.0).astype(f32)     # (N_TOK, V)
    word = jnp.dot(one_hot, get("word_emb"), preferred_element_type=f32)
    h = layer_norm(word + get("pos_type"), get("emb_ln_g"), get("emb_ln_b"))

    # ---- additive attention mask built in-kernel:
    #      block-diagonal batch isolation (constant) AND key-padding (runtime) ----
    keep = keep_ref[...]                                             # (1, N_TOK) f32 0/1
    allow = (get("batch_block") > 0.5) & (keep > 0.5)                # (N_TOK, N_TOK)
    add_mask = jnp.where(allow, 0.0, -1e9).astype(f32)

    head_masks = get("head_mask")                                    # (HEADS, HIDDEN) 0/1

    # ---- encoder layers ----
    for li in range(LAYERS):
        # fused Q/K/V projection: one MXU matmul
        qkv = jnp.dot(h, get(f"qkv_w{li}"), preferred_element_type=f32) + get(f"qkv_b{li}")
        q = qkv[:, 0 * HIDDEN:1 * HIDDEN]
        k = qkv[:, 1 * HIDDEN:2 * HIDDEN]
        v = qkv[:, 2 * HIDDEN:3 * HIDDEN]

        # Attention over all batches/heads with no narrow slices or transposes:
        # batches packed along rows (block-diagonal mask), heads via constant lane masks.
        ctx = jnp.zeros((N_TOK, HIDDEN), f32)
        for hd in range(HEADS):
            mh = head_masks[hd:hd + 1, :]                            # (1, HIDDEN)
            s = jax.lax.dot_general(
                q * mh, k, (((1,), (1,)), ((), ())),
                preferred_element_type=f32) * scale + add_mask       # (N_TOK, N_TOK)
            # No max-subtraction: scores are LN-bounded; masked entries (-1e9)
            # underflow exp() to 0; every query row has at least one kept key.
            p = jnp.exp(s)
            p = p * pl.reciprocal(jnp.sum(p, axis=-1, keepdims=True), approx=True)
            ctx = ctx + jnp.dot(p, v * mh, preferred_element_type=f32)

        attn = jnp.dot(ctx, get(f"o_w{li}"), preferred_element_type=f32) + get(f"o_b{li}")
        h = layer_norm(attn + h, get(f"ln1_g{li}"), get(f"ln1_b{li}"))

        ffn = jnp.dot(h, get(f"ff1_w{li}"), preferred_element_type=f32) + get(f"ff1_b{li}")
        # TODO(synk): BERT uses erf-GELU; tanh approximation used here (EUP-friendly).
        ffn = jax.nn.gelu(ffn, approximate=True)
        ffn = jnp.dot(ffn, get(f"ff2_w{li}"), preferred_element_type=f32) + get(f"ff2_b{li}")
        h = layer_norm(ffn + h, get(f"ln2_g{li}"), get(f"ln2_b{li}"))

    # ---- pooler (tanh on [CLS]) + classifier head + sigmoid ----
    cls = jnp.dot(get("cls_sel"), h, preferred_element_type=f32)      # (BATCH, HIDDEN)
    pooled = jnp.tanh(
        jnp.dot(cls, get("pool_w"), preferred_element_type=f32) + get("pool_b"))
    logits = jnp.dot(pooled, get("fc_w"), preferred_element_type=f32) + get("fc_b")
    out_ref[...] = jax.nn.sigmoid(logits)


# ---------------- deterministic parameter init (packed into one lane-dense slab) ----------------
def init_params(key):
    def dense(k, fan_in, fan_out):
        w = jax.random.normal(k, (fan_in, fan_out), jnp.float32) * 0.02
        b = jnp.zeros((fan_out,), jnp.float32)
        return w, b

    keys = jax.random.split(key, 4 + LAYERS)
    word_emb = jax.random.normal(keys[0], (VOCAB, HIDDEN), jnp.float32) * 0.02
    pos_emb = jax.random.normal(keys[1], (MAX_POS, HIDDEN), jnp.float32) * 0.02
    type_emb = jax.random.normal(keys[2], (2, HIDDEN), jnp.float32) * 0.02

    slab = jnp.zeros((SLAB_ROWS, SLAB_LANES), jnp.float32)

    def put(name, value):
        nonlocal slab
        r0, nr, nc = LAYOUT[name]
        assert value.shape == (nr, nc), (name, value.shape, (nr, nc))
        slab = slab.at[r0:r0 + nr, 0:nc].set(value.astype(jnp.float32))

    put("word_emb", word_emb)
    # pos + token-type embeddings are input-independent for fixed SEQ -> bake as constant.
    put("pos_type", jnp.tile(pos_emb[:SEQ] + type_emb[0][None, :], (BATCH, 1)))

    ones_h = jnp.ones((1, HIDDEN), jnp.float32)
    zeros_h = jnp.zeros((1, HIDDEN), jnp.float32)

    for li in range(LAYERS):
        lk = jax.random.split(keys[3 + li], 6)
        qw, qb = dense(lk[0], HIDDEN, HIDDEN)
        kw, kb = dense(lk[1], HIDDEN, HIDDEN)
        vw, vb = dense(lk[2], HIDDEN, HIDDEN)
        ow, ob = dense(lk[3], HIDDEN, HIDDEN)
        f1w, f1b = dense(lk[4], HIDDEN, INTERMEDIATE)
        f2w, f2b = dense(lk[5], INTERMEDIATE, HIDDEN)
        put(f"qkv_w{li}", jnp.concatenate([qw, kw, vw], axis=1))                 # (H, 3H)
        put(f"o_w{li}", ow)
        put(f"ff1_w{li}", f1w)
        put(f"ff2_w{li}", f2w)
        put(f"qkv_b{li}", jnp.concatenate([qb, kb, vb]).reshape(1, 3 * HIDDEN))
        put(f"o_b{li}", ob.reshape(1, HIDDEN))
        put(f"ln1_g{li}", ones_h)
        put(f"ln1_b{li}", zeros_h)
        put(f"ff1_b{li}", f1b.reshape(1, INTERMEDIATE))
        put(f"ff2_b{li}", f2b.reshape(1, HIDDEN))
        put(f"ln2_g{li}", ones_h)
        put(f"ln2_b{li}", zeros_h)

    put("emb_ln_g", ones_h)
    put("emb_ln_b", zeros_h)

    pk1, pk2 = jax.random.split(keys[3 + LAYERS], 2)
    pool_w, pool_b = dense(pk1, HIDDEN, HIDDEN)
    fc_w, fc_b = dense(pk2, HIDDEN, 1)
    put("pool_w", pool_w)
    put("pool_b", pool_b.reshape(1, HIDDEN))
    put("fc_w", fc_w)
    put("fc_b", fc_b.reshape(1, 1))

    # Constant CLS selection matrix: cls = cls_sel @ h picks row b*SEQ for each batch b.
    cls_sel = jnp.zeros((BATCH, N_TOK), jnp.float32)
    cls_sel = cls_sel.at[jnp.arange(BATCH), jnp.arange(BATCH) * SEQ].set(1.0)
    put("cls_sel", cls_sel)

    # Constant per-head 0/1 lane masks (hoisted out of the kernel's head loop).
    lane = jnp.arange(HIDDEN)[None, :]
    head_id = jnp.arange(HEADS)[:, None]
    head_mask = ((lane >= head_id * HEAD_DIM) &
                 (lane < (head_id + 1) * HEAD_DIM)).astype(jnp.float32)
    put("head_mask", head_mask)

    # Constant block-diagonal batch-isolation mask (padding handled at runtime in-kernel).
    row_batch = jnp.arange(N_TOK) // SEQ
    put("batch_block", (row_batch[:, None] == row_batch[None, :]).astype(jnp.float32))

    return {"slab": slab}


# ---------------- forward: trivial reshapes + one pallas_call ----------------
@jax.jit
def sentiment_forward(params, input_ids, attention_mask):
    B, S = input_ids.shape
    ids = input_ids.reshape(B * S, 1).astype(jnp.int32)
    keep = attention_mask.reshape(1, B * S).astype(jnp.float32)
    return pl.pallas_call(
        _sentiment_kernel,
        out_shape=jax.ShapeDtypeStruct((B, 1), jnp.float32),
        cost_estimate=_COST,
    )(ids, keep, params["slab"])


if __name__ == "__main__":
    key = jax.random.PRNGKey(0)
    pkey, ikey = jax.random.split(key)
    params = init_params(pkey)

    input_ids = jax.random.randint(ikey, (BATCH, SEQ), 0, VOCAB, dtype=jnp.int32)
    attention_mask = jnp.ones((BATCH, SEQ), jnp.int32).at[:, -2:].set(0)  # last 2 tokens padded

    probs = sentiment_forward(params, input_ids, attention_mask)
    probs = jax.block_until_ready(probs)

    assert probs.shape == (BATCH, 1)
    assert bool(jnp.all(jnp.isfinite(probs)))
    assert bool(jnp.all((probs >= 0.0) & (probs <= 1.0)))
    print("KERNEL_OK")
</pallas_src>

<mosaic_0001>
module attributes {stable_mosaic.version = 11 : i64} {
  func.func @_sentiment_kernel(%arg0: memref<16x1xi32, #tpu.memory_space<vmem>>, %arg1: memref<1x16xf32, #tpu.memory_space<vmem>>, %arg2: memref<512x128xf32, #tpu.memory_space<vmem>>, %arg3: memref<2x1xf32, #tpu.memory_space<vmem>>) attributes {dimension_semantics = [], scalar_prefetch = 0 : i64, scratch_operands = 0 : i64, tpu.core_type = #tpu.core_type<tc>} {
    %c0 = arith.constant 0 : index
    %c0_0 = arith.constant 0 : index
    %0 = vector.load %arg0[%c0, %c0_0] : memref<16x1xi32, #tpu.memory_space<vmem>>, vector<16x1xi32>
    %1 = tpu.iota {dimensions = array<i32: 1>} : vector<16x64xi32>
    %2 = vector.broadcast %0 : vector<16x1xi32> to vector<16x64xi32>
    %3 = arith.cmpi eq, %2, %1 : vector<16x64xi32>
    %cst = arith.constant 1.000000e+00 : f32
    %cst_1 = arith.constant 0.000000e+00 : f32
    %4 = vector.broadcast %cst : f32 to vector<16x64xf32>
    %5 = vector.broadcast %cst_1 : f32 to vector<16x64xf32>
    %6 = arith.select %3, %4, %5 : vector<16x64xi1>, vector<16x64xf32>
    %c0_2 = arith.constant 0 : index
    %c0_3 = arith.constant 0 : index
    %7 = vector.load %arg2[%c0_2, %c0_3] : memref<512x128xf32, #tpu.memory_space<vmem>>, vector<64x32xf32>
    %cst_4 = arith.constant dense<0.000000e+00> : vector<16x32xf32>
    %8 = tpu.matmul %6, %7, %cst_4 {dimension_numbers = #tpu.dot_dimension_numbers<[1], [0], [0], [1], [0, 0, 1, 1], [], []>} : vector<16x64xf32>, vector<64x32xf32>, vector<16x32xf32> -> vector<16x32xf32>
    %c64 = arith.constant 64 : index
    %c0_5 = arith.constant 0 : index
    %9 = vector.load %arg2[%c64, %c0_5] : memref<512x128xf32, #tpu.memory_space<vmem>>, vector<16x32xf32>
    %10 = arith.addf %8, %9 : vector<16x32xf32>
    %c416 = arith.constant 416 : index
    %c0_6 = arith.constant 0 : index
    %11 = vector.load %arg2[%c416, %c0_6] : memref<512x128xf32, #tpu.memory_space<vmem>>, vector<1x32xf32>
    %c417 = arith.constant 417 : index
    %c0_7 = arith.constant 0 : index
    %12 = vector.load %arg2[%c417, %c0_7] : memref<512x128xf32, #tpu.memory_space<vmem>>, vector<1x32xf32>
    %cst_8 = arith.constant dense<0.000000e+00> : vector<16xf32>
    %13 = vector.multi_reduction <add>, %10, %cst_8 [1] : vector<16x32xf32> to vector<16xf32>
    %14 = vector.shape_cast %13 : vector<16xf32> to vector<16x1xf32>
    %cst_9 = arith.constant 3.200000e+01 : f32
    %15 = vector.broadcast %cst_9 : f32 to vector<16x1xf32>
    %16 = arith.divf %14, %15 : vector<16x1xf32>
    %17 = vector.broadcast %16 : vector<16x1xf32> to vector<16x32xf32>
    %18 = arith.subf %10, %17 : vector<16x32xf32>
    %19 = arith.mulf %18, %18 : vector<16x32xf32>
    %cst_10 = arith.constant dense<0.000000e+00> : vector<16xf32>
    %20 = vector.multi_reduction <add>, %19, %cst_10 [1] : vector<16x32xf32> to vector<16xf32>
    %21 = vector.shape_cast %20 : vector<16xf32> to vector<16x1xf32>
    %cst_11 = arith.constant 3.200000e+01 : f32
    %22 = vector.broadcast %cst_11 : f32 to vector<16x1xf32>
    %23 = arith.divf %21, %22 : vector<16x1xf32>
    %cst_12 = arith.constant 9.99999996E-13 : f32
    %24 = vector.broadcast %cst_12 : f32 to vector<16x1xf32>
    %25 = arith.addf %23, %24 : vector<16x1xf32>
    %26 = math.rsqrt %25 : vector<16x1xf32>
    %27 = vector.broadcast %26 : vector<16x1xf32> to vector<16x32xf32>
    %28 = arith.mulf %18, %27 : vector<16x32xf32>
    %29 = vector.broadcast %11 : vector<1x32xf32> to vector<16x32xf32>
    %30 = arith.mulf %28, %29 : vector<16x32xf32>
    %31 = vector.broadcast %12 : vector<1x32xf32> to vector<16x32xf32>
    %32 = arith.addf %30, %31 : vector<16x32xf32>
    %c0_13 = arith.constant 0 : index
    %c0_14 = arith.constant 0 : index
    %33 = vector.load %arg1[%c0_13, %c0_14] : memref<1x16xf32, #tpu.memory_space<vmem>>, vector<1x16xf32>
    %c490 = arith.constant 490 : index
    %c0_15 = arith.constant 0 : index
    %34 = vector.load %arg2[%c490, %c0_15] : memref<512x128xf32, #tpu.memory_space<vmem>>, vector<16x16xf32>
    %cst_16 = arith.constant 5.000000e-01 : f32
    %35 = vector.broadcast %cst_16 : f32 to vector<16x16xf32>
    %36 = arith.cmpf ogt, %34, %35 : vector<16x16xf32>
    %cst_17 = arith.constant 5.000000e-01 : f32
    %37 = vector.broadcast %cst_17 : f32 to vector<1x16xf32>
    %38 = arith.cmpf ogt, %33, %37 : vector<1x16xf32>
    %39 = vector.broadcast %38 : vector<1x16xi1> to vector<16x16xi1>
    %40 = arith.andi %36, %39 : vector<16x16xi1>
    %cst_18 = arith.constant 0.000000e+00 : f32
    %cst_19 = arith.constant -1.000000e+09 : f32
    %41 = vector.broadcast %cst_18 : f32 to vector<16x16xf32>
    %42 = vector.broadcast %cst_19 : f32 to vector<16x16xf32>
    %43 = arith.select %40, %41, %42 : vector<16x16xi1>, vector<16x16xf32>
    %c486 = arith.constant 486 : index
    %c0_20 = arith.constant 0 : index
    %44 = vector.load %arg2[%c486, %c0_20] : memref<512x128xf32, #tpu.memory_space<vmem>>, vector<4x32xf32>
    %c80 = arith.constant 80 : index
    %c0_21 = arith.constant 0 : index
    %45 = vector.load %arg2[%c80, %c0_21] : memref<512x128xf32, #tpu.memory_space<vmem>>, vector<32x96xf32>
    %cst_22 = arith.constant dense<0.000000e+00> : vector<16x96xf32>
    %46 = tpu.matmul %32, %45, %cst_22 {dimension_numbers = #tpu.dot_dimension_numbers<[1], [0], [0], [1], [0, 0, 1, 1], [], []>} : vector<16x32xf32>, vector<32x96xf32>, vector<16x96xf32> -> vector<16x96xf32>
    %c240 = arith.constant 240 : index
    %c0_23 = arith.constant 0 : index
    %47 = vector.load %arg2[%c240, %c0_23] : memref<512x128xf32, #tpu.memory_space<vmem>>, vector<1x96xf32>
    %48 = vector.broadcast %47 : vector<1x96xf32> to vector<16x96xf32>
    %49 = arith.addf %46, %48 : vector<16x96xf32>
    %50 = vector.extract_strided_slice %49 {offsets = [0, 0], sizes = [16, 32], strides = [1, 1]} : vector<16x96xf32> to vector<16x32xf32>
    %51 = vector.extract_strided_slice %49 {offsets = [0, 32], sizes = [16, 32], strides = [1, 1]} : vector<16x96xf32> to vector<16x32xf32>
    %52 = vector.extract_strided_slice %49 {offsets = [0, 64], sizes = [16, 32], strides = [1, 1]} : vector<16x96xf32> to vector<16x32xf32>
    %cst_24 = arith.constant 0.000000e+00 : f32
    %53 = vector.broadcast %cst_24 : f32 to vector<16x32xf32>
    %54 = vector.extract_strided_slice %44 {offsets = [0, 0], sizes = [1, 32], strides = [1, 1]} : vector<4x32xf32> to vector<1x32xf32>
    %55 = vector.broadcast %54 : vector<1x32xf32> to vector<16x32xf32>
    %56 = arith.mulf %50, %55 : vector<16x32xf32>
    %cst_25 = arith.constant dense<0.000000e+00> : vector<16x16xf32>
    %57 = tpu.matmul %56, %51, %cst_25 {dimension_numbers = #tpu.dot_dimension_numbers<[1], [1], [0], [0], [0, 0, 1, 0], [], []>} : vector<16x32xf32>, vector<16x32xf32>, vector<16x16xf32> -> vector<16x16xf32>
    %cst_26 = arith.constant 0.353553385 : f32
    %58 = vector.broadcast %cst_26 : f32 to vector<16x16xf32>
    %59 = arith.mulf %57, %58 : vector<16x16xf32>
    %60 = arith.addf %59, %43 : vector<16x16xf32>
    %61 = math.exp %60 : vector<16x16xf32>
    %cst_27 = arith.constant dense<0.000000e+00> : vector<16xf32>
    %62 = vector.multi_reduction <add>, %61, %cst_27 [1] : vector<16x16xf32> to vector<16xf32>
    %63 = vector.shape_cast %62 : vector<16xf32> to vector<16x1xf32>
    %64 = tpu.reciprocal %63 {approx = true} : vector<16x1xf32> -> vector<16x1xf32>
    %65 = vector.broadcast %64 : vector<16x1xf32> to vector<16x16xf32>
    %66 = arith.mulf %61, %65 : vector<16x16xf32>
    %67 = vector.broadcast %54 : vector<1x32xf32> to vector<16x32xf32>
    %68 = arith.mulf %52, %67 : vector<16x32xf32>
    %cst_28 = arith.constant dense<0.000000e+00> : vector<16x32xf32>
    %69 = tpu.matmul %66, %68, %cst_28 {dimension_numbers = #tpu.dot_dimension_numbers<[1], [0], [0], [1], [0, 0, 1, 1], [], []>} : vector<16x16xf32>, vector<16x32xf32>, vector<16x32xf32> -> vector<16x32xf32>
    %70 = arith.addf %53, %69 : vector<16x32xf32>
    %71 = vector.extract_strided_slice %44 {offsets = [1, 0], sizes = [1, 32], strides = [1, 1]} : vector<4x32xf32> to vector<1x32xf32>
    %72 = vector.broadcast %71 : vector<1x32xf32> to vector<16x32xf32>
    %73 = arith.mulf %50, %72 : vector<16x32xf32>
    %cst_29 = arith.constant dense<0.000000e+00> : vector<16x16xf32>
    %74 = tpu.matmul %73, %51, %cst_29 {dimension_numbers = #tpu.dot_dimension_numbers<[1], [1], [0], [0], [0, 0, 1, 0], [], []>} : vector<16x32xf32>, vector<16x32xf32>, vector<16x16xf32> -> vector<16x16xf32>
    %cst_30 = arith.constant 0.353553385 : f32
    %75 = vector.broadcast %cst_30 : f32 to vector<16x16xf32>
    %76 = arith.mulf %74, %75 : vector<16x16xf32>
    %77 = arith.addf %76, %43 : vector<16x16xf32>
    %78 = math.exp %77 : vector<16x16xf32>
    %cst_31 = arith.constant dense<0.000000e+00> : vector<16xf32>
    %79 = vector.multi_reduction <add>, %78, %cst_31 [1] : vector<16x16xf32> to vector<16xf32>
    %80 = vector.shape_cast %79 : vector<16xf32> to vector<16x1xf32>
    %81 = tpu.reciprocal %80 {approx = true} : vector<16x1xf32> -> vector<16x1xf32>
    %82 = vector.broadcast %81 : vector<16x1xf32> to vector<16x16xf32>
    %83 = arith.mulf %78, %82 : vector<16x16xf32>
    %84 = vector.broadcast %71 : vector<1x32xf32> to vector<16x32xf32>
    %85 = arith.mulf %52, %84 : vector<16x32xf32>
    %cst_32 = arith.constant dense<0.000000e+00> : vector<16x32xf32>
    %86 = tpu.matmul %83, %85, %cst_32 {dimension_numbers = #tpu.dot_dimension_numbers<[1], [0], [0], [1], [0, 0, 1, 1], [], []>} : vector<16x16xf32>, vector<16x32xf32>, vector<16x32xf32> -> vector<16x32xf32>
    %87 = arith.addf %70, %86 : vector<16x32xf32>
    %88 = vector.extract_strided_slice %44 {offsets = [2, 0], sizes = [1, 32], strides = [1, 1]} : vector<4x32xf32> to vector<1x32xf32>
    %89 = vector.broadcast %88 : vector<1x32xf32> to vector<16x32xf32>
    %90 = arith.mulf %50, %89 : vector<16x32xf32>
    %cst_33 = arith.constant dense<0.000000e+00> : vector<16x16xf32>
    %91 = tpu.matmul %90, %51, %cst_33 {dimension_numbers = #tpu.dot_dimension_numbers<[1], [1], [0], [0], [0, 0, 1, 0], [], []>} : vector<16x32xf32>, vector<16x32xf32>, vector<16x16xf32> -> vector<16x16xf32>
    %cst_34 = arith.constant 0.353553385 : f32
    %92 = vector.broadcast %cst_34 : f32 to vector<16x16xf32>
    %93 = arith.mulf %91, %92 : vector<16x16xf32>
    %94 = arith.addf %93, %43 : vector<16x16xf32>
    %95 = math.exp %94 : vector<16x16xf32>
    %cst_35 = arith.constant dense<0.000000e+00> : vector<16xf32>
    %96 = vector.multi_reduction <add>, %95, %cst_35 [1] : vector<16x16xf32> to vector<16xf32>
    %97 = vector.shape_cast %96 : vector<16xf32> to vector<16x1xf32>
    %98 = tpu.reciprocal %97 {approx = true} : vector<16x1xf32> -> vector<16x1xf32>
    %99 = vector.broadcast %98 : vector<16x1xf32> to vector<16x16xf32>
    %100 = arith.mulf %95, %99 : vector<16x16xf32>
    %101 = vector.broadcast %88 : vector<1x32xf32> to vector<16x32xf32>
    %102 = arith.mulf %52, %101 : vector<16x32xf32>
    %cst_36 = arith.constant dense<0.000000e+00> : vector<16x32xf32>
    %103 = tpu.matmul %100, %102, %cst_36 {dimension_numbers = #tpu.dot_dimension_numbers<[1], [0], [0], [1], [0, 0, 1, 1], [], []>} : vector<16x16xf32>, vector<16x32xf32>, vector<16x32xf32> -> vector<16x32xf32>
    %104 = arith.addf %87, %103 : vector<16x32xf32>
    %105 = vector.extract_strided_slice %44 {offsets = [3, 0], sizes = [1, 32], strides = [1, 1]} : vector<4x32xf32> to vector<1x32xf32>
    %106 = vector.broadcast %105 : vector<1x32xf32> to vector<16x32xf32>
    %107 = arith.mulf %50, %106 : vector<16x32xf32>
    %cst_37 = arith.constant dense<0.000000e+00> : vector<16x16xf32>
    %108 = tpu.matmul %107, %51, %cst_37 {dimension_numbers = #tpu.dot_dimension_numbers<[1], [1], [0], [0], [0, 0, 1, 0], [], []>} : vector<16x32xf32>, vector<16x32xf32>, vector<16x16xf32> -> vector<16x16xf32>
    %cst_38 = arith.constant 0.353553385 : f32
    %109 = vector.broadcast %cst_38 : f32 to vector<16x16xf32>
    %110 = arith.mulf %108, %109 : vector<16x16xf32>
    %111 = arith.addf %110, %43 : vector<16x16xf32>
    %112 = math.exp %111 : vector<16x16xf32>
    %cst_39 = arith.constant dense<0.000000e+00> : vector<16xf32>
    %113 = vector.multi_reduction <add>, %112, %cst_39 [1] : vector<16x16xf32> to vector<16xf32>
    %114 = vector.shape_cast %113 : vector<16xf32> to vector<16x1xf32>
    %115 = tpu.reciprocal %114 {approx = true} : vector<16x1xf32> -> vector<16x1xf32>
    %116 = vector.broadcast %115 : vector<16x1xf32> to vector<16x16xf32>
    %117 = arith.mulf %112, %116 : vector<16x16xf32>
    %118 = vector.broadcast %105 : vector<1x32xf32> to vector<16x32xf32>
    %119 = arith.mulf %52, %118 : vector<16x32xf32>
    %cst_40 = arith.constant dense<0.000000e+00> : vector<16x32xf32>
    %120 = tpu.matmul %117, %119, %cst_40 {dimension_numbers = #tpu.dot_dimension_numbers<[1], [0], [0], [1], [0, 0, 1, 1], [], []>} : vector<16x16xf32>, vector<16x32xf32>, vector<16x32xf32> -> vector<16x32xf32>
    %121 = arith.addf %104, %120 : vector<16x32xf32>
    %c112 = arith.constant 112 : index
    %c0_41 = arith.constant 0 : index
    %122 = vector.load %arg2[%c112, %c0_41] : memref<512x128xf32, #tpu.memory_space<vmem>>, vector<32x32xf32>
    %cst_42 = arith.constant dense<0.000000e+00> : vector<16x32xf32>
    %123 = tpu.matmul %121, %122, %cst_42 {dimension_numbers = #tpu.dot_dimension_numbers<[1], [0], [0], [1], [0, 0, 1, 1], [], []>} : vector<16x32xf32>, vector<32x32xf32>, vector<16x32xf32> -> vector<16x32xf32>
    %c241 = arith.constant 241 : index
    %c0_43 = arith.constant 0 : index
    %124 = vector.load %arg2[%c241, %c0_43] : memref<512x128xf32, #tpu.memory_space<vmem>>, vector<1x32xf32>
    %125 = vector.broadcast %124 : vector<1x32xf32> to vector<16x32xf32>
    %126 = arith.addf %123, %125 : vector<16x32xf32>
    %127 = arith.addf %126, %32 : vector<16x32xf32>
    %c242 = arith.constant 242 : index
    %c0_44 = arith.constant 0 : index
    %128 = vector.load %arg2[%c242, %c0_44] : memref<512x128xf32, #tpu.memory_space<vmem>>, vector<1x32xf32>
    %c243 = arith.constant 243 : index
    %c0_45 = arith.constant 0 : index
    %129 = vector.load %arg2[%c243, %c0_45] : memref<512x128xf32, #tpu.memory_space<vmem>>, vector<1x32xf32>
    %cst_46 = arith.constant dense<0.000000e+00> : vector<16xf32>
    %130 = vector.multi_reduction <add>, %127, %cst_46 [1] : vector<16x32xf32> to vector<16xf32>
    %131 = vector.shape_cast %130 : vector<16xf32> to vector<16x1xf32>
    %cst_47 = arith.constant 3.200000e+01 : f32
    %132 = vector.broadcast %cst_47 : f32 to vector<16x1xf32>
    %133 = arith.divf %131, %132 : vector<16x1xf32>
    %134 = vector.broadcast %133 : vector<16x1xf32> to vector<16x32xf32>
    %135 = arith.subf %127, %134 : vector<16x32xf32>
    %136 = arith.mulf %135, %135 : vector<16x32xf32>
    %cst_48 = arith.constant dense<0.000000e+00> : vector<16xf32>
    %137 = vector.multi_reduction <add>, %136, %cst_48 [1] : vector<16x32xf32> to vector<16xf32>
    %138 = vector.shape_cast %137 : vector<16xf32> to vector<16x1xf32>
    %cst_49 = arith.constant 3.200000e+01 : f32
    %139 = vector.broadcast %cst_49 : f32 to vector<16x1xf32>
    %140 = arith.divf %138, %139 : vector<16x1xf32>
    %cst_50 = arith.constant 9.99999996E-13 : f32
    %141 = vector.broadcast %cst_50 : f32 to vector<16x1xf32>
    %142 = arith.addf %140, %141 : vector<16x1xf32>
    %143 = math.rsqrt %142 : vector<16x1xf32>
    %144 = vector.broadcast %143 : vector<16x1xf32> to vector<16x32xf32>
    %145 = arith.mulf %135, %144 : vector<16x32xf32>
    %146 = vector.broadcast %128 : vector<1x32xf32> to vector<16x32xf32>
    %147 = arith.mulf %145, %146 : vector<16x32xf32>
    %148 = vector.broadcast %129 : vector<1x32xf32> to vector<16x32xf32>
    %149 = arith.addf %147, %148 : vector<16x32xf32>
    %c144 = arith.constant 144 : index
    %c0_51 = arith.constant 0 : index
    %150 = vector.load %arg2[%c144, %c0_51] : memref<512x128xf32, #tpu.memory_space<vmem>>, vector<32x64xf32>
    %cst_52 = arith.constant dense<0.000000e+00> : vector<16x64xf32>
    %151 = tpu.matmul %149, %150, %cst_52 {dimension_numbers = #tpu.dot_dimension_numbers<[1], [0], [0], [1], [0, 0, 1, 1], [], []>} : vector<16x32xf32>, vector<32x64xf32>, vector<16x64xf32> -> vector<16x64xf32>
    %c244 = arith.constant 244 : index
    %c0_53 = arith.constant 0 : index
    %152 = vector.load %arg2[%c244, %c0_53] : memref<512x128xf32, #tpu.memory_space<vmem>>, vector<1x64xf32>
    %153 = vector.broadcast %152 : vector<1x64xf32> to vector<16x64xf32>
    %154 = arith.addf %151, %153 : vector<16x64xf32>
    %155 = arith.mulf %154, %154 : vector<16x64xf32>
    %156 = arith.mulf %154, %155 : vector<16x64xf32>
    %cst_54 = arith.constant 4.471500e-02 : f32
    %157 = vector.broadcast %cst_54 : f32 to vector<16x64xf32>
    %158 = arith.mulf %157, %156 : vector<16x64xf32>
    %159 = arith.addf %154, %158 : vector<16x64xf32>
    %cst_55 = arith.constant 0.797884583 : f32
    %160 = vector.broadcast %cst_55 : f32 to vector<16x64xf32>
    %161 = arith.mulf %160, %159 : vector<16x64xf32>
    %162 = math.tanh %161 : vector<16x64xf32>
    %cst_56 = arith.constant 1.000000e+00 : f32
    %163 = vector.broadcast %cst_56 : f32 to vector<16x64xf32>
    %164 = arith.addf %163, %162 : vector<16x64xf32>
    %cst_57 = arith.constant 5.000000e-01 : f32
    %165 = vector.broadcast %cst_57 : f32 to vector<16x64xf32>
    %166 = arith.mulf %165, %164 : vector<16x64xf32>
    %167 = arith.mulf %154, %166 : vector<16x64xf32>
    %c176 = arith.constant 176 : index
    %c0_58 = arith.constant 0 : index
    %168 = vector.load %arg2[%c176, %c0_58] : memref<512x128xf32, #tpu.memory_space<vmem>>, vector<64x32xf32>
    %cst_59 = arith.constant dense<0.000000e+00> : vector<16x32xf32>
    %169 = tpu.matmul %167, %168, %cst_59 {dimension_numbers = #tpu.dot_dimension_numbers<[1], [0], [0], [1], [0, 0, 1, 1], [], []>} : vector<16x64xf32>, vector<64x32xf32>, vector<16x32xf32> -> vector<16x32xf32>
    %c245 = arith.constant 245 : index
    %c0_60 = arith.constant 0 : index
    %170 = vector.load %arg2[%c245, %c0_60] : memref<512x128xf32, #tpu.memory_space<vmem>>, vector<1x32xf32>
    %171 = vector.broadcast %170 : vector<1x32xf32> to vector<16x32xf32>
    %172 = arith.addf %169, %171 : vector<16x32xf32>
    %173 = arith.addf %172, %149 : vector<16x32xf32>
    %c246 = arith.constant 246 : index
    %c0_61 = arith.constant 0 : index
    %174 = vector.load %arg2[%c246, %c0_61] : memref<512x128xf32, #tpu.memory_space<vmem>>, vector<1x32xf32>
    %c247 = arith.constant 247 : index
    %c0_62 = arith.constant 0 : index
    %175 = vector.load %arg2[%c247, %c0_62] : memref<512x128xf32, #tpu.memory_space<vmem>>, vector<1x32xf32>
    %cst_63 = arith.constant dense<0.000000e+00> : vector<16xf32>
    %176 = vector.multi_reduction <add>, %173, %cst_63 [1] : vector<16x32xf32> to vector<16xf32>
    %177 = vector.shape_cast %176 : vector<16xf32> to vector<16x1xf32>
    %cst_64 = arith.constant 3.200000e+01 : f32
    %178 = vector.broadcast %cst_64 : f32 to vector<16x1xf32>
    %179 = arith.divf %177, %178 : vector<16x1xf32>
    %180 = vector.broadcast %179 : vector<16x1xf32> to vector<16x32xf32>
    %181 = arith.subf %173, %180 : vector<16x32xf32>
    %182 = arith.mulf %181, %181 : vector<16x32xf32>
    %cst_65 = arith.constant dense<0.000000e+00> : vector<16xf32>
    %183 = vector.multi_reduction <add>, %182, %cst_65 [1] : vector<16x32xf32> to vector<16xf32>
    %184 = vector.shape_cast %183 : vector<16xf32> to vector<16x1xf32>
    %cst_66 = arith.constant 3.200000e+01 : f32
    %185 = vector.broadcast %cst_66 : f32 to vector<16x1xf32>
    %186 = arith.divf %184, %185 : vector<16x1xf32>
    %cst_67 = arith.constant 9.99999996E-13 : f32
    %187 = vector.broadcast %cst_67 : f32 to vector<16x1xf32>
    %188 = arith.addf %186, %187 : vector<16x1xf32>
    %189 = math.rsqrt %188 : vector<16x1xf32>
    %190 = vector.broadcast %189 : vector<16x1xf32> to vector<16x32xf32>
    %191 = arith.mulf %181, %190 : vector<16x32xf32>
    %192 = vector.broadcast %174 : vector<1x32xf32> to vector<16x32xf32>
    %193 = arith.mulf %191, %192 : vector<16x32xf32>
    %194 = vector.broadcast %175 : vector<1x32xf32> to vector<16x32xf32>
    %195 = arith.addf %193, %194 : vector<16x32xf32>
    %c248 = arith.constant 248 : index
    %c0_68 = arith.constant 0 : index
    %196 = vector.load %arg2[%c248, %c0_68] : memref<512x128xf32, #tpu.memory_space<vmem>>, vector<32x96xf32>
    %cst_69 = arith.constant dense<0.000000e+00> : vector<16x96xf32>
    %197 = tpu.matmul %195, %196, %cst_69 {dimension_numbers = #tpu.dot_dimension_numbers<[1], [0], [0], [1], [0, 0, 1, 1], [], []>} : vector<16x32xf32>, vector<32x96xf32>, vector<16x96xf32> -> vector<16x96xf32>
    %c408 = arith.constant 408 : index
    %c0_70 = arith.constant 0 : index
    %198 = vector.load %arg2[%c408, %c0_70] : memref<512x128xf32, #tpu.memory_space<vmem>>, vector<1x96xf32>
    %199 = vector.broadcast %198 : vector<1x96xf32> to vector<16x96xf32>
    %200 = arith.addf %197, %199 : vector<16x96xf32>
    %201 = vector.extract_strided_slice %200 {offsets = [0, 0], sizes = [16, 32], strides = [1, 1]} : vector<16x96xf32> to vector<16x32xf32>
    %202 = vector.extract_strided_slice %200 {offsets = [0, 32], sizes = [16, 32], strides = [1, 1]} : vector<16x96xf32> to vector<16x32xf32>
    %203 = vector.extract_strided_slice %200 {offsets = [0, 64], sizes = [16, 32], strides = [1, 1]} : vector<16x96xf32> to vector<16x32xf32>
    %cst_71 = arith.constant 0.000000e+00 : f32
    %204 = vector.broadcast %cst_71 : f32 to vector<16x32xf32>
    %205 = vector.extract_strided_slice %44 {offsets = [0, 0], sizes = [1, 32], strides = [1, 1]} : vector<4x32xf32> to vector<1x32xf32>
    %206 = vector.broadcast %205 : vector<1x32xf32> to vector<16x32xf32>
    %207 = arith.mulf %201, %206 : vector<16x32xf32>
    %cst_72 = arith.constant dense<0.000000e+00> : vector<16x16xf32>
    %208 = tpu.matmul %207, %202, %cst_72 {dimension_numbers = #tpu.dot_dimension_numbers<[1], [1], [0], [0], [0, 0, 1, 0], [], []>} : vector<16x32xf32>, vector<16x32xf32>, vector<16x16xf32> -> vector<16x16xf32>
    %cst_73 = arith.constant 0.353553385 : f32
    %209 = vector.broadcast %cst_73 : f32 to vector<16x16xf32>
    %210 = arith.mulf %208, %209 : vector<16x16xf32>
    %211 = arith.addf %210, %43 : vector<16x16xf32>
    %212 = math.exp %211 : vector<16x16xf32>
    %cst_74 = arith.constant dense<0.000000e+00> : vector<16xf32>
    %213 = vector.multi_reduction <add>, %212, %cst_74 [1] : vector<16x16xf32> to vector<16xf32>
    %214 = vector.shape_cast %213 : vector<16xf32> to vector<16x1xf32>
    %215 = tpu.reciprocal %214 {approx = true} : vector<16x1xf32> -> vector<16x1xf32>
    %216 = vector.broadcast %215 : vector<16x1xf32> to vector<16x16xf32>
    %217 = arith.mulf %212, %216 : vector<16x16xf32>
    %218 = vector.broadcast %205 : vector<1x32xf32> to vector<16x32xf32>
    %219 = arith.mulf %203, %218 : vector<16x32xf32>
    %cst_75 = arith.constant dense<0.000000e+00> : vector<16x32xf32>
    %220 = tpu.matmul %217, %219, %cst_75 {dimension_numbers = #tpu.dot_dimension_numbers<[1], [0], [0], [1], [0, 0, 1, 1], [], []>} : vector<16x16xf32>, vector<16x32xf32>, vector<16x32xf32> -> vector<16x32xf32>
    %221 = arith.addf %204, %220 : vector<16x32xf32>
    %222 = vector.extract_strided_slice %44 {offsets = [1, 0], sizes = [1, 32], strides = [1, 1]} : vector<4x32xf32> to vector<1x32xf32>
    %223 = vector.broadcast %222 : vector<1x32xf32> to vector<16x32xf32>
    %224 = arith.mulf %201, %223 : vector<16x32xf32>
    %cst_76 = arith.constant dense<0.000000e+00> : vector<16x16xf32>
    %225 = tpu.matmul %224, %202, %cst_76 {dimension_numbers = #tpu.dot_dimension_numbers<[1], [1], [0], [0], [0, 0, 1, 0], [], []>} : vector<16x32xf32>, vector<16x32xf32>, vector<16x16xf32> -> vector<16x16xf32>
    %cst_77 = arith.constant 0.353553385 : f32
    %226 = vector.broadcast %cst_77 : f32 to vector<16x16xf32>
    %227 = arith.mulf %225, %226 : vector<16x16xf32>
    %228 = arith.addf %227, %43 : vector<16x16xf32>
    %229 = math.exp %228 : vector<16x16xf32>
    %cst_78 = arith.constant dense<0.000000e+00> : vector<16xf32>
    %230 = vector.multi_reduction <add>, %229, %cst_78 [1] : vector<16x16xf32> to vector<16xf32>
    %231 = vector.shape_cast %230 : vector<16xf32> to vector<16x1xf32>
    %232 = tpu.reciprocal %231 {approx = true} : vector<16x1xf32> -> vector<16x1xf32>
    %233 = vector.broadcast %232 : vector<16x1xf32> to vector<16x16xf32>
    %234 = arith.mulf %229, %233 : vector<16x16xf32>
    %235 = vector.broadcast %222 : vector<1x32xf32> to vector<16x32xf32>
    %236 = arith.mulf %203, %235 : vector<16x32xf32>
    %cst_79 = arith.constant dense<0.000000e+00> : vector<16x32xf32>
    %237 = tpu.matmul %234, %236, %cst_79 {dimension_numbers = #tpu.dot_dimension_numbers<[1], [0], [0], [1], [0, 0, 1, 1], [], []>} : vector<16x16xf32>, vector<16x32xf32>, vector<16x32xf32> -> vector<16x32xf32>
    %238 = arith.addf %221, %237 : vector<16x32xf32>
    %239 = vector.extract_strided_slice %44 {offsets = [2, 0], sizes = [1, 32], strides = [1, 1]} : vector<4x32xf32> to vector<1x32xf32>
    %240 = vector.broadcast %239 : vector<1x32xf32> to vector<16x32xf32>
    %241 = arith.mulf %201, %240 : vector<16x32xf32>
    %cst_80 = arith.constant dense<0.000000e+00> : vector<16x16xf32>
    %242 = tpu.matmul %241, %202, %cst_80 {dimension_numbers = #tpu.dot_dimension_numbers<[1], [1], [0], [0], [0, 0, 1, 0], [], []>} : vector<16x32xf32>, vector<16x32xf32>, vector<16x16xf32> -> vector<16x16xf32>
    %cst_81 = arith.constant 0.353553385 : f32
    %243 = vector.broadcast %cst_81 : f32 to vector<16x16xf32>
    %244 = arith.mulf %242, %243 : vector<16x16xf32>
    %245 = arith.addf %244, %43 : vector<16x16xf32>
    %246 = math.exp %245 : vector<16x16xf32>
    %cst_82 = arith.constant dense<0.000000e+00> : vector<16xf32>
    %247 = vector.multi_reduction <add>, %246, %cst_82 [1] : vector<16x16xf32> to vector<16xf32>
    %248 = vector.shape_cast %247 : vector<16xf32> to vector<16x1xf32>
    %249 = tpu.reciprocal %248 {approx = true} : vector<16x1xf32> -> vector<16x1xf32>
    %250 = vector.broadcast %249 : vector<16x1xf32> to vector<16x16xf32>
    %251 = arith.mulf %246, %250 : vector<16x16xf32>
    %252 = vector.broadcast %239 : vector<1x32xf32> to vector<16x32xf32>
    %253 = arith.mulf %203, %252 : vector<16x32xf32>
    %cst_83 = arith.constant dense<0.000000e+00> : vector<16x32xf32>
    %254 = tpu.matmul %251, %253, %cst_83 {dimension_numbers = #tpu.dot_dimension_numbers<[1], [0], [0], [1], [0, 0, 1, 1], [], []>} : vector<16x16xf32>, vector<16x32xf32>, vector<16x32xf32> -> vector<16x32xf32>
    %255 = arith.addf %238, %254 : vector<16x32xf32>
    %256 = vector.extract_strided_slice %44 {offsets = [3, 0], sizes = [1, 32], strides = [1, 1]} : vector<4x32xf32> to vector<1x32xf32>
    %257 = vector.broadcast %256 : vector<1x32xf32> to vector<16x32xf32>
    %258 = arith.mulf %201, %257 : vector<16x32xf32>
    %cst_84 = arith.constant dense<0.000000e+00> : vector<16x16xf32>
    %259 = tpu.matmul %258, %202, %cst_84 {dimension_numbers = #tpu.dot_dimension_numbers<[1], [1], [0], [0], [0, 0, 1, 0], [], []>} : vector<16x32xf32>, vector<16x32xf32>, vector<16x16xf32> -> vector<16x16xf32>
    %cst_85 = arith.constant 0.353553385 : f32
    %260 = vector.broadcast %cst_85 : f32 to vector<16x16xf32>
    %261 = arith.mulf %259, %260 : vector<16x16xf32>
    %262 = arith.addf %261, %43 : vector<16x16xf32>
    %263 = math.exp %262 : vector<16x16xf32>
    %cst_86 = arith.constant dense<0.000000e+00> : vector<16xf32>
    %264 = vector.multi_reduction <add>, %263, %cst_86 [1] : vector<16x16xf32> to vector<16xf32>
    %265 = vector.shape_cast %264 : vector<16xf32> to vector<16x1xf32>
    %266 = tpu.reciprocal %265 {approx = true} : vector<16x1xf32> -> vector<16x1xf32>
    %267 = vector.broadcast %266 : vector<16x1xf32> to vector<16x16xf32>
    %268 = arith.mulf %263, %267 : vector<16x16xf32>
    %269 = vector.broadcast %256 : vector<1x32xf32> to vector<16x32xf32>
    %270 = arith.mulf %203, %269 : vector<16x32xf32>
    %cst_87 = arith.constant dense<0.000000e+00> : vector<16x32xf32>
    %271 = tpu.matmul %268, %270, %cst_87 {dimension_numbers = #tpu.dot_dimension_numbers<[1], [0], [0], [1], [0, 0, 1, 1], [], []>} : vector<16x16xf32>, vector<16x32xf32>, vector<16x32xf32> -> vector<16x32xf32>
    %272 = arith.addf %255, %271 : vector<16x32xf32>
    %c280 = arith.constant 280 : index
    %c0_88 = arith.constant 0 : index
    %273 = vector.load %arg2[%c280, %c0_88] : memref<512x128xf32, #tpu.memory_space<vmem>>, vector<32x32xf32>
    %cst_89 = arith.constant dense<0.000000e+00> : vector<16x32xf32>
    %274 = tpu.matmul %272, %273, %cst_89 {dimension_numbers = #tpu.dot_dimension_numbers<[1], [0], [0], [1], [0, 0, 1, 1], [], []>} : vector<16x32xf32>, vector<32x32xf32>, vector<16x32xf32> -> vector<16x32xf32>
    %c409 = arith.constant 409 : index
    %c0_90 = arith.constant 0 : index
    %275 = vector.load %arg2[%c409, %c0_90] : memref<512x128xf32, #tpu.memory_space<vmem>>, vector<1x32xf32>
    %276 = vector.broadcast %275 : vector<1x32xf32> to vector<16x32xf32>
    %277 = arith.addf %274, %276 : vector<16x32xf32>
    %278 = arith.addf %277, %195 : vector<16x32xf32>
    %c410 = arith.constant 410 : index
    %c0_91 = arith.constant 0 : index
    %279 = vector.load %arg2[%c410, %c0_91] : memref<512x128xf32, #tpu.memory_space<vmem>>, vector<1x32xf32>
    %c411 = arith.constant 411 : index
    %c0_92 = arith.constant 0 : index
    %280 = vector.load %arg2[%c411, %c0_92] : memref<512x128xf32, #tpu.memory_space<vmem>>, vector<1x32xf32>
    %cst_93 = arith.constant dense<0.000000e+00> : vector<16xf32>
    %281 = vector.multi_reduction <add>, %278, %cst_93 [1] : vector<16x32xf32> to vector<16xf32>
    %282 = vector.shape_cast %281 : vector<16xf32> to vector<16x1xf32>
    %cst_94 = arith.constant 3.200000e+01 : f32
    %283 = vector.broadcast %cst_94 : f32 to vector<16x1xf32>
    %284 = arith.divf %282, %283 : vector<16x1xf32>
    %285 = vector.broadcast %284 : vector<16x1xf32> to vector<16x32xf32>
    %286 = arith.subf %278, %285 : vector<16x32xf32>
    %287 = arith.mulf %286, %286 : vector<16x32xf32>
    %cst_95 = arith.constant dense<0.000000e+00> : vector<16xf32>
    %288 = vector.multi_reduction <add>, %287, %cst_95 [1] : vector<16x32xf32> to vector<16xf32>
    %289 = vector.shape_cast %288 : vector<16xf32> to vector<16x1xf32>
    %cst_96 = arith.constant 3.200000e+01 : f32
    %290 = vector.broadcast %cst_96 : f32 to vector<16x1xf32>
    %291 = arith.divf %289, %290 : vector<16x1xf32>
    %cst_97 = arith.constant 9.99999996E-13 : f32
    %292 = vector.broadcast %cst_97 : f32 to vector<16x1xf32>
    %293 = arith.addf %291, %292 : vector<16x1xf32>
    %294 = math.rsqrt %293 : vector<16x1xf32>
    %295 = vector.broadcast %294 : vector<16x1xf32> to vector<16x32xf32>
    %296 = arith.mulf %286, %295 : vector<16x32xf32>
    %297 = vector.broadcast %279 : vector<1x32xf32> to vector<16x32xf32>
    %298 = arith.mulf %296, %297 : vector<16x32xf32>
    %299 = vector.broadcast %280 : vector<1x32xf32> to vector<16x32xf32>
    %300 = arith.addf %298, %299 : vector<16x32xf32>
    %c312 = arith.constant 312 : index
    %c0_98 = arith.constant 0 : index
    %301 = vector.load %arg2[%c312, %c0_98] : memref<512x128xf32, #tpu.memory_space<vmem>>, vector<32x64xf32>
    %cst_99 = arith.constant dense<0.000000e+00> : vector<16x64xf32>
    %302 = tpu.matmul %300, %301, %cst_99 {dimension_numbers = #tpu.dot_dimension_numbers<[1], [0], [0], [1], [0, 0, 1, 1], [], []>} : vector<16x32xf32>, vector<32x64xf32>, vector<16x64xf32> -> vector<16x64xf32>
    %c412 = arith.constant 412 : index
    %c0_100 = arith.constant 0 : index
    %303 = vector.load %arg2[%c412, %c0_100] : memref<512x128xf32, #tpu.memory_space<vmem>>, vector<1x64xf32>
    %304 = vector.broadcast %303 : vector<1x64xf32> to vector<16x64xf32>
    %305 = arith.addf %302, %304 : vector<16x64xf32>
    %306 = arith.mulf %305, %305 : vector<16x64xf32>
    %307 = arith.mulf %305, %306 : vector<16x64xf32>
    %cst_101 = arith.constant 4.471500e-02 : f32
    %308 = vector.broadcast %cst_101 : f32 to vector<16x64xf32>
    %309 = arith.mulf %308, %307 : vector<16x64xf32>
    %310 = arith.addf %305, %309 : vector<16x64xf32>
    %cst_102 = arith.constant 0.797884583 : f32
    %311 = vector.broadcast %cst_102 : f32 to vector<16x64xf32>
    %312 = arith.mulf %311, %310 : vector<16x64xf32>
    %313 = math.tanh %312 : vector<16x64xf32>
    %cst_103 = arith.constant 1.000000e+00 : f32
    %314 = vector.broadcast %cst_103 : f32 to vector<16x64xf32>
    %315 = arith.addf %314, %313 : vector<16x64xf32>
    %cst_104 = arith.constant 5.000000e-01 : f32
    %316 = vector.broadcast %cst_104 : f32 to vector<16x64xf32>
    %317 = arith.mulf %316, %315 : vector<16x64xf32>
    %318 = arith.mulf %305, %317 : vector<16x64xf32>
    %c344 = arith.constant 344 : index
    %c0_105 = arith.constant 0 : index
    %319 = vector.load %arg2[%c344, %c0_105] : memref<512x128xf32, #tpu.memory_space<vmem>>, vector<64x32xf32>
    %cst_106 = arith.constant dense<0.000000e+00> : vector<16x32xf32>
    %320 = tpu.matmul %318, %319, %cst_106 {dimension_numbers = #tpu.dot_dimension_numbers<[1], [0], [0], [1], [0, 0, 1, 1], [], []>} : vector<16x64xf32>, vector<64x32xf32>, vector<16x32xf32> -> vector<16x32xf32>
    %c413 = arith.constant 413 : index
    %c0_107 = arith.constant 0 : index
    %321 = vector.load %arg2[%c413, %c0_107] : memref<512x128xf32, #tpu.memory_space<vmem>>, vector<1x32xf32>
    %322 = vector.broadcast %321 : vector<1x32xf32> to vector<16x32xf32>
    %323 = arith.addf %320, %322 : vector<16x32xf32>
    %324 = arith.addf %323, %300 : vector<16x32xf32>
    %c414 = arith.constant 414 : index
    %c0_108 = arith.constant 0 : index
    %325 = vector.load %arg2[%c414, %c0_108] : memref<512x128xf32, #tpu.memory_space<vmem>>, vector<1x32xf32>
    %c415 = arith.constant 415 : index
    %c0_109 = arith.constant 0 : index
    %326 = vector.load %arg2[%c415, %c0_109] : memref<512x128xf32, #tpu.memory_space<vmem>>, vector<1x32xf32>
    %cst_110 = arith.constant dense<0.000000e+00> : vector<16xf32>
    %327 = vector.multi_reduction <add>, %324, %cst_110 [1] : vector<16x32xf32> to vector<16xf32>
    %328 = vector.shape_cast %327 : vector<16xf32> to vector<16x1xf32>
    %cst_111 = arith.constant 3.200000e+01 : f32
    %329 = vector.broadcast %cst_111 : f32 to vector<16x1xf32>
    %330 = arith.divf %328, %329 : vector<16x1xf32>
    %331 = vector.broadcast %330 : vector<16x1xf32> to vector<16x32xf32>
    %332 = arith.subf %324, %331 : vector<16x32xf32>
    %333 = arith.mulf %332, %332 : vector<16x32xf32>
    %cst_112 = arith.constant dense<0.000000e+00> : vector<16xf32>
    %334 = vector.multi_reduction <add>, %333, %cst_112 [1] : vector<16x32xf32> to vector<16xf32>
    %335 = vector.shape_cast %334 : vector<16xf32> to vector<16x1xf32>
    %cst_113 = arith.constant 3.200000e+01 : f32
    %336 = vector.broadcast %cst_113 : f32 to vector<16x1xf32>
    %337 = arith.divf %335, %336 : vector<16x1xf32>
    %cst_114 = arith.constant 9.99999996E-13 : f32
    %338 = vector.broadcast %cst_114 : f32 to vector<16x1xf32>
    %339 = arith.addf %337, %338 : vector<16x1xf32>
    %340 = math.rsqrt %339 : vector<16x1xf32>
    %341 = vector.broadcast %340 : vector<16x1xf32> to vector<16x32xf32>
    %342 = arith.mulf %332, %341 : vector<16x32xf32>
    %343 = vector.broadcast %325 : vector<1x32xf32> to vector<16x32xf32>
    %344 = arith.mulf %342, %343 : vector<16x32xf32>
    %345 = vector.broadcast %326 : vector<1x32xf32> to vector<16x32xf32>
    %346 = arith.addf %344, %345 : vector<16x32xf32>
    %c484 = arith.constant 484 : index
    %c0_115 = arith.constant 0 : index
    %347 = vector.load %arg2[%c484, %c0_115] : memref<512x128xf32, #tpu.memory_space<vmem>>, vector<2x16xf32>
    %cst_116 = arith.constant dense<0.000000e+00> : vector<2x32xf32>
    %348 = tpu.matmul %347, %346, %cst_116 {dimension_numbers = #tpu.dot_dimension_numbers<[1], [0], [0], [1], [0, 0, 1, 1], [], []>} : vector<2x16xf32>, vector<16x32xf32>, vector<2x32xf32> -> vector<2x32xf32>
    %c418 = arith.constant 418 : index
    %c0_117 = arith.constant 0 : index
    %349 = vector.load %arg2[%c418, %c0_117] : memref<512x128xf32, #tpu.memory_space<vmem>>, vector<32x32xf32>
    %cst_118 = arith.constant dense<0.000000e+00> : vector<2x32xf32>
    %350 = tpu.matmul %348, %349, %cst_118 {dimension_numbers = #tpu.dot_dimension_numbers<[1], [0], [0], [1], [0, 0, 1, 1], [], []>} : vector<2x32xf32>, vector<32x32xf32>, vector<2x32xf32> -> vector<2x32xf32>
    %c450 = arith.constant 450 : index
    %c0_119 = arith.constant 0 : index
    %351 = vector.load %arg2[%c450, %c0_119] : memref<512x128xf32, #tpu.memory_space<vmem>>, vector<1x32xf32>
    %352 = vector.broadcast %351 : vector<1x32xf32> to vector<2x32xf32>
    %353 = arith.addf %350, %352 : vector<2x32xf32>
    %354 = math.tanh %353 : vector<2x32xf32>
    %c451 = arith.constant 451 : index
    %c0_120 = arith.constant 0 : index
    %355 = vector.load %arg2[%c451, %c0_120] : memref<512x128xf32, #tpu.memory_space<vmem>>, vector<32x1xf32>
    %cst_121 = arith.constant dense<0.000000e+00> : vector<2x1xf32>
    %356 = tpu.matmul %354, %355, %cst_121 {dimension_numbers = #tpu.dot_dimension_numbers<[1], [0], [0], [1], [0, 0, 1, 1], [], []>} : vector<2x32xf32>, vector<32x1xf32>, vector<2x1xf32> -> vector<2x1xf32>
    %c483 = arith.constant 483 : index
    %c0_122 = arith.constant 0 : index
    %357 = vector.load %arg2[%c483, %c0_122] : memref<512x128xf32, #tpu.memory_space<vmem>>, vector<1x1xf32>
    %358 = vector.broadcast %357 : vector<1x1xf32> to vector<2x1xf32>
    %359 = arith.addf %356, %358 : vector<2x1xf32>
    %360 = arith.negf %359 : vector<2x1xf32>
    %361 = math.exp %360 : vector<2x1xf32>
    %cst_123 = arith.constant 1.000000e+00 : f32
    %362 = vector.broadcast %cst_123 : f32 to vector<2x1xf32>
    %363 = arith.addf %362, %361 : vector<2x1xf32>
    %364 = arith.divf %362, %363 : vector<2x1xf32>
    %c0_124 = arith.constant 0 : index
    %c0_125 = arith.constant 0 : index
    %365 = vector.load %arg3[%c0_124, %c0_125] : memref<2x1xf32, #tpu.memory_space<vmem>>, vector<2x1xf32>
    tpu.vector_store %arg3[%c0_124, %c0_125], %364 {strides = array<i32>} : memref<2x1xf32, #tpu.memory_space<vmem>>, vector<2x1xf32>,
    return
  }
}

</mosaic_0001>

<llo_original>
// kernel: sentiment_forward.1
$region0: #{sentiment_forward.1}
  #allocation0 [shape = 'u32[]', space=smem, size = 0x4, offset = 0x4, fixed_abs, tag = 'smem constant byte address 0x4 - core index']
  #allocation1 [shape = 'u32[144,128]{1,0:T(1,128)}', space=vmem, size = 0x12000, scoped, tag = 'internal scratch']
  %s0 = inlined_call_operand.vmem [shape: s32[16,1], index: 0, kind: input, shape index: {}]
  %s1 = inlined_call_operand.vmem [shape: f32[1,16], index: 1, kind: input, shape index: {}]
  %s2 = inlined_call_operand.hbm [shape: f32[512,128], index: 2, kind: input, shape index: {}]
  %s3 = inlined_call_operand.vmem [shape: f32[2,1], index: 3, kind: output, shape index: {}]
  %s4 = sld [smem:[#allocation0]]
  $region26: #{sentiment_forward.1} parent=0
    _
  %s6 = ssub.s32 1, %s4
  %s7 = scalar_select 0, %s6, %s4
  $region1: #{sentiment_forward.1} parent=0
    #allocation2 [shape = 'u8[262144]{0}', space=vmem, size = 0x40000, scoped, tag = 'input window, operand 2, single buffered']
    #allocation3 [shape = 's32[1]{0}', space=sflag, size = 0x4, scoped, tag = 'scoped memory for sentiment_forward.1']
    %8 = vsyncpa [#allocation3], 0
    // Predicated region
    $region2: #{sentiment_forward.1} parent=1 // pred_check
      _
    $region3: #{sentiment_forward.1} parent=1 // pred_check_branch
      %10 = sbr.rel (0) target = $region5
    $region4: #{sentiment_forward.1} parent=1 // pred_region
      _
    $region5: #{sentiment_forward.1} parent=1 // pred_fallthru
      _
    // Predicated region
    $region6: #{sentiment_forward.1} parent=1 // pred_check
      _
    $region7: #{sentiment_forward.1} parent=1 // pred_check_branch
      %12 = sbr.rel (0) target = $region9
    $region8: #{sentiment_forward.1} parent=1 // pred_region
      _
    $region9: #{sentiment_forward.1} parent=1 // pred_fallthru
      _
    // Predicated region
    $region10: #{sentiment_forward.1} parent=1 // pred_check
      _
    $region11: #{sentiment_forward.1} parent=1 // pred_check_branch
      %14 = sbr.rel (0) target = $region13
    $region12: #{sentiment_forward.1} parent=1 // pred_region
      %s16 = ssub.s32 8192, 8192
      %17 = vsyncadd [#allocation3], %s16
      %s18 = sshll.u32 [#allocation2], 4
      %s19 = int_to_ptr.vmem [resolvable:$true] %s18
      %24 = dma.hbm_to_vmem [thread:$0]  %s2, 8192, %s19, [#allocation3], 128, 128, 8
    $region13: #{sentiment_forward.1} parent=1 // pred_fallthru
      _
    // Predicated region
    $region14: #{sentiment_forward.1} parent=1 // pred_check
      _
    $region15: #{sentiment_forward.1} parent=1 // pred_check_branch
      %26 = sbr.rel (0) target = $region17
    $region16: #{sentiment_forward.1} parent=1 // pred_region
      %27 = dma.done [#allocation3], 8192
    $region17: #{sentiment_forward.1} parent=1 // pred_fallthru
      _
    %v28 = vld [vmem:[%s0] sm:$0xff]
    %v29 = vld [vmem:[%s0 + $0x8] sm:$0xff]
    %v30 = vlaneseq
    %v31 = vand.u32 %v30, 127
    %32 = vset.pattern.permute.xlu0 0
    %33 = vperm.xlu0 %32, %v28
    %v34 = vpop.permute.xlu0 %33
    %35 = vset.pattern.permute.xlu0 0
    %36 = vperm.xlu0 %35, %v29
    %v37 = vpop.permute.xlu0 %36
    %vm38 = vcmp.eq.s32.totalorder %v34, %v31
    %vm39 = vcmp.eq.s32.totalorder %v37, %v31
    %v40 = vsel %vm38, 1.0, 0.0
    %v41 = vsel %vm39, 1.0, 0.0
    %v42 = vld [vmem:[#allocation2] sm:$0xff]
    %v43 = vld [vmem:[#allocation2 + $0x8] sm:$0xff]
    %v44 = vld [vmem:[#allocation2 + $0x10] sm:$0xff]
    %v45 = vld [vmem:[#allocation2 + $0x18] sm:$0xff]
    %v46 = vld [vmem:[#allocation2 + $0x20] sm:$0xff]
    %v47 = vld [vmem:[#allocation2 + $0x28] sm:$0xff]
    %v48 = vld [vmem:[#allocation2 + $0x30] sm:$0xff]
    %v49 = vld [vmem:[#allocation2 + $0x38] sm:$0xff]
    %v50 = vld [vmem:[#allocation2 + $0x40] sm:$0xff]
    %v51 = vld [vmem:[#allocation2 + $0x48] sm:$0xff]
    %vm52 = vcmask 523264
    %v54 = vsel %vm52, %v40, 0
    %v57 = vsel %vm52, %v41, 0
    %59 = vmatprep.subr.mxu0 0.0
    %60 = vmatpush1.msra.mxu0 0.0
    %61 = vmatprep.subr.mxu0 0.0
    %62 = vmatpush1.msra.mxu0 0.0
    %63 = vmatprep.subr.mxu0 0.0
    %64 = vmatpush1.msra.mxu0 0.0
    %65 = vmatprep.subr.mxu0 0.0
    %66 = vmatpush1.msra.mxu0 0.0
    %67 = vmatprep.subr.mxu0 0.0
    %68 = vmatpush1.msra.mxu0 0.0
    %69 = vmatprep.subr.mxu0 0.0
    %70 = vmatpush1.msra.mxu0 0.0
    %71 = vmatprep.subr.mxu0 0.0
    %72 = vmatpush1.msra.mxu0 0.0
    %73 = vmatprep.subr.mxu0 0.0
    %74 = vmatpush1.msra.mxu0 0.0
    %75 = vmatprep.subr.mxu0 0.0
    %76 = vmatpush1.msra.mxu0 %v49
    %77 = vmatprep.subr.mxu0 0.0
    %78 = vmatpush1.msra.mxu0 %v48
    %79 = vmatprep.subr.mxu0 0.0
    %80 = vmatpush1.msra.mxu0 %v47
    %81 = vmatprep.subr.mxu0 0.0
    %82 = vmatpush1.msra.mxu0 %v46
    %83 = vmatprep.subr.mxu0 0.0
    %84 = vmatpush1.msra.mxu0 %v45
    %85 = vmatprep.subr.mxu0 0.0
    %86 = vmatpush1.msra.mxu0 %v44
    %87 = vmatprep.subr.mxu0 0.0
    %88 = vmatpush1.msra.mxu0 %v43
    %89 = vmatprep.subr.mxu0 0.0
    %90 = vmatpush1.msra.mxu0 %v42
    %91 = vmatprep.subr.mxu0 0.0
    %92 = vmatpush2.msra.mxu0 0.0
    %93 = vmatprep.subr.mxu0 0.0
    %94 = vmatpush2.msra.mxu0 0.0
    %95 = vmatprep.subr.mxu0 0.0
    %96 = vmatpush2.msra.mxu0 0.0
    %97 = vmatprep.subr.mxu0 0.0
    %98 = vmatpush2.msra.mxu0 0.0
    %99 = vmatprep.subr.mxu0 0.0
    %100 = vmatpush2.msra.mxu0 0.0
    %101 = vmatprep.subr.mxu0 0.0
    %102 = vmatpush2.msra.mxu0 0.0
    %103 = vmatprep.subr.mxu0 0.0
    %104 = vmatpush2.msra.mxu0 0.0
    %105 = vmatprep.subr.mxu0 0.0
    %106 = vmatpush2.msra.mxu0 0.0
    %107 = vmatprep.subr.mxu0 0.0
    %108 = vmatpush2.msra.mxu0 0.0
    %109 = vmatprep.subr.mxu0 0.0
    %110 = vmatpush2.msra.mxu0 0.0
    %111 = vmatprep.subr.mxu0 0.0
    %112 = vmatpush2.msra.mxu0 0.0
    %113 = vmatprep.subr.mxu0 0.0
    %114 = vmatpush2.msra.mxu0 0.0
    %115 = vmatprep.subr.mxu0 0.0
    %116 = vmatpush2.msra.mxu0 0.0
    %117 = vmatprep.subr.mxu0 0.0
    %118 = vmatpush2.msra.mxu0 0.0
    %119 = vmatprep.subr.mxu0 0.0
    %120 = vmatpush2.msra.mxu0 0.0
    %121 = vmatprep.subr.mxu0 0.0
    %122 = vmatpush2.msra.mxu0 0.0
    %123 = vmatprep.mubr.f32.mxu0 0.0
    %124 = vmatmul.mubr.f32.gmra.mxu0 %v54
    %v125 = vpop.f32.mrf.mxu0
    %v126 = vadd.f32 %v50, %v125
    %v127 = vpop.f32.mrf.mxu0
    %128 = vmatprep.mubr.f32.mxu0 0.0
    %129 = vmatmul.mubr.f32.gmra.mxu0 %v57
    %v130 = vpop.f32.mrf.mxu0
    %v131 = vadd.f32 %v51, %v130
    %v132 = vpop.f32.mrf.mxu0
    %133 = vdwg.mxu0
    %v134 = vld [vmem:[#allocation2 + $0x1a0] sm:$0x1]
    %v135 = vld [vmem:[#allocation2 + $0x1a1] sm:$0x1]
    %vm136 = vcmask 261120
    %v137 = vsel %vm136, %v126, 0.0
    %138 = vadd.xlane.f32.xlu0 %v137
    %v139 = vpop.xlane.xlu0 %138
    %v140 = vsel %vm136, %v131, 0.0
    %141 = vadd.xlane.f32.xlu0 %v140
    %v142 = vpop.xlane.xlu0 %141
    %v143 = vrcp.pop 32.0
    %v144 = vmul.f32 %v139, %v143
    %v145 = vmul.f32 %v142, %v143
    %v146 = vsub.f32 %v126, %v144
    %v147 = vsub.f32 %v131, %v145
    %v148 = vmul.f32 %v146, %v146
    %v149 = vmul.f32 %v147, %v147
    %v150 = vsel %vm136, %v148, 0.0
    %151 = vadd.xlane.f32.xlu0 %v150
    %v152 = vpop.xlane.xlu0 %151
    %v153 = vsel %vm136, %v149, 0.0
    %154 = vadd.xlane.f32.xlu0 %v153
    %v155 = vpop.xlane.xlu0 %154
    %v156 = vmul.f32 %v152, %v143
    %v157 = vmul.f32 %v155, %v143
    %v158 = vadd.f32 %v156, 1e-12
    %v159 = vadd.f32 %v157, 1e-12
    %v160 = vrsqrt.pop %v158
    %v161 = vrsqrt.pop %v159
    %v162 = vmul.f32 %v146, %v160
    %v163 = vmul.f32 %v147, %v161
    %v164 = vlaneseq
    %v165 = vshrl.u32 %v164, 7
    %v166 = vsub.s32 0, %v165
    %v167 = vrot.slane %v134, %v166
    %v168 = vmul.f32 %v162, %v167
    %v169 = vmul.f32 %v163, %v167
    %v170 = vlaneseq
    %v171 = vshrl.u32 %v170, 7
    %v172 = vsub.s32 0, %v171
    %v173 = vrot.slane %v135, %v172
    %v174 = vadd.f32 %v168, %v173
    %v175 = vadd.f32 %v169, %v173
    %v176 = vld [vmem:[%s1] sm:$0x1]
    %v177 = vld [vmem:[#allocation2 + $0x1ea] sm:$0xff]
    %v178 = vld [vmem:[#allocation2 + $0x1f2] sm:$0xff]
    %vm179 = vcmp.gt.f32.partialorder %v177, 0.5
    %vm180 = vcmp.gt.f32.partialorder %v178, 0.5
    %vm181 = vcmp.gt.f32.partialorder %v176, 0.5
    %v182 = vsel %vm181, 1, 0
    %v183 = vlaneseq
    %v184 = vshrl.u32 %v183, 7
    %v185 = vsub.s32 0, %v184
    %v186 = vrot.slane %v182, %v185
    %vm187 = vcmp.eq.s32.totalorder %v186, 1
    %vm188 = vmand %vm179, %vm187
    %vm189 = vmand %vm180, %vm187
    %v190 = vsel %vm188, 0.0, -1e+09
    %v191 = vsel %vm189, 0.0, -1e+09
    %v192 = vld [vmem:[#allocation2 + $0x1e6] sm:$0xf]
    %v193 = vld [vmem:[#allocation2 + $0x50] sm:$0xff]
    %v194 = vld [vmem:[#allocation2 + $0x58] sm:$0xff]
    %v195 = vld [vmem:[#allocation2 + $0x60] sm:$0xff]
    %v196 = vld [vmem:[#allocation2 + $0x68] sm:$0xff]
    %v197 = vld [vmem:[#allocation2 + $0xf0] sm:$0x1]
    %v198 = vlaneseq
    %v199 = vshrl.u32 %v198, 7
    %v200 = vsub.s32 0, %v199
    %v201 = vrot.slane %v197, %v200
    %v203 = vsel %vm136, %v174, 0
    %v206 = vsel %vm136, %v175, 0
    %208 = vmatprep.subr.mxu0 0.0
    %209 = vmatpush1.msra.mxu0 0.0
    %210 = vmatprep.subr.mxu0 0.0
    %211 = vmatpush1.msra.mxu0 0.0
    %212 = vmatprep.subr.mxu0 0.0
    %213 = vmatpush1.msra.mxu0 0.0
    %214 = vmatprep.subr.mxu0 0.0
    %215 = vmatpush1.msra.mxu0 0.0
    %216 = vmatprep.subr.mxu0 0.0
    %217 = vmatpush1.msra.mxu0 0.0
    %218 = vmatprep.subr.mxu0 0.0
    %219 = vmatpush1.msra.mxu0 0.0
    %220 = vmatprep.subr.mxu0 0.0
    %221 = vmatpush1.msra.mxu0 0.0
    %222 = vmatprep.subr.mxu0 0.0
    %223 = vmatpush1.msra.mxu0 0.0
    %224 = vmatprep.subr.mxu0 0.0
    %225 = vmatpush1.msra.mxu0 0.0
    %226 = vmatprep.subr.mxu0 0.0
    %227 = vmatpush1.msra.mxu0 0.0
    %228 = vmatprep.subr.mxu0 0.0
    %229 = vmatpush1.msra.mxu0 0.0
    %230 = vmatprep.subr.mxu0 0.0
    %231 = vmatpush1.msra.mxu0 0.0
    %232 = vmatprep.subr.mxu0 0.0
    %233 = vmatpush1.msra.mxu0 %v196
    %234 = vmatprep.subr.mxu0 0.0
    %235 = vmatpush1.msra.mxu0 %v195
    %236 = vmatprep.subr.mxu0 0.0
    %237 = vmatpush1.msra.mxu0 %v194
    %238 = vmatprep.subr.mxu0 0.0
    %239 = vmatpush1.msra.mxu0 %v193
    %240 = vmatprep.subr.mxu0 0.0
    %241 = vmatpush2.msra.mxu0 0.0
    %242 = vmatprep.subr.mxu0 0.0
    %243 = vmatpush2.msra.mxu0 0.0
    %244 = vmatprep.subr.mxu0 0.0
    %245 = vmatpush2.msra.mxu0 0.0
    %246 = vmatprep.subr.mxu0 0.0
    %247 = vmatpush2.msra.mxu0 0.0
    %248 = vmatprep.subr.mxu0 0.0
    %249 = vmatpush2.msra.mxu0 0.0
    %250 = vmatprep.subr.mxu0 0.0
    %251 = vmatpush2.msra.mxu0 0.0
    %252 = vmatprep.subr.mxu0 0.0
    %253 = vmatpush2.msra.mxu0 0.0
    %254 = vmatprep.subr.mxu0 0.0
    %255 = vmatpush2.msra.mxu0 0.0
    %256 = vmatprep.subr.mxu0 0.0
    %257 = vmatpush2.msra.mxu0 0.0
    %258 = vmatprep.subr.mxu0 0.0
    %259 = vmatpush2.msra.mxu0 0.0
    %260 = vmatprep.subr.mxu0 0.0
    %261 = vmatpush2.msra.mxu0 0.0
    %262 = vmatprep.subr.mxu0 0.0
    %263 = vmatpush2.msra.mxu0 0.0
    %264 = vmatprep.subr.mxu0 0.0
    %265 = vmatpush2.msra.mxu0 0.0
    %266 = vmatprep.subr.mxu0 0.0
    %267 = vmatpush2.msra.mxu0 0.0
    %268 = vmatprep.subr.mxu0 0.0
    %269 = vmatpush2.msra.mxu0 0.0
    %270 = vmatprep.subr.mxu0 0.0
    %271 = vmatpush2.msra.mxu0 0.0
    %272 = vmatprep.mubr.f32.mxu0 0.0
    %273 = vmatmul.mubr.f32.gmra.mxu0 %v203
    %v274 = vpop.f32.mrf.mxu0
    %v275 = vadd.f32 %v201, %v274
    %v276 = vpop.f32.mrf.mxu0
    %277 = vmatprep.mubr.f32.mxu0 0.0
    %278 = vmatmul.mubr.f32.gmra.mxu0 %v206
    %v279 = vpop.f32.mrf.mxu0
    %v280 = vadd.f32 %v201, %v279
    %v281 = vpop.f32.mrf.mxu0
    %282 = vdwg.mxu0
    %v283 = vlaneseq
    %v284 = vshrl.u32 %v283, 7
    %v285 = vsub.s32 0, %v284
    %v286 = vrot.slane %v192, %v285
    %v287 = vmul.f32 %v275, %v286
    %v288 = vmul.f32 %v280, %v286
    %291 = vrot.lane.b32.xlu0 %v275, 96
    %v292 = vpop.permute.xlu0 %291
    %293 = vrot.lane.b32.xlu0 %v280, 96
    %v294 = vpop.permute.xlu0 %293
    %v296 = vsel %vm136, %v287, 0
    %v299 = vsel %vm136, %v288, 0
    %v301 = vsel %vm136, %v292, 0
    %v303 = vsel %vm136, %v294, 0
    %305 = vmatprep.subr.mxu0 0.0
    %306 = vmatpush1.xpose.msra.mxu0 0.0
    %307 = vmatprep.subr.mxu0 0.0
    %308 = vmatpush1.xpose.msra.mxu0 0.0
    %309 = vmatprep.subr.mxu0 0.0
    %310 = vmatpush1.xpose.msra.mxu0 0.0
    %311 = vmatprep.subr.mxu0 0.0
    %312 = vmatpush1.xpose.msra.mxu0 0.0
    %313 = vmatprep.subr.mxu0 0.0
    %314 = vmatpush1.xpose.msra.mxu0 0.0
    %315 = vmatprep.subr.mxu0 0.0
    %316 = vmatpush1.xpose.msra.mxu0 0.0
    %317 = vmatprep.subr.mxu0 0.0
    %318 = vmatpush1.xpose.msra.mxu0 0.0
    %319 = vmatprep.subr.mxu0 0.0
    %320 = vmatpush1.xpose.msra.mxu0 0.0
    %321 = vmatprep.subr.mxu0 0.0
    %322 = vmatpush1.xpose.msra.mxu0 0.0
    %323 = vmatprep.subr.mxu0 0.0
    %324 = vmatpush1.xpose.msra.mxu0 0.0
    %325 = vmatprep.subr.mxu0 0.0
    %326 = vmatpush1.xpose.msra.mxu0 0.0
    %327 = vmatprep.subr.mxu0 0.0
    %328 = vmatpush1.xpose.msra.mxu0 0.0
    %329 = vmatprep.subr.mxu0 0.0
    %330 = vmatpush1.xpose.msra.mxu0 0.0
    %331 = vmatprep.subr.mxu0 0.0
    %332 = vmatpush1.xpose.msra.mxu0 0.0
    %333 = vmatprep.subr.mxu0 0.0
    %334 = vmatpush1.xpose.msra.mxu0 %v303
    %335 = vmatprep.subr.mxu0 0.0
    %336 = vmatpush1.xpose.msra.mxu0 %v301
    %337 = vmatprep.subr.mxu0 0.0
    %338 = vmatpush2.xpose.msra.mxu0 0.0
    %339 = vmatprep.subr.mxu0 0.0
    %340 = vmatpush2.xpose.msra.mxu0 0.0
    %341 = vmatprep.subr.mxu0 0.0
    %342 = vmatpush2.xpose.msra.mxu0 0.0
    %343 = vmatprep.subr.mxu0 0.0
    %344 = vmatpush2.xpose.msra.mxu0 0.0
    %345 = vmatprep.subr.mxu0 0.0
    %346 = vmatpush2.xpose.msra.mxu0 0.0
    %347 = vmatprep.subr.mxu0 0.0
    %348 = vmatpush2.xpose.msra.mxu0 0.0
    %349 = vmatprep.subr.mxu0 0.0
    %350 = vmatpush2.xpose.msra.mxu0 0.0
    %351 = vmatprep.subr.mxu0 0.0
    %352 = vmatpush2.xpose.msra.mxu0 0.0
    %353 = vmatprep.subr.mxu0 0.0
    %354 = vmatpush2.xpose.msra.mxu0 0.0
    %355 = vmatprep.subr.mxu0 0.0
    %356 = vmatpush2.xpose.msra.mxu0 0.0
    %357 = vmatprep.subr.mxu0 0.0
    %358 = vmatpush2.xpose.msra.mxu0 0.0
    %359 = vmatprep.subr.mxu0 0.0
    %360 = vmatpush2.xpose.msra.mxu0 0.0
    %361 = vmatprep.subr.mxu0 0.0
    %362 = vmatpush2.xpose.msra.mxu0 0.0
    %363 = vmatprep.subr.mxu0 0.0
    %364 = vmatpush2.xpose.msra.mxu0 0.0
    %365 = vmatprep.subr.mxu0 0.0
    %366 = vmatpush2.xpose.msra.mxu0 0.0
    %367 = vmatprep.subr.mxu0 0.0
    %368 = vmatpush2.xpose.msra.mxu0 0.0
    %369 = vmatprep.mubr.f32.mxu0 0.0
    %370 = vmatmul.mubr.f32.gmra.mxu0 %v296
    %v371 = vpop.f32.mrf.mxu0
    %v372 = vadd.f32 0.0, %v371
    %v373 = vpop.f32.mrf.mxu0
    %374 = vmatprep.mubr.f32.mxu0 0.0
    %375 = vmatmul.mubr.f32.gmra.mxu0 %v299
    %v376 = vpop.f32.mrf.mxu0
    %v377 = vadd.f32 0.0, %v376
    %v378 = vpop.f32.mrf.mxu0
    %379 = vdwg.mxu0
    %v380 = vmul.f32 %v372, 0.35355338
    %v381 = vmul.f32 %v377, 0.35355338
    %v382 = vadd.f32 %v380, %v190
    %v383 = vadd.f32 %v381, %v191
    %v384 = vmul.f32 %v382, 1.442695
    %v385 = vpow.pop %v384
    %v386 = vmul.f32 %v383, 1.442695
    %v387 = vpow.pop %v386
    %vm388 = vcmask 130048
    %v389 = vsel %vm388, %v385, 0.0
    %390 = vadd.xlane.f32.xlu0 %v389
    %v391 = vpop.xlane.xlu0 %390
    %v392 = vsel %vm388, %v387, 0.0
    %393 = vadd.xlane.f32.xlu0 %v392
    %v394 = vpop.xlane.xlu0 %393
    %v395 = vrcp.pop %v391
    %v396 = vrcp.pop %v394
    %v397 = vmul.f32 %v385, %v395
    %v398 = vmul.f32 %v387, %v396
    %400 = vrot.lane.b32.xlu0 %v286, 64
    %v401 = vpop.permute.xlu0 %400
    %v403 = vmul.f32 %v275, %v401
    %v404 = vmul.f32 %v280, %v401
    %v405 = vlaneseq
    %v406 = vshrl.u32 %v405, 7
    %v407 = vsub.s32 1, %v406
    %v408 = vrot.slane %v192, %v407
    %v409 = vmul.f32 %v275, %v408
    %v410 = vmul.f32 %v280, %v408
    %v412 = vsel %vm136, %v409, 0
    %v415 = vsel %vm136, %v410, 0
    %417 = vmatprep.subr.mxu0 0.0
    %418 = vmatpush1.xpose.msra.mxu0 0.0
    %419 = vmatprep.subr.mxu0 0.0
    %420 = vmatpush1.xpose.msra.mxu0 0.0
    %421 = vmatprep.subr.mxu0 0.0
    %422 = vmatpush1.xpose.msra.mxu0 0.0
    %423 = vmatprep.subr.mxu0 0.0
    %424 = vmatpush1.xpose.msra.mxu0 0.0
    %425 = vmatprep.subr.mxu0 0.0
    %426 = vmatpush1.xpose.msra.mxu0 0.0
    %427 = vmatprep.subr.mxu0 0.0
    %428 = vmatpush1.xpose.msra.mxu0 0.0
    %429 = vmatprep.subr.mxu0 0.0
    %430 = vmatpush1.xpose.msra.mxu0 0.0
    %431 = vmatprep.subr.mxu0 0.0
    %432 = vmatpush1.xpose.msra.mxu0 0.0
    %433 = vmatprep.subr.mxu0 0.0
    %434 = vmatpush1.xpose.msra.mxu0 0.0
    %435 = vmatprep.subr.mxu0 0.0
    %436 = vmatpush1.xpose.msra.mxu0 0.0
    %437 = vmatprep.subr.mxu0 0.0
    %438 = vmatpush1.xpose.msra.mxu0 0.0
    %439 = vmatprep.subr.mxu0 0.0
    %440 = vmatpush1.xpose.msra.mxu0 0.0
    %441 = vmatprep.subr.mxu0 0.0
    %442 = vmatpush1.xpose.msra.mxu0 0.0
    %443 = vmatprep.subr.mxu0 0.0
    %444 = vmatpush1.xpose.msra.mxu0 0.0
    %445 = vmatprep.subr.mxu0 0.0
    %446 = vmatpush1.xpose.msra.mxu0 %v303
    %447 = vmatprep.subr.mxu0 0.0
    %448 = vmatpush1.xpose.msra.mxu0 %v301
    %449 = vmatprep.subr.mxu0 0.0
    %450 = vmatpush2.xpose.msra.mxu0 0.0
    %451 = vmatprep.subr.mxu0 0.0
    %452 = vmatpush2.xpose.msra.mxu0 0.0
    %453 = vmatprep.subr.mxu0 0.0
    %454 = vmatpush2.xpose.msra.mxu0 0.0
    %455 = vmatprep.subr.mxu0 0.0
    %456 = vmatpush2.xpose.msra.mxu0 0.0
    %457 = vmatprep.subr.mxu0 0.0
    %458 = vmatpush2.xpose.msra.mxu0 0.0
    %459 = vmatprep.subr.mxu0 0.0
    %460 = vmatpush2.xpose.msra.mxu0 0.0
    %461 = vmatprep.subr.mxu0 0.0
    %462 = vmatpush2.xpose.msra.mxu0 0.0
    %463 = vmatprep.subr.mxu0 0.0
    %464 = vmatpush2.xpose.msra.mxu0 0.0
    %465 = vmatprep.subr.mxu0 0.0
    %466 = vmatpush2.xpose.msra.mxu0 0.0
    %467 = vmatprep.subr.mxu0 0.0
    %468 = vmatpush2.xpose.msra.mxu0 0.0
    %469 = vmatprep.subr.mxu0 0.0
    %470 = vmatpush2.xpose.msra.mxu0 0.0
    %471 = vmatprep.subr.mxu0 0.0
    %472 = vmatpush2.xpose.msra.mxu0 0.0
    %473 = vmatprep.subr.mxu0 0.0
    %474 = vmatpush2.xpose.msra.mxu0 0.0
    %475 = vmatprep.subr.mxu0 0.0
    %476 = vmatpush2.xpose.msra.mxu0 0.0
    %477 = vmatprep.subr.mxu0 0.0
    %478 = vmatpush2.xpose.msra.mxu0 0.0
    %479 = vmatprep.subr.mxu0 0.0
    %480 = vmatpush2.xpose.msra.mxu0 0.0
    %481 = vmatprep.mubr.f32.mxu0 0.0
    %482 = vmatmul.mubr.f32.gmra.mxu0 %v412
    %v483 = vpop.f32.mrf.mxu0
    %v484 = vadd.f32 0.0, %v483
    %v485 = vpop.f32.mrf.mxu0
    %486 = vmatprep.mubr.f32.mxu0 0.0
    %487 = vmatmul.mubr.f32.gmra.mxu0 %v415
    %v488 = vpop.f32.mrf.mxu0
    %v489 = vadd.f32 0.0, %v488
    %v490 = vpop.f32.mrf.mxu0
    %491 = vdwg.mxu0
    %v492 = vmul.f32 %v484, 0.35355338
    %v493 = vmul.f32 %v489, 0.35355338
    %v494 = vadd.f32 %v492, %v190
    %v495 = vadd.f32 %v493, %v191
    %v496 = vmul.f32 %v494, 1.442695
    %v497 = vpow.pop %v496
    %v498 = vmul.f32 %v495, 1.442695
    %v499 = vpow.pop %v498
    %v500 = vsel %vm388, %v497, 0.0
    %501 = vadd.xlane.f32.xlu0 %v500
    %v502 = vpop.xlane.xlu0 %501
    %v503 = vsel %vm388, %v499, 0.0
    %504 = vadd.xlane.f32.xlu0 %v503
    %v505 = vpop.xlane.xlu0 %504
    %v506 = vrcp.pop %v502
    %v507 = vrcp.pop %v505
    %v508 = vmul.f32 %v497, %v506
    %v509 = vmul.f32 %v499, %v507
    %511 = vrot.lane.b32.xlu0 %v408, 64
    %v512 = vpop.permute.xlu0 %511
    %v514 = vmul.f32 %v275, %v512
    %v515 = vmul.f32 %v280, %v512
    %518 = vrot.lane.b32.xlu0 %v514, 64
    %v519 = vpop.permute.xlu0 %518
    %520 = vrot.lane.b32.xlu0 %v515, 64
    %v521 = vpop.permute.xlu0 %520
    %v525 = vsel %vm388, %v508, 0
    %v528 = vsel %vm388, %v509, 0
    %530 = vmatprep.subr.mxu0 0.0
    %531 = vmatpush1.msra.mxu0 0.0
    %532 = vmatprep.subr.mxu0 0.0
    %533 = vmatpush1.msra.mxu0 0.0
    %534 = vmatprep.subr.mxu0 0.0
    %535 = vmatpush1.msra.mxu0 0.0
    %536 = vmatprep.subr.mxu0 0.0
    %537 = vmatpush1.msra.mxu0 0.0
    %538 = vmatprep.subr.mxu0 0.0
    %539 = vmatpush1.msra.mxu0 0.0
    %540 = vmatprep.subr.mxu0 0.0
    %541 = vmatpush1.msra.mxu0 0.0
    %542 = vmatprep.subr.mxu0 0.0
    %543 = vmatpush1.msra.mxu0 0.0
    %544 = vmatprep.subr.mxu0 0.0
    %545 = vmatpush1.msra.mxu0 0.0
    %546 = vmatprep.subr.mxu0 0.0
    %547 = vmatpush1.msra.mxu0 0.0
    %548 = vmatprep.subr.mxu0 0.0
    %549 = vmatpush1.msra.mxu0 0.0
    %550 = vmatprep.subr.mxu0 0.0
    %551 = vmatpush1.msra.mxu0 0.0
    %552 = vmatprep.subr.mxu0 0.0
    %553 = vmatpush1.msra.mxu0 0.0
    %554 = vmatprep.subr.mxu0 0.0
    %555 = vmatpush1.msra.mxu0 0.0
    %556 = vmatprep.subr.mxu0 0.0
    %557 = vmatpush1.msra.mxu0 0.0
    %558 = vmatprep.subr.mxu0 0.0
    %559 = vmatpush1.msra.mxu0 %v521
    %560 = vmatprep.subr.mxu0 0.0
    %561 = vmatpush1.msra.mxu0 %v519
    %562 = vmatprep.subr.mxu0 0.0
    %563 = vmatpush2.msra.mxu0 0.0
    %564 = vmatprep.subr.mxu0 0.0
    %565 = vmatpush2.msra.mxu0 0.0
    %566 = vmatprep.subr.mxu0 0.0
    %567 = vmatpush2.msra.mxu0 0.0
    %568 = vmatprep.subr.mxu0 0.0
    %569 = vmatpush2.msra.mxu0 0.0
    %570 = vmatprep.subr.mxu0 0.0
    %571 = vmatpush2.msra.mxu0 0.0
    %572 = vmatprep.subr.mxu0 0.0
    %573 = vmatpush2.msra.mxu0 0.0
    %574 = vmatprep.subr.mxu0 0.0
    %575 = vmatpush2.msra.mxu0 0.0
    %576 = vmatprep.subr.mxu0 0.0
    %577 = vmatpush2.msra.mxu0 0.0
    %578 = vmatprep.subr.mxu0 0.0
    %579 = vmatpush2.msra.mxu0 0.0
    %580 = vmatprep.subr.mxu0 0.0
    %581 = vmatpush2.msra.mxu0 0.0
    %582 = vmatprep.subr.mxu0 0.0
    %583 = vmatpush2.msra.mxu0 0.0
    %584 = vmatprep.subr.mxu0 0.0
    %585 = vmatpush2.msra.mxu0 0.0
    %586 = vmatprep.subr.mxu0 0.0
    %587 = vmatpush2.msra.mxu0 0.0
    %588 = vmatprep.subr.mxu0 0.0
    %589 = vmatpush2.msra.mxu0 0.0
    %590 = vmatprep.subr.mxu0 0.0
    %591 = vmatpush2.msra.mxu0 0.0
    %592 = vmatprep.subr.mxu0 0.0
    %593 = vmatpush2.msra.mxu0 0.0
    %594 = vmatprep.mubr.f32.mxu0 0.0
    %595 = vmatmul.mubr.f32.gmra.mxu0 %v525
    %v596 = vpop.f32.mrf.mxu0
    %v597 = vadd.f32 0.0, %v596
    %v598 = vpop.f32.mrf.mxu0
    %599 = vmatprep.mubr.f32.mxu0 0.0
    %600 = vmatmul.mubr.f32.gmra.mxu0 %v528
    %v601 = vpop.f32.mrf.mxu0
    %v602 = vadd.f32 0.0, %v601
    %v603 = vpop.f32.mrf.mxu0
    %604 = vdwg.mxu0
    %607 = vrot.lane.b32.xlu0 %v403, 64
    %v608 = vpop.permute.xlu0 %607
    %609 = vrot.lane.b32.xlu0 %v404, 64
    %v610 = vpop.permute.xlu0 %609
    %v614 = vsel %vm388, %v397, 0
    %v617 = vsel %vm388, %v398, 0
    %619 = vmatprep.subr.mxu0 0.0
    %620 = vmatpush1.msra.mxu0 0.0
    %621 = vmatprep.subr.mxu0 0.0
    %622 = vmatpush1.msra.mxu0 0.0
    %623 = vmatprep.subr.mxu0 0.0
    %624 = vmatpush1.msra.mxu0 0.0
    %625 = vmatprep.subr.mxu0 0.0
    %626 = vmatpush1.msra.mxu0 0.0
    %627 = vmatprep.subr.mxu0 0.0
    %628 = vmatpush1.msra.mxu0 0.0
    %629 = vmatprep.subr.mxu0 0.0
    %630 = vmatpush1.msra.mxu0 0.0
    %631 = vmatprep.subr.mxu0 0.0
    %632 = vmatpush1.msra.mxu0 0.0
    %633 = vmatprep.subr.mxu0 0.0
    %634 = vmatpush1.msra.mxu0 0.0
    %635 = vmatprep.subr.mxu0 0.0
    %636 = vmatpush1.msra.mxu0 0.0
    %637 = vmatprep.subr.mxu0 0.0
    %638 = vmatpush1.msra.mxu0 0.0
    %639 = vmatprep.subr.mxu0 0.0
    %640 = vmatpush1.msra.mxu0 0.0
    %641 = vmatprep.subr.mxu0 0.0
    %642 = vmatpush1.msra.mxu0 0.0
    %643 = vmatprep.subr.mxu0 0.0
    %644 = vmatpush1.msra.mxu0 0.0
    %645 = vmatprep.subr.mxu0 0.0
    %646 = vmatpush1.msra.mxu0 0.0
    %647 = vmatprep.subr.mxu0 0.0
    %648 = vmatpush1.msra.mxu0 %v610
    %649 = vmatprep.subr.mxu0 0.0
    %650 = vmatpush1.msra.mxu0 %v608
    %651 = vmatprep.subr.mxu0 0.0
    %652 = vmatpush2.msra.mxu0 0.0
    %653 = vmatprep.subr.mxu0 0.0
    %654 = vmatpush2.msra.mxu0 0.0
    %655 = vmatprep.subr.mxu0 0.0
    %656 = vmatpush2.msra.mxu0 0.0
    %657 = vmatprep.subr.mxu0 0.0
    %658 = vmatpush2.msra.mxu0 0.0
    %659 = vmatprep.subr.mxu0 0.0
    %660 = vmatpush2.msra.mxu0 0.0
    %661 = vmatprep.subr.mxu0 0.0
    %662 = vmatpush2.msra.mxu0 0.0
    %663 = vmatprep.subr.mxu0 0.0
    %664 = vmatpush2.msra.mxu0 0.0
    %665 = vmatprep.subr.mxu0 0.0
    %666 = vmatpush2.msra.mxu0 0.0
    %667 = vmatprep.subr.mxu0 0.0
    %668 = vmatpush2.msra.mxu0 0.0
    %669 = vmatprep.subr.mxu0 0.0
    %670 = vmatpush2.msra.mxu0 0.0
    %671 = vmatprep.subr.mxu0 0.0
    %672 = vmatpush2.msra.mxu0 0.0
    %673 = vmatprep.subr.mxu0 0.0
    %674 = vmatpush2.msra.mxu0 0.0
    %675 = vmatprep.subr.mxu0 0.0
    %676 = vmatpush2.msra.mxu0 0.0
    %677 = vmatprep.subr.mxu0 0.0
    %678 = vmatpush2.msra.mxu0 0.0
    %679 = vmatprep.subr.mxu0 0.0
    %680 = vmatpush2.msra.mxu0 0.0
    %681 = vmatprep.subr.mxu0 0.0
    %682 = vmatpush2.msra.mxu0 0.0
    %683 = vmatprep.mubr.f32.mxu0 0.0
    %684 = vmatmul.mubr.f32.gmra.mxu0 %v614
    %v685 = vpop.f32.mrf.mxu0
    %v686 = vadd.f32 %v597, %v685
    %v687 = vpop.f32.mrf.mxu0
    %688 = vmatprep.mubr.f32.mxu0 0.0
    %689 = vmatmul.mubr.f32.gmra.mxu0 %v617
    %v690 = vpop.f32.mrf.mxu0
    %v691 = vadd.f32 %v602, %v690
    %v692 = vpop.f32.mrf.mxu0
    %693 = vdwg.mxu0
    %v694 = vlaneseq
    %v695 = vshrl.u32 %v694, 7
    %v696 = vsub.s32 2, %v695
    %v697 = vrot.slane %v192, %v696
    %v698 = vmul.f32 %v275, %v697
    %v699 = vmul.f32 %v280, %v697
    %v701 = vsel %vm136, %v698, 0
    %v704 = vsel %vm136, %v699, 0
    %706 = vmatprep.subr.mxu0 0.0
    %707 = vmatpush1.xpose.msra.mxu0 0.0
    %708 = vmatprep.subr.mxu0 0.0
    %709 = vmatpush1.xpose.msra.mxu0 0.0
    %710 = vmatprep.subr.mxu0 0.0
    %711 = vmatpush1.xpose.msra.mxu0 0.0
    %712 = vmatprep.subr.mxu0 0.0
    %713 = vmatpush1.xpose.msra.mxu0 0.0
    %714 = vmatprep.subr.mxu0 0.0
    %715 = vmatpush1.xpose.msra.mxu0 0.0
    %716 = vmatprep.subr.mxu0 0.0
    %717 = vmatpush1.xpose.msra.mxu0 0.0
    %718 = vmatprep.subr.mxu0 0.0
    %719 = vmatpush1.xpose.msra.mxu0 0.0
    %720 = vmatprep.subr.mxu0 0.0
    %721 = vmatpush1.xpose.msra.mxu0 0.0
    %722 = vmatprep.subr.mxu0 0.0
    %723 = vmatpush1.xpose.msra.mxu0 0.0
    %724 = vmatprep.subr.mxu0 0.0
    %725 = vmatpush1.xpose.msra.mxu0 0.0
    %726 = vmatprep.subr.mxu0 0.0
    %727 = vmatpush1.xpose.msra.mxu0 0.0
    %728 = vmatprep.subr.mxu0 0.0
    %729 = vmatpush1.xpose.msra.mxu0 0.0
    %730 = vmatprep.subr.mxu0 0.0
    %731 = vmatpush1.xpose.msra.mxu0 0.0
    %732 = vmatprep.subr.mxu0 0.0
    %733 = vmatpush1.xpose.msra.mxu0 0.0
    %734 = vmatprep.subr.mxu0 0.0
    %735 = vmatpush1.xpose.msra.mxu0 %v303
    %736 = vmatprep.subr.mxu0 0.0
    %737 = vmatpush1.xpose.msra.mxu0 %v301
    %738 = vmatprep.subr.mxu0 0.0
    %739 = vmatpush2.xpose.msra.mxu0 0.0
    %740 = vmatprep.subr.mxu0 0.0
    %741 = vmatpush2.xpose.msra.mxu0 0.0
    %742 = vmatprep.subr.mxu0 0.0
    %743 = vmatpush2.xpose.msra.mxu0 0.0
    %744 = vmatprep.subr.mxu0 0.0
    %745 = vmatpush2.xpose.msra.mxu0 0.0
    %746 = vmatprep.subr.mxu0 0.0
    %747 = vmatpush2.xpose.msra.mxu0 0.0
    %748 = vmatprep.subr.mxu0 0.0
    %749 = vmatpush2.xpose.msra.mxu0 0.0
    %750 = vmatprep.subr.mxu0 0.0
    %751 = vmatpush2.xpose.msra.mxu0 0.0
    %752 = vmatprep.subr.mxu0 0.0
    %753 = vmatpush2.xpose.msra.mxu0 0.0
    %754 = vmatprep.subr.mxu0 0.0
    %755 = vmatpush2.xpose.msra.mxu0 0.0
    %756 = vmatprep.subr.mxu0 0.0
    %757 = vmatpush2.xpose.msra.mxu0 0.0
    %758 = vmatprep.subr.mxu0 0.0
    %759 = vmatpush2.xpose.msra.mxu0 0.0
    %760 = vmatprep.subr.mxu0 0.0
    %761 = vmatpush2.xpose.msra.mxu0 0.0
    %762 = vmatprep.subr.mxu0 0.0
    %763 = vmatpush2.xpose.msra.mxu0 0.0
    %764 = vmatprep.subr.mxu0 0.0
    %765 = vmatpush2.xpose.msra.mxu0 0.0
    %766 = vmatprep.subr.mxu0 0.0
    %767 = vmatpush2.xpose.msra.mxu0 0.0
    %768 = vmatprep.subr.mxu0 0.0
    %769 = vmatpush2.xpose.msra.mxu0 0.0
    %770 = vmatprep.mubr.f32.mxu0 0.0
    %771 = vmatmul.mubr.f32.gmra.mxu0 %v701
    %v772 = vpop.f32.mrf.mxu0
    %v773 = vadd.f32 0.0, %v772
    %v774 = vpop.f32.mrf.mxu0
    %775 = vmatprep.mubr.f32.mxu0 0.0
    %776 = vmatmul.mubr.f32.gmra.mxu0 %v704
    %v777 = vpop.f32.mrf.mxu0
    %v778 = vadd.f32 0.0, %v777
    %v779 = vpop.f32.mrf.mxu0
    %780 = vdwg.mxu0
    %v781 = vmul.f32 %v773, 0.35355338
    %v782 = vmul.f32 %v778, 0.35355338
    %v783 = vadd.f32 %v781, %v190
    %v784 = vadd.f32 %v782, %v191
    %v785 = vmul.f32 %v783, 1.442695
    %v786 = vpow.pop %v785
    %v787 = vmul.f32 %v784, 1.442695
    %v788 = vpow.pop %v787
    %v789 = vsel %vm388, %v786, 0.0
    %790 = vadd.xlane.f32.xlu0 %v789
    %v791 = vpop.xlane.xlu0 %790
    %v792 = vsel %vm388, %v788, 0.0
    %793 = vadd.xlane.f32.xlu0 %v792
    %v794 = vpop.xlane.xlu0 %793
    %v795 = vrcp.pop %v791
    %v796 = vrcp.pop %v794
    %v797 = vmul.f32 %v786, %v795
    %v798 = vmul.f32 %v788, %v796
    %800 = vrot.lane.b32.xlu0 %v697, 64
    %v801 = vpop.permute.xlu0 %800
    %v803 = vmul.f32 %v275, %v801
    %v804 = vmul.f32 %v280, %v801
    %807 = vrot.lane.b32.xlu0 %v803, 64
    %v808 = vpop.permute.xlu0 %807
    %809 = vrot.lane.b32.xlu0 %v804, 64
    %v810 = vpop.permute.xlu0 %809
    %v814 = vsel %vm388, %v797, 0
    %v817 = vsel %vm388, %v798, 0
    %819 = vmatprep.subr.mxu0 0.0
    %820 = vmatpush1.msra.mxu0 0.0
    %821 = vmatprep.subr.mxu0 0.0
    %822 = vmatpush1.msra.mxu0 0.0
    %823 = vmatprep.subr.mxu0 0.0
    %824 = vmatpush1.msra.mxu0 0.0
    %825 = vmatprep.subr.mxu0 0.0
    %826 = vmatpush1.msra.mxu0 0.0
    %827 = vmatprep.subr.mxu0 0.0
    %828 = vmatpush1.msra.mxu0 0.0
    %829 = vmatprep.subr.mxu0 0.0
    %830 = vmatpush1.msra.mxu0 0.0
    %831 = vmatprep.subr.mxu0 0.0
    %832 = vmatpush1.msra.mxu0 0.0
    %833 = vmatprep.subr.mxu0 0.0
    %834 = vmatpush1.msra.mxu0 0.0
    %835 = vmatprep.subr.mxu0 0.0
    %836 = vmatpush1.msra.mxu0 0.0
    %837 = vmatprep.subr.mxu0 0.0
    %838 = vmatpush1.msra.mxu0 0.0
    %839 = vmatprep.subr.mxu0 0.0
    %840 = vmatpush1.msra.mxu0 0.0
    %841 = vmatprep.subr.mxu0 0.0
    %842 = vmatpush1.msra.mxu0 0.0
    %843 = vmatprep.subr.mxu0 0.0
    %844 = vmatpush1.msra.mxu0 0.0
    %845 = vmatprep.subr.mxu0 0.0
    %846 = vmatpush1.msra.mxu0 0.0
    %847 = vmatprep.subr.mxu0 0.0
    %848 = vmatpush1.msra.mxu0 %v810
    %849 = vmatprep.subr.mxu0 0.0
    %850 = vmatpush1.msra.mxu0 %v808
    %851 = vmatprep.subr.mxu0 0.0
    %852 = vmatpush2.msra.mxu0 0.0
    %853 = vmatprep.subr.mxu0 0.0
    %854 = vmatpush2.msra.mxu0 0.0
    %855 = vmatprep.subr.mxu0 0.0
    %856 = vmatpush2.msra.mxu0 0.0
    %857 = vmatprep.subr.mxu0 0.0
    %858 = vmatpush2.msra.mxu0 0.0
    %859 = vmatprep.subr.mxu0 0.0
    %860 = vmatpush2.msra.mxu0 0.0
    %861 = vmatprep.subr.mxu0 0.0
    %862 = vmatpush2.msra.mxu0 0.0
    %863 = vmatprep.subr.mxu0 0.0
    %864 = vmatpush2.msra.mxu0 0.0
    %865 = vmatprep.subr.mxu0 0.0
    %866 = vmatpush2.msra.mxu0 0.0
    %867 = vmatprep.subr.mxu0 0.0
    %868 = vmatpush2.msra.mxu0 0.0
    %869 = vmatprep.subr.mxu0 0.0
    %870 = vmatpush2.msra.mxu0 0.0
    %871 = vmatprep.subr.mxu0 0.0
    %872 = vmatpush2.msra.mxu0 0.0
    %873 = vmatprep.subr.mxu0 0.0
    %874 = vmatpush2.msra.mxu0 0.0
    %875 = vmatprep.subr.mxu0 0.0
    %876 = vmatpush2.msra.mxu0 0.0
    %877 = vmatprep.subr.mxu0 0.0
    %878 = vmatpush2.msra.mxu0 0.0
    %879 = vmatprep.subr.mxu0 0.0
    %880 = vmatpush2.msra.mxu0 0.0
    %881 = vmatprep.subr.mxu0 0.0
    %882 = vmatpush2.msra.mxu0 0.0
    %883 = vmatprep.mubr.f32.mxu0 0.0
    %884 = vmatmul.mubr.f32.gmra.mxu0 %v814
    %v885 = vpop.f32.mrf.mxu0
    %v886 = vadd.f32 0.0, %v885
    %v887 = vpop.f32.mrf.mxu0
    %888 = vmatprep.mubr.f32.mxu0 0.0
    %889 = vmatmul.mubr.f32.gmra.mxu0 %v817
    %v890 = vpop.f32.mrf.mxu0
    %v891 = vadd.f32 0.0, %v890
    %v892 = vpop.f32.mrf.mxu0
    %893 = vdwg.mxu0
    %v894 = vadd.f32 %v686, %v886
    %v895 = vadd.f32 %v691, %v891
    %v896 = vlaneseq
    %v897 = vshrl.u32 %v896, 7
    %v898 = vsub.s32 3, %v897
    %v899 = vrot.slane %v192, %v898
    %v900 = vmul.f32 %v275, %v899
    %v901 = vmul.f32 %v280, %v899
    %v903 = vsel %vm136, %v900, 0
    %v906 = vsel %vm136, %v901, 0
    %908 = vmatprep.subr.mxu0 0.0
    %909 = vmatpush1.xpose.msra.mxu0 0.0
    %910 = vmatprep.subr.mxu0 0.0
    %911 = vmatpush1.xpose.msra.mxu0 0.0
    %912 = vmatprep.subr.mxu0 0.0
    %913 = vmatpush1.xpose.msra.mxu0 0.0
    %914 = vmatprep.subr.mxu0 0.0
    %915 = vmatpush1.xpose.msra.mxu0 0.0
    %916 = vmatprep.subr.mxu0 0.0
    %917 = vmatpush1.xpose.msra.mxu0 0.0
    %918 = vmatprep.subr.mxu0 0.0
    %919 = vmatpush1.xpose.msra.mxu0 0.0
    %920 = vmatprep.subr.mxu0 0.0
    %921 = vmatpush1.xpose.msra.mxu0 0.0
    %922 = vmatprep.subr.mxu0 0.0
    %923 = vmatpush1.xpose.msra.mxu0 0.0
    %924 = vmatprep.subr.mxu0 0.0
    %925 = vmatpush1.xpose.msra.mxu0 0.0
    %926 = vmatprep.subr.mxu0 0.0
    %927 = vmatpush1.xpose.msra.mxu0 0.0
    %928 = vmatprep.subr.mxu0 0.0
    %929 = vmatpush1.xpose.msra.mxu0 0.0
    %930 = vmatprep.subr.mxu0 0.0
    %931 = vmatpush1.xpose.msra.mxu0 0.0
    %932 = vmatprep.subr.mxu0 0.0
    %933 = vmatpush1.xpose.msra.mxu0 0.0
    %934 = vmatprep.subr.mxu0 0.0
    %935 = vmatpush1.xpose.msra.mxu0 0.0
    %936 = vmatprep.subr.mxu0 0.0
    %937 = vmatpush1.xpose.msra.mxu0 %v303
    %938 = vmatprep.subr.mxu0 0.0
    %939 = vmatpush1.xpose.msra.mxu0 %v301
    %940 = vmatprep.subr.mxu0 0.0
    %941 = vmatpush2.xpose.msra.mxu0 0.0
    %942 = vmatprep.subr.mxu0 0.0
    %943 = vmatpush2.xpose.msra.mxu0 0.0
    %944 = vmatprep.subr.mxu0 0.0
    %945 = vmatpush2.xpose.msra.mxu0 0.0
    %946 = vmatprep.subr.mxu0 0.0
    %947 = vmatpush2.xpose.msra.mxu0 0.0
    %948 = vmatprep.subr.mxu0 0.0
    %949 = vmatpush2.xpose.msra.mxu0 0.0
    %950 = vmatprep.subr.mxu0 0.0
    %951 = vmatpush2.xpose.msra.mxu0 0.0
    %952 = vmatprep.subr.mxu0 0.0
    %953 = vmatpush2.xpose.msra.mxu0 0.0
    %954 = vmatprep.subr.mxu0 0.0
    %955 = vmatpush2.xpose.msra.mxu0 0.0
    %956 = vmatprep.subr.mxu0 0.0
    %957 = vmatpush2.xpose.msra.mxu0 0.0
    %958 = vmatprep.subr.mxu0 0.0
    %959 = vmatpush2.xpose.msra.mxu0 0.0
    %960 = vmatprep.subr.mxu0 0.0
    %961 = vmatpush2.xpose.msra.mxu0 0.0
    %962 = vmatprep.subr.mxu0 0.0
    %963 = vmatpush2.xpose.msra.mxu0 0.0
    %964 = vmatprep.subr.mxu0 0.0
    %965 = vmatpush2.xpose.msra.mxu0 0.0
    %966 = vmatprep.subr.mxu0 0.0
    %967 = vmatpush2.xpose.msra.mxu0 0.0
    %968 = vmatprep.subr.mxu0 0.0
    %969 = vmatpush2.xpose.msra.mxu0 0.0
    %970 = vmatprep.subr.mxu0 0.0
    %971 = vmatpush2.xpose.msra.mxu0 0.0
    %972 = vmatprep.mubr.f32.mxu0 0.0
    %973 = vmatmul.mubr.f32.gmra.mxu0 %v903
    %v974 = vpop.f32.mrf.mxu0
    %v975 = vadd.f32 0.0, %v974
    %v976 = vpop.f32.mrf.mxu0
    %977 = vmatprep.mubr.f32.mxu0 0.0
    %978 = vmatmul.mubr.f32.gmra.mxu0 %v906
    %v979 = vpop.f32.mrf.mxu0
    %v980 = vadd.f32 0.0, %v979
    %v981 = vpop.f32.mrf.mxu0
    %982 = vdwg.mxu0
    %v983 = vmul.f32 %v975, 0.35355338
    %v984 = vmul.f32 %v980, 0.35355338
    %v985 = vadd.f32 %v983, %v190
    %v986 = vadd.f32 %v984, %v191
    %v987 = vmul.f32 %v985, 1.442695
    %v988 = vpow.pop %v987
    %v989 = vmul.f32 %v986, 1.442695
    %v990 = vpow.pop %v989
    %v991 = vsel %vm388, %v988, 0.0
    %992 = vadd.xlane.f32.xlu0 %v991
    %v993 = vpop.xlane.xlu0 %992
    %v994 = vsel %vm388, %v990, 0.0
    %995 = vadd.xlane.f32.xlu0 %v994
    %v996 = vpop.xlane.xlu0 %995
    %v997 = vrcp.pop %v993
    %v998 = vrcp.pop %v996
    %v999 = vmul.f32 %v988, %v997
    %v1000 = vmul.f32 %v990, %v998
    %1002 = vrot.lane.b32.xlu0 %v899, 64
    %v1003 = vpop.permute.xlu0 %1002
    %v1005 = vmul.f32 %v275, %v1003
    %v1006 = vmul.f32 %v280, %v1003
    %1009 = vrot.lane.b32.xlu0 %v1005, 64
    %v1010 = vpop.permute.xlu0 %1009
    %1011 = vrot.lane.b32.xlu0 %v1006, 64
    %v1012 = vpop.permute.xlu0 %1011
    %v1016 = vsel %vm388, %v999, 0
    %v1019 = vsel %vm388, %v1000, 0
    %1021 = vmatprep.subr.mxu0 0.0
    %1022 = vmatpush1.msra.mxu0 0.0
    %1023 = vmatprep.subr.mxu0 0.0
    %1024 = vmatpush1.msra.mxu0 0.0
    %1025 = vmatprep.subr.mxu0 0.0
    %1026 = vmatpush1.msra.mxu0 0.0
    %1027 = vmatprep.subr.mxu0 0.0
    %1028 = vmatpush1.msra.mxu0 0.0
    %1029 = vmatprep.subr.mxu0 0.0
    %1030 = vmatpush1.msra.mxu0 0.0
    %1031 = vmatprep.subr.mxu0 0.0
    %1032 = vmatpush1.msra.mxu0 0.0
    %1033 = vmatprep.subr.mxu0 0.0
    %1034 = vmatpush1.msra.mxu0 0.0
    %1035 = vmatprep.subr.mxu0 0.0
    %1036 = vmatpush1.msra.mxu0 0.0
    %1037 = vmatprep.subr.mxu0 0.0
    %1038 = vmatpush1.msra.mxu0 0.0
    %1039 = vmatprep.subr.mxu0 0.0
    %1040 = vmatpush1.msra.mxu0 0.0
    %1041 = vmatprep.subr.mxu0 0.0
    %1042 = vmatpush1.msra.mxu0 0.0
    %1043 = vmatprep.subr.mxu0 0.0
    %1044 = vmatpush1.msra.mxu0 0.0
    %1045 = vmatprep.subr.mxu0 0.0
    %1046 = vmatpush1.msra.mxu0 0.0
    %1047 = vmatprep.subr.mxu0 0.0
    %1048 = vmatpush1.msra.mxu0 0.0
    %1049 = vmatprep.subr.mxu0 0.0
    %1050 = vmatpush1.msra.mxu0 %v1012
    %1051 = vmatprep.subr.mxu0 0.0
    %1052 = vmatpush1.msra.mxu0 %v1010
    %1053 = vmatprep.subr.mxu0 0.0
    %1054 = vmatpush2.msra.mxu0 0.0
    %1055 = vmatprep.subr.mxu0 0.0
    %1056 = vmatpush2.msra.mxu0 0.0
    %1057 = vmatprep.subr.mxu0 0.0
    %1058 = vmatpush2.msra.mxu0 0.0
    %1059 = vmatprep.subr.mxu0 0.0
    %1060 = vmatpush2.msra.mxu0 0.0
    %1061 = vmatprep.subr.mxu0 0.0
    %1062 = vmatpush2.msra.mxu0 0.0
    %1063 = vmatprep.subr.mxu0 0.0
    %1064 = vmatpush2.msra.mxu0 0.0
    %1065 = vmatprep.subr.mxu0 0.0
    %1066 = vmatpush2.msra.mxu0 0.0
    %1067 = vmatprep.subr.mxu0 0.0
    %1068 = vmatpush2.msra.mxu0 0.0
    %1069 = vmatprep.subr.mxu0 0.0
    %1070 = vmatpush2.msra.mxu0 0.0
    %1071 = vmatprep.subr.mxu0 0.0
    %1072 = vmatpush2.msra.mxu0 0.0
    %1073 = vmatprep.subr.mxu0 0.0
    %1074 = vmatpush2.msra.mxu0 0.0
    %1075 = vmatprep.subr.mxu0 0.0
    %1076 = vmatpush2.msra.mxu0 0.0
    %1077 = vmatprep.subr.mxu0 0.0
    %1078 = vmatpush2.msra.mxu0 0.0
    %1079 = vmatprep.subr.mxu0 0.0
    %1080 = vmatpush2.msra.mxu0 0.0
    %1081 = vmatprep.subr.mxu0 0.0
    %1082 = vmatpush2.msra.mxu0 0.0
    %1083 = vmatprep.subr.mxu0 0.0
    %1084 = vmatpush2.msra.mxu0 0.0
    %1085 = vmatprep.mubr.f32.mxu0 0.0
    %1086 = vmatmul.mubr.f32.gmra.mxu0 %v1016
    %v1087 = vpop.f32.mrf.mxu0
    %v1088 = vadd.f32 0.0, %v1087
    %v1089 = vpop.f32.mrf.mxu0
    %1090 = vmatprep.mubr.f32.mxu0 0.0
    %1091 = vmatmul.mubr.f32.gmra.mxu0 %v1019
    %v1092 = vpop.f32.mrf.mxu0
    %v1093 = vadd.f32 0.0, %v1092
    %v1094 = vpop.f32.mrf.mxu0
    %1095 = vdwg.mxu0
    %v1096 = vadd.f32 %v894, %v1088
    %v1097 = vadd.f32 %v895, %v1093
    %v1098 = vld [vmem:[#allocation2 + $0x70] sm:$0xff]
    %v1099 = vld [vmem:[#allocation2 + $0x78] sm:$0xff]
    %v1100 = vld [vmem:[#allocation2 + $0x80] sm:$0xff]
    %v1101 = vld [vmem:[#allocation2 + $0x88] sm:$0xff]
    %v1102 = vld [vmem:[#allocation2 + $0xf1] sm:$0x1]
    %v1103 = vlaneseq
    %v1104 = vshrl.u32 %v1103, 7
    %v1105 = vsub.s32 0, %v1104
    %v1106 = vrot.slane %v1102, %v1105
    %v1108 = vsel %vm136, %v1096, 0
    %v1111 = vsel %vm136, %v1097, 0
    %1113 = vmatprep.subr.mxu0 0.0
    %1114 = vmatpush1.msra.mxu0 0.0
    %1115 = vmatprep.subr.mxu0 0.0
    %1116 = vmatpush1.msra.mxu0 0.0
    %1117 = vmatprep.subr.mxu0 0.0
    %1118 = vmatpush1.msra.mxu0 0.0
    %1119 = vmatprep.subr.mxu0 0.0
    %1120 = vmatpush1.msra.mxu0 0.0
    %1121 = vmatprep.subr.mxu0 0.0
    %1122 = vmatpush1.msra.mxu0 0.0
    %1123 = vmatprep.subr.mxu0 0.0
    %1124 = vmatpush1.msra.mxu0 0.0
    %1125 = vmatprep.subr.mxu0 0.0
    %1126 = vmatpush1.msra.mxu0 0.0
    %1127 = vmatprep.subr.mxu0 0.0
    %1128 = vmatpush1.msra.mxu0 0.0
    %1129 = vmatprep.subr.mxu0 0.0
    %1130 = vmatpush1.msra.mxu0 0.0
    %1131 = vmatprep.subr.mxu0 0.0
    %1132 = vmatpush1.msra.mxu0 0.0
    %1133 = vmatprep.subr.mxu0 0.0
    %1134 = vmatpush1.msra.mxu0 0.0
    %1135 = vmatprep.subr.mxu0 0.0
    %1136 = vmatpush1.msra.mxu0 0.0
    %1137 = vmatprep.subr.mxu0 0.0
    %1138 = vmatpush1.msra.mxu0 %v1101
    %1139 = vmatprep.subr.mxu0 0.0
    %1140 = vmatpush1.msra.mxu0 %v1100
    %1141 = vmatprep.subr.mxu0 0.0
    %1142 = vmatpush1.msra.mxu0 %v1099
    %1143 = vmatprep.subr.mxu0 0.0
    %1144 = vmatpush1.msra.mxu0 %v1098
    %1145 = vmatprep.subr.mxu0 0.0
    %1146 = vmatpush2.msra.mxu0 0.0
    %1147 = vmatprep.subr.mxu0 0.0
    %1148 = vmatpush2.msra.mxu0 0.0
    %1149 = vmatprep.subr.mxu0 0.0
    %1150 = vmatpush2.msra.mxu0 0.0
    %1151 = vmatprep.subr.mxu0 0.0
    %1152 = vmatpush2.msra.mxu0 0.0
    %1153 = vmatprep.subr.mxu0 0.0
    %1154 = vmatpush2.msra.mxu0 0.0
    %1155 = vmatprep.subr.mxu0 0.0
    %1156 = vmatpush2.msra.mxu0 0.0
    %1157 = vmatprep.subr.mxu0 0.0
    %1158 = vmatpush2.msra.mxu0 0.0
    %1159 = vmatprep.subr.mxu0 0.0
    %1160 = vmatpush2.msra.mxu0 0.0
    %1161 = vmatprep.subr.mxu0 0.0
    %1162 = vmatpush2.msra.mxu0 0.0
    %1163 = vmatprep.subr.mxu0 0.0
    %1164 = vmatpush2.msra.mxu0 0.0
    %1165 = vmatprep.subr.mxu0 0.0
    %1166 = vmatpush2.msra.mxu0 0.0
    %1167 = vmatprep.subr.mxu0 0.0
    %1168 = vmatpush2.msra.mxu0 0.0
    %1169 = vmatprep.subr.mxu0 0.0
    %1170 = vmatpush2.msra.mxu0 0.0
    %1171 = vmatprep.subr.mxu0 0.0
    %1172 = vmatpush2.msra.mxu0 0.0
    %1173 = vmatprep.subr.mxu0 0.0
    %1174 = vmatpush2.msra.mxu0 0.0
    %1175 = vmatprep.subr.mxu0 0.0
    %1176 = vmatpush2.msra.mxu0 0.0
    %1177 = vmatprep.mubr.f32.mxu0 0.0
    %1178 = vmatmul.mubr.f32.gmra.mxu0 %v1108
    %v1179 = vpop.f32.mrf.mxu0
    %v1180 = vadd.f32 %v1106, %v1179
    %v1181 = vpop.f32.mrf.mxu0
    %1182 = vmatprep.mubr.f32.mxu0 0.0
    %1183 = vmatmul.mubr.f32.gmra.mxu0 %v1111
    %v1184 = vpop.f32.mrf.mxu0
    %v1185 = vadd.f32 %v1106, %v1184
    %v1186 = vpop.f32.mrf.mxu0
    %1187 = vdwg.mxu0
    %v1188 = vadd.f32 %v1180, %v174
    %v1189 = vadd.f32 %v1185, %v175
    %v1190 = vld [vmem:[#allocation2 + $0xf2] sm:$0x1]
    %v1191 = vld [vmem:[#allocation2 + $0xf3] sm:$0x1]
    %v1192 = vsel %vm136, %v1188, 0.0
    %1193 = vadd.xlane.f32.xlu0 %v1192
    %v1194 = vpop.xlane.xlu0 %1193
    %v1195 = vsel %vm136, %v1189, 0.0
    %1196 = vadd.xlane.f32.xlu0 %v1195
    %v1197 = vpop.xlane.xlu0 %1196
    %v1198 = vmul.f32 %v1194, %v143
    %v1199 = vmul.f32 %v1197, %v143
    %v1200 = vsub.f32 %v1188, %v1198
    %v1201 = vsub.f32 %v1189, %v1199
    %v1202 = vmul.f32 %v1200, %v1200
    %v1203 = vmul.f32 %v1201, %v1201
    %v1204 = vsel %vm136, %v1202, 0.0
    %1205 = vadd.xlane.f32.xlu0 %v1204
    %v1206 = vpop.xlane.xlu0 %1205
    %v1207 = vsel %vm136, %v1203, 0.0
    %1208 = vadd.xlane.f32.xlu0 %v1207
    %v1209 = vpop.xlane.xlu0 %1208
    %v1210 = vmul.f32 %v1206, %v143
    %v1211 = vmul.f32 %v1209, %v143
    %v1212 = vadd.f32 %v1210, 1e-12
    %v1213 = vadd.f32 %v1211, 1e-12
    %v1214 = vrsqrt.pop %v1212
    %v1215 = vrsqrt.pop %v1213
    %v1216 = vmul.f32 %v1200, %v1214
    %v1217 = vmul.f32 %v1201, %v1215
    %v1218 = vlaneseq
    %v1219 = vshrl.u32 %v1218, 7
    %v1220 = vsub.s32 0, %v1219
    %v1221 = vrot.slane %v1190, %v1220
    %v1222 = vmul.f32 %v1216, %v1221
    %v1223 = vmul.f32 %v1217, %v1221
    %v1224 = vlaneseq
    %v1225 = vshrl.u32 %v1224, 7
    %v1226 = vsub.s32 0, %v1225
    %v1227 = vrot.slane %v1191, %v1226
    %v1228 = vadd.f32 %v1222, %v1227
    %v1229 = vadd.f32 %v1223, %v1227
    %v1230 = vld [vmem:[#allocation2 + $0x90] sm:$0xff]
    %v1231 = vld [vmem:[#allocation2 + $0x98] sm:$0xff]
    %v1232 = vld [vmem:[#allocation2 + $0xa0] sm:$0xff]
    %v1233 = vld [vmem:[#allocation2 + $0xa8] sm:$0xff]
    %v1234 = vld [vmem:[#allocation2 + $0xf4] sm:$0x1]
    %v1235 = vlaneseq
    %v1236 = vshrl.u32 %v1235, 7
    %v1237 = vsub.s32 0, %v1236
    %v1238 = vrot.slane %v1234, %v1237
    %v1240 = vsel %vm136, %v1228, 0
    %v1243 = vsel %vm136, %v1229, 0
    %1245 = vmatprep.subr.mxu0 0.0
    %1246 = vmatpush1.msra.mxu0 0.0
    %1247 = vmatprep.subr.mxu0 0.0
    %1248 = vmatpush1.msra.mxu0 0.0
    %1249 = vmatprep.subr.mxu0 0.0
    %1250 = vmatpush1.msra.mxu0 0.0
    %1251 = vmatprep.subr.mxu0 0.0
    %1252 = vmatpush1.msra.mxu0 0.0
    %1253 = vmatprep.subr.mxu0 0.0
    %1254 = vmatpush1.msra.mxu0 0.0
    %1255 = vmatprep.subr.mxu0 0.0
    %1256 = vmatpush1.msra.mxu0 0.0
    %1257 = vmatprep.subr.mxu0 0.0
    %1258 = vmatpush1.msra.mxu0 0.0
    %1259 = vmatprep.subr.mxu0 0.0
    %1260 = vmatpush1.msra.mxu0 0.0
    %1261 = vmatprep.subr.mxu0 0.0
    %1262 = vmatpush1.msra.mxu0 0.0
    %1263 = vmatprep.subr.mxu0 0.0
    %1264 = vmatpush1.msra.mxu0 0.0
    %1265 = vmatprep.subr.mxu0 0.0
    %1266 = vmatpush1.msra.mxu0 0.0
    %1267 = vmatprep.subr.mxu0 0.0
    %1268 = vmatpush1.msra.mxu0 0.0
    %1269 = vmatprep.subr.mxu0 0.0
    %1270 = vmatpush1.msra.mxu0 %v1233
    %1271 = vmatprep.subr.mxu0 0.0
    %1272 = vmatpush1.msra.mxu0 %v1232
    %1273 = vmatprep.subr.mxu0 0.0
    %1274 = vmatpush1.msra.mxu0 %v1231
    %1275 = vmatprep.subr.mxu0 0.0
    %1276 = vmatpush1.msra.mxu0 %v1230
    %1277 = vmatprep.subr.mxu0 0.0
    %1278 = vmatpush2.msra.mxu0 0.0
    %1279 = vmatprep.subr.mxu0 0.0
    %1280 = vmatpush2.msra.mxu0 0.0
    %1281 = vmatprep.subr.mxu0 0.0
    %1282 = vmatpush2.msra.mxu0 0.0
    %1283 = vmatprep.subr.mxu0 0.0
    %1284 = vmatpush2.msra.mxu0 0.0
    %1285 = vmatprep.subr.mxu0 0.0
    %1286 = vmatpush2.msra.mxu0 0.0
    %1287 = vmatprep.subr.mxu0 0.0
    %1288 = vmatpush2.msra.mxu0 0.0
    %1289 = vmatprep.subr.mxu0 0.0
    %1290 = vmatpush2.msra.mxu0 0.0
    %1291 = vmatprep.subr.mxu0 0.0
    %1292 = vmatpush2.msra.mxu0 0.0
    %1293 = vmatprep.subr.mxu0 0.0
    %1294 = vmatpush2.msra.mxu0 0.0
    %1295 = vmatprep.subr.mxu0 0.0
    %1296 = vmatpush2.msra.mxu0 0.0
    %1297 = vmatprep.subr.mxu0 0.0
    %1298 = vmatpush2.msra.mxu0 0.0
    %1299 = vmatprep.subr.mxu0 0.0
    %1300 = vmatpush2.msra.mxu0 0.0
    %1301 = vmatprep.subr.mxu0 0.0
    %1302 = vmatpush2.msra.mxu0 0.0
    %1303 = vmatprep.subr.mxu0 0.0
    %1304 = vmatpush2.msra.mxu0 0.0
    %1305 = vmatprep.subr.mxu0 0.0
    %1306 = vmatpush2.msra.mxu0 0.0
    %1307 = vmatprep.subr.mxu0 0.0
    %1308 = vmatpush2.msra.mxu0 0.0
    %1309 = vmatprep.mubr.f32.mxu0 0.0
    %1310 = vmatmul.mubr.f32.gmra.mxu0 %v1240
    %v1311 = vpop.f32.mrf.mxu0
    %v1312 = vadd.f32 %v1238, %v1311
    %v1313 = vpop.f32.mrf.mxu0
    %1314 = vmatprep.mubr.f32.mxu0 0.0
    %1315 = vmatmul.mubr.f32.gmra.mxu0 %v1243
    %v1316 = vpop.f32.mrf.mxu0
    %v1317 = vadd.f32 %v1238, %v1316
    %v1318 = vpop.f32.mrf.mxu0
    %1319 = vdwg.mxu0
    %v1320 = vmul.f32 %v1312, %v1312
    %v1321 = vmul.f32 %v1317, %v1317
    %v1322 = vmul.f32 %v1312, %v1320
    %v1323 = vmul.f32 %v1317, %v1321
    %v1324 = vmul.f32 %v1322, 0.044715
    %v1325 = vmul.f32 %v1323, 0.044715
    %v1326 = vadd.f32 %v1312, %v1324
    %v1327 = vadd.f32 %v1317, %v1325
    %v1328 = vmul.f32 %v1326, 0.7978846
    %v1329 = vmul.f32 %v1327, 0.7978846
    %v1330 = vtanh.pop %v1328
    %v1331 = vtanh.pop %v1329
    %v1332 = vadd.f32 %v1330, 1.0
    %v1333 = vadd.f32 %v1331, 1.0
    %v1334 = vmul.f32 %v1332, 0.5
    %v1335 = vmul.f32 %v1333, 0.5
    %v1336 = vmul.f32 %v1312, %v1334
    %v1337 = vmul.f32 %v1317, %v1335
    %v1338 = vld [vmem:[#allocation2 + $0xb0] sm:$0xff]
    %v1339 = vld [vmem:[#allocation2 + $0xb8] sm:$0xff]
    %v1340 = vld [vmem:[#allocation2 + $0xc0] sm:$0xff]
    %v1341 = vld [vmem:[#allocation2 + $0xc8] sm:$0xff]
    %v1342 = vld [vmem:[#allocation2 + $0xd0] sm:$0xff]
    %v1343 = vld [vmem:[#allocation2 + $0xd8] sm:$0xff]
    %v1344 = vld [vmem:[#allocation2 + $0xe0] sm:$0xff]
    %v1345 = vld [vmem:[#allocation2 + $0xe8] sm:$0xff]
    %v1346 = vld [vmem:[#allocation2 + $0xf5] sm:$0x1]
    %v1347 = vlaneseq
    %v1348 = vshrl.u32 %v1347, 7
    %v1349 = vsub.s32 0, %v1348
    %v1350 = vrot.slane %v1346, %v1349
    %v1352 = vsel %vm52, %v1336, 0
    %v1355 = vsel %vm52, %v1337, 0
    %1357 = vmatprep.subr.mxu0 0.0
    %1358 = vmatpush1.msra.mxu0 0.0
    %1359 = vmatprep.subr.mxu0 0.0
    %1360 = vmatpush1.msra.mxu0 0.0
    %1361 = vmatprep.subr.mxu0 0.0
    %1362 = vmatpush1.msra.mxu0 0.0
    %1363 = vmatprep.subr.mxu0 0.0
    %1364 = vmatpush1.msra.mxu0 0.0
    %1365 = vmatprep.subr.mxu0 0.0
    %1366 = vmatpush1.msra.mxu0 0.0
    %1367 = vmatprep.subr.mxu0 0.0
    %1368 = vmatpush1.msra.mxu0 0.0
    %1369 = vmatprep.subr.mxu0 0.0
    %1370 = vmatpush1.msra.mxu0 0.0
    %1371 = vmatprep.subr.mxu0 0.0
    %1372 = vmatpush1.msra.mxu0 0.0
    %1373 = vmatprep.subr.mxu0 0.0
    %1374 = vmatpush1.msra.mxu0 %v1345
    %1375 = vmatprep.subr.mxu0 0.0
    %1376 = vmatpush1.msra.mxu0 %v1344
    %1377 = vmatprep.subr.mxu0 0.0
    %1378 = vmatpush1.msra.mxu0 %v1343
    %1379 = vmatprep.subr.mxu0 0.0
    %1380 = vmatpush1.msra.mxu0 %v1342
    %1381 = vmatprep.subr.mxu0 0.0
    %1382 = vmatpush1.msra.mxu0 %v1341
    %1383 = vmatprep.subr.mxu0 0.0
    %1384 = vmatpush1.msra.mxu0 %v1340
    %1385 = vmatprep.subr.mxu0 0.0
    %1386 = vmatpush1.msra.mxu0 %v1339
    %1387 = vmatprep.subr.mxu0 0.0
    %1388 = vmatpush1.msra.mxu0 %v1338
    %1389 = vmatprep.subr.mxu0 0.0
    %1390 = vmatpush2.msra.mxu0 0.0
    %1391 = vmatprep.subr.mxu0 0.0
    %1392 = vmatpush2.msra.mxu0 0.0
    %1393 = vmatprep.subr.mxu0 0.0
    %1394 = vmatpush2.msra.mxu0 0.0
    %1395 = vmatprep.subr.mxu0 0.0
    %1396 = vmatpush2.msra.mxu0 0.0
    %1397 = vmatprep.subr.mxu0 0.0
    %1398 = vmatpush2.msra.mxu0 0.0
    %1399 = vmatprep.subr.mxu0 0.0
    %1400 = vmatpush2.msra.mxu0 0.0
    %1401 = vmatprep.subr.mxu0 0.0
    %1402 = vmatpush2.msra.mxu0 0.0
    %1403 = vmatprep.subr.mxu0 0.0
    %1404 = vmatpush2.msra.mxu0 0.0
    %1405 = vmatprep.subr.mxu0 0.0
    %1406 = vmatpush2.msra.mxu0 0.0
    %1407 = vmatprep.subr.mxu0 0.0
    %1408 = vmatpush2.msra.mxu0 0.0
    %1409 = vmatprep.subr.mxu0 0.0
    %1410 = vmatpush2.msra.mxu0 0.0
    %1411 = vmatprep.subr.mxu0 0.0
    %1412 = vmatpush2.msra.mxu0 0.0
    %1413 = vmatprep.subr.mxu0 0.0
    %1414 = vmatpush2.msra.mxu0 0.0
    %1415 = vmatprep.subr.mxu0 0.0
    %1416 = vmatpush2.msra.mxu0 0.0
    %1417 = vmatprep.subr.mxu0 0.0
    %1418 = vmatpush2.msra.mxu0 0.0
    %1419 = vmatprep.subr.mxu0 0.0
    %1420 = vmatpush2.msra.mxu0 0.0
    %1421 = vmatprep.mubr.f32.mxu0 0.0
    %1422 = vmatmul.mubr.f32.gmra.mxu0 %v1352
    %v1423 = vpop.f32.mrf.mxu0
    %v1424 = vadd.f32 %v1350, %v1423
    %v1425 = vpop.f32.mrf.mxu0
    %1426 = vmatprep.mubr.f32.mxu0 0.0
    %1427 = vmatmul.mubr.f32.gmra.mxu0 %v1355
    %v1428 = vpop.f32.mrf.mxu0
    %v1429 = vadd.f32 %v1350, %v1428
    %v1430 = vpop.f32.mrf.mxu0
    %1431 = vdwg.mxu0
    %v1432 = vadd.f32 %v1424, %v1228
    %v1433 = vadd.f32 %v1429, %v1229
    %v1434 = vld [vmem:[#allocation2 + $0xf6] sm:$0x1]
    %v1435 = vld [vmem:[#allocation2 + $0xf7] sm:$0x1]
    %v1436 = vsel %vm136, %v1432, 0.0
    %1437 = vadd.xlane.f32.xlu0 %v1436
    %v1438 = vpop.xlane.xlu0 %1437
    %v1439 = vsel %vm136, %v1433, 0.0
    %1440 = vadd.xlane.f32.xlu0 %v1439
    %v1441 = vpop.xlane.xlu0 %1440
    %v1442 = vmul.f32 %v1438, %v143
    %v1443 = vmul.f32 %v1441, %v143
    %v1444 = vsub.f32 %v1432, %v1442
    %v1445 = vsub.f32 %v1433, %v1443
    %v1446 = vmul.f32 %v1444, %v1444
    %v1447 = vmul.f32 %v1445, %v1445
    %v1448 = vsel %vm136, %v1446, 0.0
    %1449 = vadd.xlane.f32.xlu0 %v1448
    %v1450 = vpop.xlane.xlu0 %1449
    %v1451 = vsel %vm136, %v1447, 0.0
    %1452 = vadd.xlane.f32.xlu0 %v1451
    %v1453 = vpop.xlane.xlu0 %1452
    %v1454 = vmul.f32 %v1450, %v143
    %v1455 = vmul.f32 %v1453, %v143
    %v1456 = vadd.f32 %v1454, 1e-12
    %v1457 = vadd.f32 %v1455, 1e-12
    %v1458 = vrsqrt.pop %v1456
    %v1459 = vrsqrt.pop %v1457
    %v1460 = vmul.f32 %v1444, %v1458
    %v1461 = vmul.f32 %v1445, %v1459
    %v1462 = vlaneseq
    %v1463 = vshrl.u32 %v1462, 7
    %v1464 = vsub.s32 0, %v1463
    %v1465 = vrot.slane %v1434, %v1464
    %v1466 = vmul.f32 %v1460, %v1465
    %v1467 = vmul.f32 %v1461, %v1465
    %v1468 = vlaneseq
    %v1469 = vshrl.u32 %v1468, 7
    %v1470 = vsub.s32 0, %v1469
    %v1471 = vrot.slane %v1435, %v1470
    %v1472 = vadd.f32 %v1466, %v1471
    %v1473 = vadd.f32 %v1467, %v1471
    %v1474 = vld [vmem:[#allocation2 + $0xf8] sm:$0xff]
    %v1475 = vld [vmem:[#allocation2 + $0x100] sm:$0xff]
    %v1476 = vld [vmem:[#allocation2 + $0x108] sm:$0xff]
    %v1477 = vld [vmem:[#allocation2 + $0x110] sm:$0xff]
    %v1478 = vld [vmem:[#allocation2 + $0x198] sm:$0x1]
    %v1479 = vlaneseq
    %v1480 = vshrl.u32 %v1479, 7
    %v1481 = vsub.s32 0, %v1480
    %v1482 = vrot.slane %v1478, %v1481
    %v1484 = vsel %vm136, %v1472, 0
    %v1487 = vsel %vm136, %v1473, 0
    %1489 = vmatprep.subr.mxu0 0.0
    %1490 = vmatpush1.msra.mxu0 0.0
    %1491 = vmatprep.subr.mxu0 0.0
    %1492 = vmatpush1.msra.mxu0 0.0
    %1493 = vmatprep.subr.mxu0 0.0
    %1494 = vmatpush1.msra.mxu0 0.0
    %1495 = vmatprep.subr.mxu0 0.0
    %1496 = vmatpush1.msra.mxu0 0.0
    %1497 = vmatprep.subr.mxu0 0.0
    %1498 = vmatpush1.msra.mxu0 0.0
    %1499 = vmatprep.subr.mxu0 0.0
    %1500 = vmatpush1.msra.mxu0 0.0
    %1501 = vmatprep.subr.mxu0 0.0
    %1502 = vmatpush1.msra.mxu0 0.0
    %1503 = vmatprep.subr.mxu0 0.0
    %1504 = vmatpush1.msra.mxu0 0.0
    %1505 = vmatprep.subr.mxu0 0.0
    %1506 = vmatpush1.msra.mxu0 0.0
    %1507 = vmatprep.subr.mxu0 0.0
    %1508 = vmatpush1.msra.mxu0 0.0
    %1509 = vmatprep.subr.mxu0 0.0
    %1510 = vmatpush1.msra.mxu0 0.0
    %1511 = vmatprep.subr.mxu0 0.0
    %1512 = vmatpush1.msra.mxu0 0.0
    %1513 = vmatprep.subr.mxu0 0.0
    %1514 = vmatpush1.msra.mxu0 %v1477
    %1515 = vmatprep.subr.mxu0 0.0
    %1516 = vmatpush1.msra.mxu0 %v1476
    %1517 = vmatprep.subr.mxu0 0.0
    %1518 = vmatpush1.msra.mxu0 %v1475
    %1519 = vmatprep.subr.mxu0 0.0
    %1520 = vmatpush1.msra.mxu0 %v1474
    %1521 = vmatprep.subr.mxu0 0.0
    %1522 = vmatpush2.msra.mxu0 0.0
    %1523 = vmatprep.subr.mxu0 0.0
    %1524 = vmatpush2.msra.mxu0 0.0
    %1525 = vmatprep.subr.mxu0 0.0
    %1526 = vmatpush2.msra.mxu0 0.0
    %1527 = vmatprep.subr.mxu0 0.0
    %1528 = vmatpush2.msra.mxu0 0.0
    %1529 = vmatprep.subr.mxu0 0.0
    %1530 = vmatpush2.msra.mxu0 0.0
    %1531 = vmatprep.subr.mxu0 0.0
    %1532 = vmatpush2.msra.mxu0 0.0
    %1533 = vmatprep.subr.mxu0 0.0
    %1534 = vmatpush2.msra.mxu0 0.0
    %1535 = vmatprep.subr.mxu0 0.0
    %1536 = vmatpush2.msra.mxu0 0.0
    %1537 = vmatprep.subr.mxu0 0.0
    %1538 = vmatpush2.msra.mxu0 0.0
    %1539 = vmatprep.subr.mxu0 0.0
    %1540 = vmatpush2.msra.mxu0 0.0
    %1541 = vmatprep.subr.mxu0 0.0
    %1542 = vmatpush2.msra.mxu0 0.0
    %1543 = vmatprep.subr.mxu0 0.0
    %1544 = vmatpush2.msra.mxu0 0.0
    %1545 = vmatprep.subr.mxu0 0.0
    %1546 = vmatpush2.msra.mxu0 0.0
    %1547 = vmatprep.subr.mxu0 0.0
    %1548 = vmatpush2.msra.mxu0 0.0
    %1549 = vmatprep.subr.mxu0 0.0
    %1550 = vmatpush2.msra.mxu0 0.0
    %1551 = vmatprep.subr.mxu0 0.0
    %1552 = vmatpush2.msra.mxu0 0.0
    %1553 = vmatprep.mubr.f32.mxu0 0.0
    %1554 = vmatmul.mubr.f32.gmra.mxu0 %v1484
    %v1555 = vpop.f32.mrf.mxu0
    %v1556 = vadd.f32 %v1482, %v1555
    %v1557 = vpop.f32.mrf.mxu0
    %1558 = vmatprep.mubr.f32.mxu0 0.0
    %1559 = vmatmul.mubr.f32.gmra.mxu0 %v1487
    %v1560 = vpop.f32.mrf.mxu0
    %v1561 = vadd.f32 %v1482, %v1560
    %v1562 = vpop.f32.mrf.mxu0
    %1563 = vdwg.mxu0
    %v1564 = vmul.f32 %v1556, %v286
    %v1565 = vmul.f32 %v1561, %v286
    %1568 = vrot.lane.b32.xlu0 %v1556, 96
    %v1569 = vpop.permute.xlu0 %1568
    %1570 = vrot.lane.b32.xlu0 %v1561, 96
    %v1571 = vpop.permute.xlu0 %1570
    %v1573 = vsel %vm136, %v1564, 0
    %v1576 = vsel %vm136, %v1565, 0
    %v1578 = vsel %vm136, %v1569, 0
    %v1580 = vsel %vm136, %v1571, 0
    %1582 = vmatprep.subr.mxu0 0.0
    %1583 = vmatpush1.xpose.msra.mxu0 0.0
    %1584 = vmatprep.subr.mxu0 0.0
    %1585 = vmatpush1.xpose.msra.mxu0 0.0
    %1586 = vmatprep.subr.mxu0 0.0
    %1587 = vmatpush1.xpose.msra.mxu0 0.0
    %1588 = vmatprep.subr.mxu0 0.0
    %1589 = vmatpush1.xpose.msra.mxu0 0.0
    %1590 = vmatprep.subr.mxu0 0.0
    %1591 = vmatpush1.xpose.msra.mxu0 0.0
    %1592 = vmatprep.subr.mxu0 0.0
    %1593 = vmatpush1.xpose.msra.mxu0 0.0
    %1594 = vmatprep.subr.mxu0 0.0
    %1595 = vmatpush1.xpose.msra.mxu0 0.0
    %1596 = vmatprep.subr.mxu0 0.0
    %1597 = vmatpush1.xpose.msra.mxu0 0.0
    %1598 = vmatprep.subr.mxu0 0.0
    %1599 = vmatpush1.xpose.msra.mxu0 0.0
    %1600 = vmatprep.subr.mxu0 0.0
    %1601 = vmatpush1.xpose.msra.mxu0 0.0
    %1602 = vmatprep.subr.mxu0 0.0
    %1603 = vmatpush1.xpose.msra.mxu0 0.0
    %1604 = vmatprep.subr.mxu0 0.0
    %1605 = vmatpush1.xpose.msra.mxu0 0.0
    %1606 = vmatprep.subr.mxu0 0.0
    %1607 = vmatpush1.xpose.msra.mxu0 0.0
    %1608 = vmatprep.subr.mxu0 0.0
    %1609 = vmatpush1.xpose.msra.mxu0 0.0
    %1610 = vmatprep.subr.mxu0 0.0
    %1611 = vmatpush1.xpose.msra.mxu0 %v1580
    %1612 = vmatprep.subr.mxu0 0.0
    %1613 = vmatpush1.xpose.msra.mxu0 %v1578
    %1614 = vmatprep.subr.mxu0 0.0
    %1615 = vmatpush2.xpose.msra.mxu0 0.0
    %1616 = vmatprep.subr.mxu0 0.0
    %1617 = vmatpush2.xpose.msra.mxu0 0.0
    %1618 = vmatprep.subr.mxu0 0.0
    %1619 = vmatpush2.xpose.msra.mxu0 0.0
    %1620 = vmatprep.subr.mxu0 0.0
    %1621 = vmatpush2.xpose.msra.mxu0 0.0
    %1622 = vmatprep.subr.mxu0 0.0
    %1623 = vmatpush2.xpose.msra.mxu0 0.0
    %1624 = vmatprep.subr.mxu0 0.0
    %1625 = vmatpush2.xpose.msra.mxu0 0.0
    %1626 = vmatprep.subr.mxu0 0.0
    %1627 = vmatpush2.xpose.msra.mxu0 0.0
    %1628 = vmatprep.subr.mxu0 0.0
    %1629 = vmatpush2.xpose.msra.mxu0 0.0
    %1630 = vmatprep.subr.mxu0 0.0
    %1631 = vmatpush2.xpose.msra.mxu0 0.0
    %1632 = vmatprep.subr.mxu0 0.0
    %1633 = vmatpush2.xpose.msra.mxu0 0.0
    %1634 = vmatprep.subr.mxu0 0.0
    %1635 = vmatpush2.xpose.msra.mxu0 0.0
    %1636 = vmatprep.subr.mxu0 0.0
    %1637 = vmatpush2.xpose.msra.mxu0 0.0
    %1638 = vmatprep.subr.mxu0 0.0
    %1639 = vmatpush2.xpose.msra.mxu0 0.0
    %1640 = vmatprep.subr.mxu0 0.0
    %1641 = vmatpush2.xpose.msra.mxu0 0.0
    %1642 = vmatprep.subr.mxu0 0.0
    %1643 = vmatpush2.xpose.msra.mxu0 0.0
    %1644 = vmatprep.subr.mxu0 0.0
    %1645 = vmatpush2.xpose.msra.mxu0 0.0
    %1646 = vmatprep.mubr.f32.mxu0 0.0
    %1647 = vmatmul.mubr.f32.gmra.mxu0 %v1573
    %v1648 = vpop.f32.mrf.mxu0
    %v1649 = vadd.f32 0.0, %v1648
    %v1650 = vpop.f32.mrf.mxu0
    %1651 = vmatprep.mubr.f32.mxu0 0.0
    %1652 = vmatmul.mubr.f32.gmra.mxu0 %v1576
    %v1653 = vpop.f32.mrf.mxu0
    %v1654 = vadd.f32 0.0, %v1653
    %v1655 = vpop.f32.mrf.mxu0
    %1656 = vdwg.mxu0
    %v1657 = vmul.f32 %v1649, 0.35355338
    %v1658 = vmul.f32 %v1654, 0.35355338
    %v1659 = vadd.f32 %v1657, %v190
    %v1660 = vadd.f32 %v1658, %v191
    %v1661 = vmul.f32 %v1659, 1.442695
    %v1662 = vpow.pop %v1661
    %v1663 = vmul.f32 %v1660, 1.442695
    %v1664 = vpow.pop %v1663
    %v1665 = vsel %vm388, %v1662, 0.0
    %1666 = vadd.xlane.f32.xlu0 %v1665
    %v1667 = vpop.xlane.xlu0 %1666
    %v1668 = vsel %vm388, %v1664, 0.0
    %1669 = vadd.xlane.f32.xlu0 %v1668
    %v1670 = vpop.xlane.xlu0 %1669
    %v1671 = vrcp.pop %v1667
    %v1672 = vrcp.pop %v1670
    %v1673 = vmul.f32 %v1662, %v1671
    %v1674 = vmul.f32 %v1664, %v1672
    %v1675 = vmul.f32 %v1556, %v401
    %v1676 = vmul.f32 %v1561, %v401
    %v1677 = vmul.f32 %v1556, %v408
    %v1678 = vmul.f32 %v1561, %v408
    %v1680 = vsel %vm136, %v1677, 0
    %v1683 = vsel %vm136, %v1678, 0
    %1685 = vmatprep.subr.mxu0 0.0
    %1686 = vmatpush1.xpose.msra.mxu0 0.0
    %1687 = vmatprep.subr.mxu0 0.0
    %1688 = vmatpush1.xpose.msra.mxu0 0.0
    %1689 = vmatprep.subr.mxu0 0.0
    %1690 = vmatpush1.xpose.msra.mxu0 0.0
    %1691 = vmatprep.subr.mxu0 0.0
    %1692 = vmatpush1.xpose.msra.mxu0 0.0
    %1693 = vmatprep.subr.mxu0 0.0
    %1694 = vmatpush1.xpose.msra.mxu0 0.0
    %1695 = vmatprep.subr.mxu0 0.0
    %1696 = vmatpush1.xpose.msra.mxu0 0.0
    %1697 = vmatprep.subr.mxu0 0.0
    %1698 = vmatpush1.xpose.msra.mxu0 0.0
    %1699 = vmatprep.subr.mxu0 0.0
    %1700 = vmatpush1.xpose.msra.mxu0 0.0
    %1701 = vmatprep.subr.mxu0 0.0
    %1702 = vmatpush1.xpose.msra.mxu0 0.0
    %1703 = vmatprep.subr.mxu0 0.0
    %1704 = vmatpush1.xpose.msra.mxu0 0.0
    %1705 = vmatprep.subr.mxu0 0.0
    %1706 = vmatpush1.xpose.msra.mxu0 0.0
    %1707 = vmatprep.subr.mxu0 0.0
    %1708 = vmatpush1.xpose.msra.mxu0 0.0
    %1709 = vmatprep.subr.mxu0 0.0
    %1710 = vmatpush1.xpose.msra.mxu0 0.0
    %1711 = vmatprep.subr.mxu0 0.0
    %1712 = vmatpush1.xpose.msra.mxu0 0.0
    %1713 = vmatprep.subr.mxu0 0.0
    %1714 = vmatpush1.xpose.msra.mxu0 %v1580
    %1715 = vmatprep.subr.mxu0 0.0
    %1716 = vmatpush1.xpose.msra.mxu0 %v1578
    %1717 = vmatprep.subr.mxu0 0.0
    %1718 = vmatpush2.xpose.msra.mxu0 0.0
    %1719 = vmatprep.subr.mxu0 0.0
    %1720 = vmatpush2.xpose.msra.mxu0 0.0
    %1721 = vmatprep.subr.mxu0 0.0
    %1722 = vmatpush2.xpose.msra.mxu0 0.0
    %1723 = vmatprep.subr.mxu0 0.0
    %1724 = vmatpush2.xpose.msra.mxu0 0.0
    %1725 = vmatprep.subr.mxu0 0.0
    %1726 = vmatpush2.xpose.msra.mxu0 0.0
    %1727 = vmatprep.subr.mxu0 0.0
    %1728 = vmatpush2.xpose.msra.mxu0 0.0
    %1729 = vmatprep.subr.mxu0 0.0
    %1730 = vmatpush2.xpose.msra.mxu0 0.0
    %1731 = vmatprep.subr.mxu0 0.0
    %1732 = vmatpush2.xpose.msra.mxu0 0.0
    %1733 = vmatprep.subr.mxu0 0.0
    %1734 = vmatpush2.xpose.msra.mxu0 0.0
    %1735 = vmatprep.subr.mxu0 0.0
    %1736 = vmatpush2.xpose.msra.mxu0 0.0
    %1737 = vmatprep.subr.mxu0 0.0
    %1738 = vmatpush2.xpose.msra.mxu0 0.0
    %1739 = vmatprep.subr.mxu0 0.0
    %1740 = vmatpush2.xpose.msra.mxu0 0.0
    %1741 = vmatprep.subr.mxu0 0.0
    %1742 = vmatpush2.xpose.msra.mxu0 0.0
    %1743 = vmatprep.subr.mxu0 0.0
    %1744 = vmatpush2.xpose.msra.mxu0 0.0
    %1745 = vmatprep.subr.mxu0 0.0
    %1746 = vmatpush2.xpose.msra.mxu0 0.0
    %1747 = vmatprep.subr.mxu0 0.0
    %1748 = vmatpush2.xpose.msra.mxu0 0.0
    %1749 = vmatprep.mubr.f32.mxu0 0.0
    %1750 = vmatmul.mubr.f32.gmra.mxu0 %v1680
    %v1751 = vpop.f32.mrf.mxu0
    %v1752 = vadd.f32 0.0, %v1751
    %v1753 = vpop.f32.mrf.mxu0
    %1754 = vmatprep.mubr.f32.mxu0 0.0
    %1755 = vmatmul.mubr.f32.gmra.mxu0 %v1683
    %v1756 = vpop.f32.mrf.mxu0
    %v1757 = vadd.f32 0.0, %v1756
    %v1758 = vpop.f32.mrf.mxu0
    %1759 = vdwg.mxu0
    %v1760 = vmul.f32 %v1752, 0.35355338
    %v1761 = vmul.f32 %v1757, 0.35355338
    %v1762 = vadd.f32 %v1760, %v190
    %v1763 = vadd.f32 %v1761, %v191
    %v1764 = vmul.f32 %v1762, 1.442695
    %v1765 = vpow.pop %v1764
    %v1766 = vmul.f32 %v1763, 1.442695
    %v1767 = vpow.pop %v1766
    %v1768 = vsel %vm388, %v1765, 0.0
    %1769 = vadd.xlane.f32.xlu0 %v1768
    %v1770 = vpop.xlane.xlu0 %1769
    %v1771 = vsel %vm388, %v1767, 0.0
    %1772 = vadd.xlane.f32.xlu0 %v1771
    %v1773 = vpop.xlane.xlu0 %1772
    %v1774 = vrcp.pop %v1770
    %v1775 = vrcp.pop %v1773
    %v1776 = vmul.f32 %v1765, %v1774
    %v1777 = vmul.f32 %v1767, %v1775
    %v1778 = vmul.f32 %v1556, %v512
    %v1779 = vmul.f32 %v1561, %v512
    %1782 = vrot.lane.b32.xlu0 %v1778, 64
    %v1783 = vpop.permute.xlu0 %1782
    %1784 = vrot.lane.b32.xlu0 %v1779, 64
    %v1785 = vpop.permute.xlu0 %1784
    %v1789 = vsel %vm388, %v1776, 0
    %v1792 = vsel %vm388, %v1777, 0
    %1794 = vmatprep.subr.mxu0 0.0
    %1795 = vmatpush1.msra.mxu0 0.0
    %1796 = vmatprep.subr.mxu0 0.0
    %1797 = vmatpush1.msra.mxu0 0.0
    %1798 = vmatprep.subr.mxu0 0.0
    %1799 = vmatpush1.msra.mxu0 0.0
    %1800 = vmatprep.subr.mxu0 0.0
    %1801 = vmatpush1.msra.mxu0 0.0
    %1802 = vmatprep.subr.mxu0 0.0
    %1803 = vmatpush1.msra.mxu0 0.0
    %1804 = vmatprep.subr.mxu0 0.0
    %1805 = vmatpush1.msra.mxu0 0.0
    %1806 = vmatprep.subr.mxu0 0.0
    %1807 = vmatpush1.msra.mxu0 0.0
    %1808 = vmatprep.subr.mxu0 0.0
    %1809 = vmatpush1.msra.mxu0 0.0
    %1810 = vmatprep.subr.mxu0 0.0
    %1811 = vmatpush1.msra.mxu0 0.0
    %1812 = vmatprep.subr.mxu0 0.0
    %1813 = vmatpush1.msra.mxu0 0.0
    %1814 = vmatprep.subr.mxu0 0.0
    %1815 = vmatpush1.msra.mxu0 0.0
    %1816 = vmatprep.subr.mxu0 0.0
    %1817 = vmatpush1.msra.mxu0 0.0
    %1818 = vmatprep.subr.mxu0 0.0
    %1819 = vmatpush1.msra.mxu0 0.0
    %1820 = vmatprep.subr.mxu0 0.0
    %1821 = vmatpush1.msra.mxu0 0.0
    %1822 = vmatprep.subr.mxu0 0.0
    %1823 = vmatpush1.msra.mxu0 %v1785
    %1824 = vmatprep.subr.mxu0 0.0
    %1825 = vmatpush1.msra.mxu0 %v1783
    %1826 = vmatprep.subr.mxu0 0.0
    %1827 = vmatpush2.msra.mxu0 0.0
    %1828 = vmatprep.subr.mxu0 0.0
    %1829 = vmatpush2.msra.mxu0 0.0
    %1830 = vmatprep.subr.mxu0 0.0
    %1831 = vmatpush2.msra.mxu0 0.0
    %1832 = vmatprep.subr.mxu0 0.0
    %1833 = vmatpush2.msra.mxu0 0.0
    %1834 = vmatprep.subr.mxu0 0.0
    %1835 = vmatpush2.msra.mxu0 0.0
    %1836 = vmatprep.subr.mxu0 0.0
    %1837 = vmatpush2.msra.mxu0 0.0
    %1838 = vmatprep.subr.mxu0 0.0
    %1839 = vmatpush2.msra.mxu0 0.0
    %1840 = vmatprep.subr.mxu0 0.0
    %1841 = vmatpush2.msra.mxu0 0.0
    %1842 = vmatprep.subr.mxu0 0.0
    %1843 = vmatpush2.msra.mxu0 0.0
    %1844 = vmatprep.subr.mxu0 0.0
    %1845 = vmatpush2.msra.mxu0 0.0
    %1846 = vmatprep.subr.mxu0 0.0
    %1847 = vmatpush2.msra.mxu0 0.0
    %1848 = vmatprep.subr.mxu0 0.0
    %1849 = vmatpush2.msra.mxu0 0.0
    %1850 = vmatprep.subr.mxu0 0.0
    %1851 = vmatpush2.msra.mxu0 0.0
    %1852 = vmatprep.subr.mxu0 0.0
    %1853 = vmatpush2.msra.mxu0 0.0
    %1854 = vmatprep.subr.mxu0 0.0
    %1855 = vmatpush2.msra.mxu0 0.0
    %1856 = vmatprep.subr.mxu0 0.0
    %1857 = vmatpush2.msra.mxu0 0.0
    %1858 = vmatprep.mubr.f32.mxu0 0.0
    %1859 = vmatmul.mubr.f32.gmra.mxu0 %v1789
    %v1860 = vpop.f32.mrf.mxu0
    %v1861 = vadd.f32 0.0, %v1860
    %v1862 = vpop.f32.mrf.mxu0
    %1863 = vmatprep.mubr.f32.mxu0 0.0
    %1864 = vmatmul.mubr.f32.gmra.mxu0 %v1792
    %v1865 = vpop.f32.mrf.mxu0
    %v1866 = vadd.f32 0.0, %v1865
    %v1867 = vpop.f32.mrf.mxu0
    %1868 = vdwg.mxu0
    %1871 = vrot.lane.b32.xlu0 %v1675, 64
    %v1872 = vpop.permute.xlu0 %1871
    %1873 = vrot.lane.b32.xlu0 %v1676, 64
    %v1874 = vpop.permute.xlu0 %1873
    %v1878 = vsel %vm388, %v1673, 0
    %v1881 = vsel %vm388, %v1674, 0
    %1883 = vmatprep.subr.mxu0 0.0
    %1884 = vmatpush1.msra.mxu0 0.0
    %1885 = vmatprep.subr.mxu0 0.0
    %1886 = vmatpush1.msra.mxu0 0.0
    %1887 = vmatprep.subr.mxu0 0.0
    %1888 = vmatpush1.msra.mxu0 0.0
    %1889 = vmatprep.subr.mxu0 0.0
    %1890 = vmatpush1.msra.mxu0 0.0
    %1891 = vmatprep.subr.mxu0 0.0
    %1892 = vmatpush1.msra.mxu0 0.0
    %1893 = vmatprep.subr.mxu0 0.0
    %1894 = vmatpush1.msra.mxu0 0.0
    %1895 = vmatprep.subr.mxu0 0.0
    %1896 = vmatpush1.msra.mxu0 0.0
    %1897 = vmatprep.subr.mxu0 0.0
    %1898 = vmatpush1.msra.mxu0 0.0
    %1899 = vmatprep.subr.mxu0 0.0
    %1900 = vmatpush1.msra.mxu0 0.0
    %1901 = vmatprep.subr.mxu0 0.0
    %1902 = vmatpush1.msra.mxu0 0.0
    %1903 = vmatprep.subr.mxu0 0.0
    %1904 = vmatpush1.msra.mxu0 0.0
    %1905 = vmatprep.subr.mxu0 0.0
    %1906 = vmatpush1.msra.mxu0 0.0
    %1907 = vmatprep.subr.mxu0 0.0
    %1908 = vmatpush1.msra.mxu0 0.0
    %1909 = vmatprep.subr.mxu0 0.0
    %1910 = vmatpush1.msra.mxu0 0.0
    %1911 = vmatprep.subr.mxu0 0.0
    %1912 = vmatpush1.msra.mxu0 %v1874
    %1913 = vmatprep.subr.mxu0 0.0
    %1914 = vmatpush1.msra.mxu0 %v1872
    %1915 = vmatprep.subr.mxu0 0.0
    %1916 = vmatpush2.msra.mxu0 0.0
    %1917 = vmatprep.subr.mxu0 0.0
    %1918 = vmatpush2.msra.mxu0 0.0
    %1919 = vmatprep.subr.mxu0 0.0
    %1920 = vmatpush2.msra.mxu0 0.0
    %1921 = vmatprep.subr.mxu0 0.0
    %1922 = vmatpush2.msra.mxu0 0.0
    %1923 = vmatprep.subr.mxu0 0.0
    %1924 = vmatpush2.msra.mxu0 0.0
    %1925 = vmatprep.subr.mxu0 0.0
    %1926 = vmatpush2.msra.mxu0 0.0
    %1927 = vmatprep.subr.mxu0 0.0
    %1928 = vmatpush2.msra.mxu0 0.0
    %1929 = vmatprep.subr.mxu0 0.0
    %1930 = vmatpush2.msra.mxu0 0.0
    %1931 = vmatprep.subr.mxu0 0.0
    %1932 = vmatpush2.msra.mxu0 0.0
    %1933 = vmatprep.subr.mxu0 0.0
    %1934 = vmatpush2.msra.mxu0 0.0
    %1935 = vmatprep.subr.mxu0 0.0
    %1936 = vmatpush2.msra.mxu0 0.0
    %1937 = vmatprep.subr.mxu0 0.0
    %1938 = vmatpush2.msra.mxu0 0.0
    %1939 = vmatprep.subr.mxu0 0.0
    %1940 = vmatpush2.msra.mxu0 0.0
    %1941 = vmatprep.subr.mxu0 0.0
    %1942 = vmatpush2.msra.mxu0 0.0
    %1943 = vmatprep.subr.mxu0 0.0
    %1944 = vmatpush2.msra.mxu0 0.0
    %1945 = vmatprep.subr.mxu0 0.0
    %1946 = vmatpush2.msra.mxu0 0.0
    %1947 = vmatprep.mubr.f32.mxu0 0.0
    %1948 = vmatmul.mubr.f32.gmra.mxu0 %v1878
    %v1949 = vpop.f32.mrf.mxu0
    %v1950 = vadd.f32 %v1861, %v1949
    %v1951 = vpop.f32.mrf.mxu0
    %1952 = vmatprep.mubr.f32.mxu0 0.0
    %1953 = vmatmul.mubr.f32.gmra.mxu0 %v1881
    %v1954 = vpop.f32.mrf.mxu0
    %v1955 = vadd.f32 %v1866, %v1954
    %v1956 = vpop.f32.mrf.mxu0
    %1957 = vdwg.mxu0
    %v1958 = vmul.f32 %v1556, %v697
    %v1959 = vmul.f32 %v1561, %v697
    %v1961 = vsel %vm136, %v1958, 0
    %v1964 = vsel %vm136, %v1959, 0
    %1966 = vmatprep.subr.mxu0 0.0
    %1967 = vmatpush1.xpose.msra.mxu0 0.0
    %1968 = vmatprep.subr.mxu0 0.0
    %1969 = vmatpush1.xpose.msra.mxu0 0.0
    %1970 = vmatprep.subr.mxu0 0.0
    %1971 = vmatpush1.xpose.msra.mxu0 0.0
    %1972 = vmatprep.subr.mxu0 0.0
    %1973 = vmatpush1.xpose.msra.mxu0 0.0
    %1974 = vmatprep.subr.mxu0 0.0
    %1975 = vmatpush1.xpose.msra.mxu0 0.0
    %1976 = vmatprep.subr.mxu0 0.0
    %1977 = vmatpush1.xpose.msra.mxu0 0.0
    %1978 = vmatprep.subr.mxu0 0.0
    %1979 = vmatpush1.xpose.msra.mxu0 0.0
    %1980 = vmatprep.subr.mxu0 0.0
    %1981 = vmatpush1.xpose.msra.mxu0 0.0
    %1982 = vmatprep.subr.mxu0 0.0
    %1983 = vmatpush1.xpose.msra.mxu0 0.0
    %1984 = vmatprep.subr.mxu0 0.0
    %1985 = vmatpush1.xpose.msra.mxu0 0.0
    %1986 = vmatprep.subr.mxu0 0.0
    %1987 = vmatpush1.xpose.msra.mxu0 0.0
    %1988 = vmatprep.subr.mxu0 0.0
    %1989 = vmatpush1.xpose.msra.mxu0 0.0
    %1990 = vmatprep.subr.mxu0 0.0
    %1991 = vmatpush1.xpose.msra.mxu0 0.0
    %1992 = vmatprep.subr.mxu0 0.0
    %1993 = vmatpush1.xpose.msra.mxu0 0.0
    %1994 = vmatprep.subr.mxu0 0.0
    %1995 = vmatpush1.xpose.msra.mxu0 %v1580
    %1996 = vmatprep.subr.mxu0 0.0
    %1997 = vmatpush1.xpose.msra.mxu0 %v1578
    %1998 = vmatprep.subr.mxu0 0.0
    %1999 = vmatpush2.xpose.msra.mxu0 0.0
    %2000 = vmatprep.subr.mxu0 0.0
    %2001 = vmatpush2.xpose.msra.mxu0 0.0
    %2002 = vmatprep.subr.mxu0 0.0
    %2003 = vmatpush2.xpose.msra.mxu0 0.0
    %2004 = vmatprep.subr.mxu0 0.0
    %2005 = vmatpush2.xpose.msra.mxu0 0.0
    %2006 = vmatprep.subr.mxu0 0.0
    %2007 = vmatpush2.xpose.msra.mxu0 0.0
    %2008 = vmatprep.subr.mxu0 0.0
    %2009 = vmatpush2.xpose.msra.mxu0 0.0
    %2010 = vmatprep.subr.mxu0 0.0
    %2011 = vmatpush2.xpose.msra.mxu0 0.0
    %2012 = vmatprep.subr.mxu0 0.0
    %2013 = vmatpush2.xpose.msra.mxu0 0.0
    %2014 = vmatprep.subr.mxu0 0.0
    %2015 = vmatpush2.xpose.msra.mxu0 0.0
    %2016 = vmatprep.subr.mxu0 0.0
    %2017 = vmatpush2.xpose.msra.mxu0 0.0
    %2018 = vmatprep.subr.mxu0 0.0
    %2019 = vmatpush2.xpose.msra.mxu0 0.0
    %2020 = vmatprep.subr.mxu0 0.0
    %2021 = vmatpush2.xpose.msra.mxu0 0.0
    %2022 = vmatprep.subr.mxu0 0.0
    %2023 = vmatpush2.xpose.msra.mxu0 0.0
    %2024 = vmatprep.subr.mxu0 0.0
    %2025 = vmatpush2.xpose.msra.mxu0 0.0
    %2026 = vmatprep.subr.mxu0 0.0
    %2027 = vmatpush2.xpose.msra.mxu0 0.0
    %2028 = vmatprep.subr.mxu0 0.0
    %2029 = vmatpush2.xpose.msra.mxu0 0.0
    %2030 = vmatprep.mubr.f32.mxu0 0.0
    %2031 = vmatmul.mubr.f32.gmra.mxu0 %v1961
    %v2032 = vpop.f32.mrf.mxu0
    %v2033 = vadd.f32 0.0, %v2032
    %v2034 = vpop.f32.mrf.mxu0
    %2035 = vmatprep.mubr.f32.mxu0 0.0
    %2036 = vmatmul.mubr.f32.gmra.mxu0 %v1964
    %v2037 = vpop.f32.mrf.mxu0
    %v2038 = vadd.f32 0.0, %v2037
    %v2039 = vpop.f32.mrf.mxu0
    %2040 = vdwg.mxu0
    %v2041 = vmul.f32 %v2033, 0.35355338
    %v2042 = vmul.f32 %v2038, 0.35355338
    %v2043 = vadd.f32 %v2041, %v190
    %v2044 = vadd.f32 %v2042, %v191
    %v2045 = vmul.f32 %v2043, 1.442695
    %v2046 = vpow.pop %v2045
    %v2047 = vmul.f32 %v2044, 1.442695
    %v2048 = vpow.pop %v2047
    %v2049 = vsel %vm388, %v2046, 0.0
    %2050 = vadd.xlane.f32.xlu0 %v2049
    %v2051 = vpop.xlane.xlu0 %2050
    %v2052 = vsel %vm388, %v2048, 0.0
    %2053 = vadd.xlane.f32.xlu0 %v2052
    %v2054 = vpop.xlane.xlu0 %2053
    %v2055 = vrcp.pop %v2051
    %v2056 = vrcp.pop %v2054
    %v2057 = vmul.f32 %v2046, %v2055
    %v2058 = vmul.f32 %v2048, %v2056
    %v2059 = vmul.f32 %v1556, %v801
    %v2060 = vmul.f32 %v1561, %v801
    %2063 = vrot.lane.b32.xlu0 %v2059, 64
    %v2064 = vpop.permute.xlu0 %2063
    %2065 = vrot.lane.b32.xlu0 %v2060, 64
    %v2066 = vpop.permute.xlu0 %2065
    %v2070 = vsel %vm388, %v2057, 0
    %v2073 = vsel %vm388, %v2058, 0
    %2075 = vmatprep.subr.mxu0 0.0
    %2076 = vmatpush1.msra.mxu0 0.0
    %2077 = vmatprep.subr.mxu0 0.0
    %2078 = vmatpush1.msra.mxu0 0.0
    %2079 = vmatprep.subr.mxu0 0.0
    %2080 = vmatpush1.msra.mxu0 0.0
    %2081 = vmatprep.subr.mxu0 0.0
    %2082 = vmatpush1.msra.mxu0 0.0
    %2083 = vmatprep.subr.mxu0 0.0
    %2084 = vmatpush1.msra.mxu0 0.0
    %2085 = vmatprep.subr.mxu0 0.0
    %2086 = vmatpush1.msra.mxu0 0.0
    %2087 = vmatprep.subr.mxu0 0.0
    %2088 = vmatpush1.msra.mxu0 0.0
    %2089 = vmatprep.subr.mxu0 0.0
    %2090 = vmatpush1.msra.mxu0 0.0
    %2091 = vmatprep.subr.mxu0 0.0
    %2092 = vmatpush1.msra.mxu0 0.0
    %2093 = vmatprep.subr.mxu0 0.0
    %2094 = vmatpush1.msra.mxu0 0.0
    %2095 = vmatprep.subr.mxu0 0.0
    %2096 = vmatpush1.msra.mxu0 0.0
    %2097 = vmatprep.subr.mxu0 0.0
    %2098 = vmatpush1.msra.mxu0 0.0
    %2099 = vmatprep.subr.mxu0 0.0
    %2100 = vmatpush1.msra.mxu0 0.0
    %2101 = vmatprep.subr.mxu0 0.0
    %2102 = vmatpush1.msra.mxu0 0.0
    %2103 = vmatprep.subr.mxu0 0.0
    %2104 = vmatpush1.msra.mxu0 %v2066
    %2105 = vmatprep.subr.mxu0 0.0
    %2106 = vmatpush1.msra.mxu0 %v2064
    %2107 = vmatprep.subr.mxu0 0.0
    %2108 = vmatpush2.msra.mxu0 0.0
    %2109 = vmatprep.subr.mxu0 0.0
    %2110 = vmatpush2.msra.mxu0 0.0
    %2111 = vmatprep.subr.mxu0 0.0
    %2112 = vmatpush2.msra.mxu0 0.0
    %2113 = vmatprep.subr.mxu0 0.0
    %2114 = vmatpush2.msra.mxu0 0.0
    %2115 = vmatprep.subr.mxu0 0.0
    %2116 = vmatpush2.msra.mxu0 0.0
    %2117 = vmatprep.subr.mxu0 0.0
    %2118 = vmatpush2.msra.mxu0 0.0
    %2119 = vmatprep.subr.mxu0 0.0
    %2120 = vmatpush2.msra.mxu0 0.0
    %2121 = vmatprep.subr.mxu0 0.0
    %2122 = vmatpush2.msra.mxu0 0.0
    %2123 = vmatprep.subr.mxu0 0.0
    %2124 = vmatpush2.msra.mxu0 0.0
    %2125 = vmatprep.subr.mxu0 0.0
    %2126 = vmatpush2.msra.mxu0 0.0
    %2127 = vmatprep.subr.mxu0 0.0
    %2128 = vmatpush2.msra.mxu0 0.0
    %2129 = vmatprep.subr.mxu0 0.0
    %2130 = vmatpush2.msra.mxu0 0.0
    %2131 = vmatprep.subr.mxu0 0.0
    %2132 = vmatpush2.msra.mxu0 0.0
    %2133 = vmatprep.subr.mxu0 0.0
    %2134 = vmatpush2.msra.mxu0 0.0
    %2135 = vmatprep.subr.mxu0 0.0
    %2136 = vmatpush2.msra.mxu0 0.0
    %2137 = vmatprep.subr.mxu0 0.0
    %2138 = vmatpush2.msra.mxu0 0.0
    %2139 = vmatprep.mubr.f32.mxu0 0.0
    %2140 = vmatmul.mubr.f32.gmra.mxu0 %v2070
    %v2141 = vpop.f32.mrf.mxu0
    %v2142 = vadd.f32 0.0, %v2141
    %v2143 = vpop.f32.mrf.mxu0
    %2144 = vmatprep.mubr.f32.mxu0 0.0
    %2145 = vmatmul.mubr.f32.gmra.mxu0 %v2073
    %v2146 = vpop.f32.mrf.mxu0
    %v2147 = vadd.f32 0.0, %v2146
    %v2148 = vpop.f32.mrf.mxu0
    %2149 = vdwg.mxu0
    %v2150 = vadd.f32 %v1950, %v2142
    %v2151 = vadd.f32 %v1955, %v2147
    %v2152 = vmul.f32 %v1556, %v899
    %v2153 = vmul.f32 %v1561, %v899
    %v2155 = vsel %vm136, %v2152, 0
    %v2158 = vsel %vm136, %v2153, 0
    %2160 = vmatprep.subr.mxu0 0.0
    %2161 = vmatpush1.xpose.msra.mxu0 0.0
    %2162 = vmatprep.subr.mxu0 0.0
    %2163 = vmatpush1.xpose.msra.mxu0 0.0
    %2164 = vmatprep.subr.mxu0 0.0
    %2165 = vmatpush1.xpose.msra.mxu0 0.0
    %2166 = vmatprep.subr.mxu0 0.0
    %2167 = vmatpush1.xpose.msra.mxu0 0.0
    %2168 = vmatprep.subr.mxu0 0.0
    %2169 = vmatpush1.xpose.msra.mxu0 0.0
    %2170 = vmatprep.subr.mxu0 0.0
    %2171 = vmatpush1.xpose.msra.mxu0 0.0
    %2172 = vmatprep.subr.mxu0 0.0
    %2173 = vmatpush1.xpose.msra.mxu0 0.0
    %2174 = vmatprep.subr.mxu0 0.0
    %2175 = vmatpush1.xpose.msra.mxu0 0.0
    %2176 = vmatprep.subr.mxu0 0.0
    %2177 = vmatpush1.xpose.msra.mxu0 0.0
    %2178 = vmatprep.subr.mxu0 0.0
    %2179 = vmatpush1.xpose.msra.mxu0 0.0
    %2180 = vmatprep.subr.mxu0 0.0
    %2181 = vmatpush1.xpose.msra.mxu0 0.0
    %2182 = vmatprep.subr.mxu0 0.0
    %2183 = vmatpush1.xpose.msra.mxu0 0.0
    %2184 = vmatprep.subr.mxu0 0.0
    %2185 = vmatpush1.xpose.msra.mxu0 0.0
    %2186 = vmatprep.subr.mxu0 0.0
    %2187 = vmatpush1.xpose.msra.mxu0 0.0
    %2188 = vmatprep.subr.mxu0 0.0
    %2189 = vmatpush1.xpose.msra.mxu0 %v1580
    %2190 = vmatprep.subr.mxu0 0.0
    %2191 = vmatpush1.xpose.msra.mxu0 %v1578
    %2192 = vmatprep.subr.mxu0 0.0
    %2193 = vmatpush2.xpose.msra.mxu0 0.0
    %2194 = vmatprep.subr.mxu0 0.0
    %2195 = vmatpush2.xpose.msra.mxu0 0.0
    %2196 = vmatprep.subr.mxu0 0.0
    %2197 = vmatpush2.xpose.msra.mxu0 0.0
    %2198 = vmatprep.subr.mxu0 0.0
    %2199 = vmatpush2.xpose.msra.mxu0 0.0
    %2200 = vmatprep.subr.mxu0 0.0
    %2201 = vmatpush2.xpose.msra.mxu0 0.0
    %2202 = vmatprep.subr.mxu0 0.0
    %2203 = vmatpush2.xpose.msra.mxu0 0.0
    %2204 = vmatprep.subr.mxu0 0.0
    %2205 = vmatpush2.xpose.msra.mxu0 0.0
    %2206 = vmatprep.subr.mxu0 0.0
    %2207 = vmatpush2.xpose.msra.mxu0 0.0
    %2208 = vmatprep.subr.mxu0 0.0
    %2209 = vmatpush2.xpose.msra.mxu0 0.0
    %2210 = vmatprep.subr.mxu0 0.0
    %2211 = vmatpush2.xpose.msra.mxu0 0.0
    %2212 = vmatprep.subr.mxu0 0.0
    %2213 = vmatpush2.xpose.msra.mxu0 0.0
    %2214 = vmatprep.subr.mxu0 0.0
    %2215 = vmatpush2.xpose.msra.mxu0 0.0
    %2216 = vmatprep.subr.mxu0 0.0
    %2217 = vmatpush2.xpose.msra.mxu0 0.0
    %2218 = vmatprep.subr.mxu0 0.0
    %2219 = vmatpush2.xpose.msra.mxu0 0.0
    %2220 = vmatprep.subr.mxu0 0.0
    %2221 = vmatpush2.xpose.msra.mxu0 0.0
    %2222 = vmatprep.subr.mxu0 0.0
    %2223 = vmatpush2.xpose.msra.mxu0 0.0
    %2224 = vmatprep.mubr.f32.mxu0 0.0
    %2225 = vmatmul.mubr.f32.gmra.mxu0 %v2155
    %v2226 = vpop.f32.mrf.mxu0
    %v2227 = vadd.f32 0.0, %v2226
    %v2228 = vpop.f32.mrf.mxu0
    %2229 = vmatprep.mubr.f32.mxu0 0.0
    %2230 = vmatmul.mubr.f32.gmra.mxu0 %v2158
    %v2231 = vpop.f32.mrf.mxu0
    %v2232 = vadd.f32 0.0, %v2231
    %v2233 = vpop.f32.mrf.mxu0
    %2234 = vdwg.mxu0
    %v2235 = vmul.f32 %v2227, 0.35355338
    %v2236 = vmul.f32 %v2232, 0.35355338
    %v2237 = vadd.f32 %v2235, %v190
    %v2238 = vadd.f32 %v2236, %v191
    %v2239 = vmul.f32 %v2237, 1.442695
    %v2240 = vpow.pop %v2239
    %v2241 = vmul.f32 %v2238, 1.442695
    %v2242 = vpow.pop %v2241
    %v2243 = vsel %vm388, %v2240, 0.0
    %2244 = vadd.xlane.f32.xlu0 %v2243
    %v2245 = vpop.xlane.xlu0 %2244
    %v2246 = vsel %vm388, %v2242, 0.0
    %2247 = vadd.xlane.f32.xlu0 %v2246
    %v2248 = vpop.xlane.xlu0 %2247
    %v2249 = vrcp.pop %v2245
    %v2250 = vrcp.pop %v2248
    %v2251 = vmul.f32 %v2240, %v2249
    %v2252 = vmul.f32 %v2242, %v2250
    %v2253 = vmul.f32 %v1556, %v1003
    %v2254 = vmul.f32 %v1561, %v1003
    %2257 = vrot.lane.b32.xlu0 %v2253, 64
    %v2258 = vpop.permute.xlu0 %2257
    %2259 = vrot.lane.b32.xlu0 %v2254, 64
    %v2260 = vpop.permute.xlu0 %2259
    %v2264 = vsel %vm388, %v2251, 0
    %v2267 = vsel %vm388, %v2252, 0
    %2269 = vmatprep.subr.mxu0 0.0
    %2270 = vmatpush1.msra.mxu0 0.0
    %2271 = vmatprep.subr.mxu0 0.0
    %2272 = vmatpush1.msra.mxu0 0.0
    %2273 = vmatprep.subr.mxu0 0.0
    %2274 = vmatpush1.msra.mxu0 0.0
    %2275 = vmatprep.subr.mxu0 0.0
    %2276 = vmatpush1.msra.mxu0 0.0
    %2277 = vmatprep.subr.mxu0 0.0
    %2278 = vmatpush1.msra.mxu0 0.0
    %2279 = vmatprep.subr.mxu0 0.0
    %2280 = vmatpush1.msra.mxu0 0.0
    %2281 = vmatprep.subr.mxu0 0.0
    %2282 = vmatpush1.msra.mxu0 0.0
    %2283 = vmatprep.subr.mxu0 0.0
    %2284 = vmatpush1.msra.mxu0 0.0
    %2285 = vmatprep.subr.mxu0 0.0
    %2286 = vmatpush1.msra.mxu0 0.0
    %2287 = vmatprep.subr.mxu0 0.0
    %2288 = vmatpush1.msra.mxu0 0.0
    %2289 = vmatprep.subr.mxu0 0.0
    %2290 = vmatpush1.msra.mxu0 0.0
    %2291 = vmatprep.subr.mxu0 0.0
    %2292 = vmatpush1.msra.mxu0 0.0
    %2293 = vmatprep.subr.mxu0 0.0
    %2294 = vmatpush1.msra.mxu0 0.0
    %2295 = vmatprep.subr.mxu0 0.0
    %2296 = vmatpush1.msra.mxu0 0.0
    %2297 = vmatprep.subr.mxu0 0.0
    %2298 = vmatpush1.msra.mxu0 %v2260
    %2299 = vmatprep.subr.mxu0 0.0
    %2300 = vmatpush1.msra.mxu0 %v2258
    %2301 = vmatprep.subr.mxu0 0.0
    %2302 = vmatpush2.msra.mxu0 0.0
    %2303 = vmatprep.subr.mxu0 0.0
    %2304 = vmatpush2.msra.mxu0 0.0
    %2305 = vmatprep.subr.mxu0 0.0
    %2306 = vmatpush2.msra.mxu0 0.0
    %2307 = vmatprep.subr.mxu0 0.0
    %2308 = vmatpush2.msra.mxu0 0.0
    %2309 = vmatprep.subr.mxu0 0.0
    %2310 = vmatpush2.msra.mxu0 0.0
    %2311 = vmatprep.subr.mxu0 0.0
    %2312 = vmatpush2.msra.mxu0 0.0
    %2313 = vmatprep.subr.mxu0 0.0
    %2314 = vmatpush2.msra.mxu0 0.0
    %2315 = vmatprep.subr.mxu0 0.0
    %2316 = vmatpush2.msra.mxu0 0.0
    %2317 = vmatprep.subr.mxu0 0.0
    %2318 = vmatpush2.msra.mxu0 0.0
    %2319 = vmatprep.subr.mxu0 0.0
    %2320 = vmatpush2.msra.mxu0 0.0
    %2321 = vmatprep.subr.mxu0 0.0
    %2322 = vmatpush2.msra.mxu0 0.0
    %2323 = vmatprep.subr.mxu0 0.0
    %2324 = vmatpush2.msra.mxu0 0.0
    %2325 = vmatprep.subr.mxu0 0.0
    %2326 = vmatpush2.msra.mxu0 0.0
    %2327 = vmatprep.subr.mxu0 0.0
    %2328 = vmatpush2.msra.mxu0 0.0
    %2329 = vmatprep.subr.mxu0 0.0
    %2330 = vmatpush2.msra.mxu0 0.0
    %2331 = vmatprep.subr.mxu0 0.0
    %2332 = vmatpush2.msra.mxu0 0.0
    %2333 = vmatprep.mubr.f32.mxu0 0.0
    %2334 = vmatmul.mubr.f32.gmra.mxu0 %v2264
    %v2335 = vpop.f32.mrf.mxu0
    %v2336 = vadd.f32 0.0, %v2335
    %v2337 = vpop.f32.mrf.mxu0
    %2338 = vmatprep.mubr.f32.mxu0 0.0
    %2339 = vmatmul.mubr.f32.gmra.mxu0 %v2267
    %v2340 = vpop.f32.mrf.mxu0
    %v2341 = vadd.f32 0.0, %v2340
    %v2342 = vpop.f32.mrf.mxu0
    %2343 = vdwg.mxu0
    %v2344 = vadd.f32 %v2150, %v2336
    %v2345 = vadd.f32 %v2151, %v2341
    %v2346 = vld [vmem:[#allocation2 + $0x118] sm:$0xff]
    %v2347 = vld [vmem:[#allocation2 + $0x120] sm:$0xff]
    %v2348 = vld [vmem:[#allocation2 + $0x128] sm:$0xff]
    %v2349 = vld [vmem:[#allocation2 + $0x130] sm:$0xff]
    %v2350 = vld [vmem:[#allocation2 + $0x199] sm:$0x1]
    %v2351 = vlaneseq
    %v2352 = vshrl.u32 %v2351, 7
    %v2353 = vsub.s32 0, %v2352
    %v2354 = vrot.slane %v2350, %v2353
    %v2356 = vsel %vm136, %v2344, 0
    %v2359 = vsel %vm136, %v2345, 0
    %2361 = vmatprep.subr.mxu0 0.0
    %2362 = vmatpush1.msra.mxu0 0.0
    %2363 = vmatprep.subr.mxu0 0.0
    %2364 = vmatpush1.msra.mxu0 0.0
    %2365 = vmatprep.subr.mxu0 0.0
    %2366 = vmatpush1.msra.mxu0 0.0
    %2367 = vmatprep.subr.mxu0 0.0
    %2368 = vmatpush1.msra.mxu0 0.0
    %2369 = vmatprep.subr.mxu0 0.0
    %2370 = vmatpush1.msra.mxu0 0.0
    %2371 = vmatprep.subr.mxu0 0.0
    %2372 = vmatpush1.msra.mxu0 0.0
    %2373 = vmatprep.subr.mxu0 0.0
    %2374 = vmatpush1.msra.mxu0 0.0
    %2375 = vmatprep.subr.mxu0 0.0
    %2376 = vmatpush1.msra.mxu0 0.0
    %2377 = vmatprep.subr.mxu0 0.0
    %2378 = vmatpush1.msra.mxu0 0.0
    %2379 = vmatprep.subr.mxu0 0.0
    %2380 = vmatpush1.msra.mxu0 0.0
    %2381 = vmatprep.subr.mxu0 0.0
    %2382 = vmatpush1.msra.mxu0 0.0
    %2383 = vmatprep.subr.mxu0 0.0
    %2384 = vmatpush1.msra.mxu0 0.0
    %2385 = vmatprep.subr.mxu0 0.0
    %2386 = vmatpush1.msra.mxu0 %v2349
    %2387 = vmatprep.subr.mxu0 0.0
    %2388 = vmatpush1.msra.mxu0 %v2348
    %2389 = vmatprep.subr.mxu0 0.0
    %2390 = vmatpush1.msra.mxu0 %v2347
    %2391 = vmatprep.subr.mxu0 0.0
    %2392 = vmatpush1.msra.mxu0 %v2346
    %2393 = vmatprep.subr.mxu0 0.0
    %2394 = vmatpush2.msra.mxu0 0.0
    %2395 = vmatprep.subr.mxu0 0.0
    %2396 = vmatpush2.msra.mxu0 0.0
    %2397 = vmatprep.subr.mxu0 0.0
    %2398 = vmatpush2.msra.mxu0 0.0
    %2399 = vmatprep.subr.mxu0 0.0
    %2400 = vmatpush2.msra.mxu0 0.0
    %2401 = vmatprep.subr.mxu0 0.0
    %2402 = vmatpush2.msra.mxu0 0.0
    %2403 = vmatprep.subr.mxu0 0.0
    %2404 = vmatpush2.msra.mxu0 0.0
    %2405 = vmatprep.subr.mxu0 0.0
    %2406 = vmatpush2.msra.mxu0 0.0
    %2407 = vmatprep.subr.mxu0 0.0
    %2408 = vmatpush2.msra.mxu0 0.0
    %2409 = vmatprep.subr.mxu0 0.0
    %2410 = vmatpush2.msra.mxu0 0.0
    %2411 = vmatprep.subr.mxu0 0.0
    %2412 = vmatpush2.msra.mxu0 0.0
    %2413 = vmatprep.subr.mxu0 0.0
    %2414 = vmatpush2.msra.mxu0 0.0
    %2415 = vmatprep.subr.mxu0 0.0
    %2416 = vmatpush2.msra.mxu0 0.0
    %2417 = vmatprep.subr.mxu0 0.0
    %2418 = vmatpush2.msra.mxu0 0.0
    %2419 = vmatprep.subr.mxu0 0.0
    %2420 = vmatpush2.msra.mxu0 0.0
    %2421 = vmatprep.subr.mxu0 0.0
    %2422 = vmatpush2.msra.mxu0 0.0
    %2423 = vmatprep.subr.mxu0 0.0
    %2424 = vmatpush2.msra.mxu0 0.0
    %2425 = vmatprep.mubr.f32.mxu0 0.0
    %2426 = vmatmul.mubr.f32.gmra.mxu0 %v2356
    %v2427 = vpop.f32.mrf.mxu0
    %v2428 = vadd.f32 %v2354, %v2427
    %v2429 = vpop.f32.mrf.mxu0
    %2430 = vmatprep.mubr.f32.mxu0 0.0
    %2431 = vmatmul.mubr.f32.gmra.mxu0 %v2359
    %v2432 = vpop.f32.mrf.mxu0
    %v2433 = vadd.f32 %v2354, %v2432
    %v2434 = vpop.f32.mrf.mxu0
    %2435 = vdwg.mxu0
    %v2436 = vadd.f32 %v2428, %v1472
    %v2437 = vadd.f32 %v2433, %v1473
    %v2438 = vld [vmem:[#allocation2 + $0x19a] sm:$0x1]
    %v2439 = vld [vmem:[#allocation2 + $0x19b] sm:$0x1]
    %v2440 = vsel %vm136, %v2436, 0.0
    %2441 = vadd.xlane.f32.xlu0 %v2440
    %v2442 = vpop.xlane.xlu0 %2441
    %v2443 = vsel %vm136, %v2437, 0.0
    %2444 = vadd.xlane.f32.xlu0 %v2443
    %v2445 = vpop.xlane.xlu0 %2444
    %v2446 = vmul.f32 %v2442, %v143
    %v2447 = vmul.f32 %v2445, %v143
    %v2448 = vsub.f32 %v2436, %v2446
    %v2449 = vsub.f32 %v2437, %v2447
    %v2450 = vmul.f32 %v2448, %v2448
    %v2451 = vmul.f32 %v2449, %v2449
    %v2452 = vsel %vm136, %v2450, 0.0
    %2453 = vadd.xlane.f32.xlu0 %v2452
    %v2454 = vpop.xlane.xlu0 %2453
    %v2455 = vsel %vm136, %v2451, 0.0
    %2456 = vadd.xlane.f32.xlu0 %v2455
    %v2457 = vpop.xlane.xlu0 %2456
    %v2458 = vmul.f32 %v2454, %v143
    %v2459 = vmul.f32 %v2457, %v143
    %v2460 = vadd.f32 %v2458, 1e-12
    %v2461 = vadd.f32 %v2459, 1e-12
    %v2462 = vrsqrt.pop %v2460
    %v2463 = vrsqrt.pop %v2461
    %v2464 = vmul.f32 %v2448, %v2462
    %v2465 = vmul.f32 %v2449, %v2463
    %v2466 = vlaneseq
    %v2467 = vshrl.u32 %v2466, 7
    %v2468 = vsub.s32 0, %v2467
    %v2469 = vrot.slane %v2438, %v2468
    %v2470 = vmul.f32 %v2464, %v2469
    %v2471 = vmul.f32 %v2465, %v2469
    %v2472 = vlaneseq
    %v2473 = vshrl.u32 %v2472, 7
    %v2474 = vsub.s32 0, %v2473
    %v2475 = vrot.slane %v2439, %v2474
    %v2476 = vadd.f32 %v2470, %v2475
    %v2477 = vadd.f32 %v2471, %v2475
    %v2478 = vld [vmem:[#allocation2 + $0x138] sm:$0xff]
    %v2479 = vld [vmem:[#allocation2 + $0x140] sm:$0xff]
    %v2480 = vld [vmem:[#allocation2 + $0x148] sm:$0xff]
    %v2481 = vld [vmem:[#allocation2 + $0x150] sm:$0xff]
    %v2482 = vld [vmem:[#allocation2 + $0x19c] sm:$0x1]
    %v2483 = vlaneseq
    %v2484 = vshrl.u32 %v2483, 7
    %v2485 = vsub.s32 0, %v2484
    %v2486 = vrot.slane %v2482, %v2485
    %v2488 = vsel %vm136, %v2476, 0
    %v2491 = vsel %vm136, %v2477, 0
    %2493 = vmatprep.subr.mxu0 0.0
    %2494 = vmatpush1.msra.mxu0 0.0
    %2495 = vmatprep.subr.mxu0 0.0
    %2496 = vmatpush1.msra.mxu0 0.0
    %2497 = vmatprep.subr.mxu0 0.0
    %2498 = vmatpush1.msra.mxu0 0.0
    %2499 = vmatprep.subr.mxu0 0.0
    %2500 = vmatpush1.msra.mxu0 0.0
    %2501 = vmatprep.subr.mxu0 0.0
    %2502 = vmatpush1.msra.mxu0 0.0
    %2503 = vmatprep.subr.mxu0 0.0
    %2504 = vmatpush1.msra.mxu0 0.0
    %2505 = vmatprep.subr.mxu0 0.0
    %2506 = vmatpush1.msra.mxu0 0.0
    %2507 = vmatprep.subr.mxu0 0.0
    %2508 = vmatpush1.msra.mxu0 0.0
    %2509 = vmatprep.subr.mxu0 0.0
    %2510 = vmatpush1.msra.mxu0 0.0
    %2511 = vmatprep.subr.mxu0 0.0
    %2512 = vmatpush1.msra.mxu0 0.0
    %2513 = vmatprep.subr.mxu0 0.0
    %2514 = vmatpush1.msra.mxu0 0.0
    %2515 = vmatprep.subr.mxu0 0.0
    %2516 = vmatpush1.msra.mxu0 0.0
    %2517 = vmatprep.subr.mxu0 0.0
    %2518 = vmatpush1.msra.mxu0 %v2481
    %2519 = vmatprep.subr.mxu0 0.0
    %2520 = vmatpush1.msra.mxu0 %v2480
    %2521 = vmatprep.subr.mxu0 0.0
    %2522 = vmatpush1.msra.mxu0 %v2479
    %2523 = vmatprep.subr.mxu0 0.0
    %2524 = vmatpush1.msra.mxu0 %v2478
    %2525 = vmatprep.subr.mxu0 0.0
    %2526 = vmatpush2.msra.mxu0 0.0
    %2527 = vmatprep.subr.mxu0 0.0
    %2528 = vmatpush2.msra.mxu0 0.0
    %2529 = vmatprep.subr.mxu0 0.0
    %2530 = vmatpush2.msra.mxu0 0.0
    %2531 = vmatprep.subr.mxu0 0.0
    %2532 = vmatpush2.msra.mxu0 0.0
    %2533 = vmatprep.subr.mxu0 0.0
    %2534 = vmatpush2.msra.mxu0 0.0
    %2535 = vmatprep.subr.mxu0 0.0
    %2536 = vmatpush2.msra.mxu0 0.0
    %2537 = vmatprep.subr.mxu0 0.0
    %2538 = vmatpush2.msra.mxu0 0.0
    %2539 = vmatprep.subr.mxu0 0.0
    %2540 = vmatpush2.msra.mxu0 0.0
    %2541 = vmatprep.subr.mxu0 0.0
    %2542 = vmatpush2.msra.mxu0 0.0
    %2543 = vmatprep.subr.mxu0 0.0
    %2544 = vmatpush2.msra.mxu0 0.0
    %2545 = vmatprep.subr.mxu0 0.0
    %2546 = vmatpush2.msra.mxu0 0.0
    %2547 = vmatprep.subr.mxu0 0.0
    %2548 = vmatpush2.msra.mxu0 0.0
    %2549 = vmatprep.subr.mxu0 0.0
    %2550 = vmatpush2.msra.mxu0 0.0
    %2551 = vmatprep.subr.mxu0 0.0
    %2552 = vmatpush2.msra.mxu0 0.0
    %2553 = vmatprep.subr.mxu0 0.0
    %2554 = vmatpush2.msra.mxu0 0.0
    %2555 = vmatprep.subr.mxu0 0.0
    %2556 = vmatpush2.msra.mxu0 0.0
    %2557 = vmatprep.mubr.f32.mxu0 0.0
    %2558 = vmatmul.mubr.f32.gmra.mxu0 %v2488
    %v2559 = vpop.f32.mrf.mxu0
    %v2560 = vadd.f32 %v2486, %v2559
    %v2561 = vpop.f32.mrf.mxu0
    %2562 = vmatprep.mubr.f32.mxu0 0.0
    %2563 = vmatmul.mubr.f32.gmra.mxu0 %v2491
    %v2564 = vpop.f32.mrf.mxu0
    %v2565 = vadd.f32 %v2486, %v2564
    %v2566 = vpop.f32.mrf.mxu0
    %2567 = vdwg.mxu0
    %v2568 = vmul.f32 %v2560, %v2560
    %v2569 = vmul.f32 %v2565, %v2565
    %v2570 = vmul.f32 %v2560, %v2568
    %v2571 = vmul.f32 %v2565, %v2569
    %v2572 = vmul.f32 %v2570, 0.044715
    %v2573 = vmul.f32 %v2571, 0.044715
    %v2574 = vadd.f32 %v2560, %v2572
    %v2575 = vadd.f32 %v2565, %v2573
    %v2576 = vmul.f32 %v2574, 0.7978846
    %v2577 = vmul.f32 %v2575, 0.7978846
    %v2578 = vtanh.pop %v2576
    %v2579 = vtanh.pop %v2577
    %v2580 = vadd.f32 %v2578, 1.0
    %v2581 = vadd.f32 %v2579, 1.0
    %v2582 = vmul.f32 %v2580, 0.5
    %v2583 = vmul.f32 %v2581, 0.5
    %v2584 = vmul.f32 %v2560, %v2582
    %v2585 = vmul.f32 %v2565, %v2583
    %v2586 = vld [vmem:[#allocation2 + $0x158] sm:$0xff]
    %v2587 = vld [vmem:[#allocation2 + $0x160] sm:$0xff]
    %v2588 = vld [vmem:[#allocation2 + $0x168] sm:$0xff]
    %v2589 = vld [vmem:[#allocation2 + $0x170] sm:$0xff]
    %v2590 = vld [vmem:[#allocation2 + $0x178] sm:$0xff]
    %v2591 = vld [vmem:[#allocation2 + $0x180] sm:$0xff]
    %v2592 = vld [vmem:[#allocation2 + $0x188] sm:$0xff]
    %v2593 = vld [vmem:[#allocation2 + $0x190] sm:$0xff]
    %v2594 = vld [vmem:[#allocation2 + $0x19d] sm:$0x1]
    %v2595 = vlaneseq
    %v2596 = vshrl.u32 %v2595, 7
    %v2597 = vsub.s32 0, %v2596
    %v2598 = vrot.slane %v2594, %v2597
    %v2600 = vsel %vm52, %v2584, 0
    %v2603 = vsel %vm52, %v2585, 0
    %2605 = vmatprep.subr.mxu0 0.0
    %2606 = vmatpush1.msra.mxu0 0.0
    %2607 = vmatprep.subr.mxu0 0.0
    %2608 = vmatpush1.msra.mxu0 0.0
    %2609 = vmatprep.subr.mxu0 0.0
    %2610 = vmatpush1.msra.mxu0 0.0
    %2611 = vmatprep.subr.mxu0 0.0
    %2612 = vmatpush1.msra.mxu0 0.0
    %2613 = vmatprep.subr.mxu0 0.0
    %2614 = vmatpush1.msra.mxu0 0.0
    %2615 = vmatprep.subr.mxu0 0.0
    %2616 = vmatpush1.msra.mxu0 0.0
    %2617 = vmatprep.subr.mxu0 0.0
    %2618 = vmatpush1.msra.mxu0 0.0
    %2619 = vmatprep.subr.mxu0 0.0
    %2620 = vmatpush1.msra.mxu0 0.0
    %2621 = vmatprep.subr.mxu0 0.0
    %2622 = vmatpush1.msra.mxu0 %v2593
    %2623 = vmatprep.subr.mxu0 0.0
    %2624 = vmatpush1.msra.mxu0 %v2592
    %2625 = vmatprep.subr.mxu0 0.0
    %2626 = vmatpush1.msra.mxu0 %v2591
    %2627 = vmatprep.subr.mxu0 0.0
    %2628 = vmatpush1.msra.mxu0 %v2590
    %2629 = vmatprep.subr.mxu0 0.0
    %2630 = vmatpush1.msra.mxu0 %v2589
    %2631 = vmatprep.subr.mxu0 0.0
    %2632 = vmatpush1.msra.mxu0 %v2588
    %2633 = vmatprep.subr.mxu0 0.0
    %2634 = vmatpush1.msra.mxu0 %v2587
    %2635 = vmatprep.subr.mxu0 0.0
    %2636 = vmatpush1.msra.mxu0 %v2586
    %2637 = vmatprep.subr.mxu0 0.0
    %2638 = vmatpush2.msra.mxu0 0.0
    %2639 = vmatprep.subr.mxu0 0.0
    %2640 = vmatpush2.msra.mxu0 0.0
    %2641 = vmatprep.subr.mxu0 0.0
    %2642 = vmatpush2.msra.mxu0 0.0
    %2643 = vmatprep.subr.mxu0 0.0
    %2644 = vmatpush2.msra.mxu0 0.0
    %2645 = vmatprep.subr.mxu0 0.0
    %2646 = vmatpush2.msra.mxu0 0.0
    %2647 = vmatprep.subr.mxu0 0.0
    %2648 = vmatpush2.msra.mxu0 0.0
    %2649 = vmatprep.subr.mxu0 0.0
    %2650 = vmatpush2.msra.mxu0 0.0
    %2651 = vmatprep.subr.mxu0 0.0
    %2652 = vmatpush2.msra.mxu0 0.0
    %2653 = vmatprep.subr.mxu0 0.0
    %2654 = vmatpush2.msra.mxu0 0.0
    %2655 = vmatprep.subr.mxu0 0.0
    %2656 = vmatpush2.msra.mxu0 0.0
    %2657 = vmatprep.subr.mxu0 0.0
    %2658 = vmatpush2.msra.mxu0 0.0
    %2659 = vmatprep.subr.mxu0 0.0
    %2660 = vmatpush2.msra.mxu0 0.0
    %2661 = vmatprep.subr.mxu0 0.0
    %2662 = vmatpush2.msra.mxu0 0.0
    %2663 = vmatprep.subr.mxu0 0.0
    %2664 = vmatpush2.msra.mxu0 0.0
    %2665 = vmatprep.subr.mxu0 0.0
    %2666 = vmatpush2.msra.mxu0 0.0
    %2667 = vmatprep.subr.mxu0 0.0
    %2668 = vmatpush2.msra.mxu0 0.0
    %2669 = vmatprep.mubr.f32.mxu0 0.0
    %2670 = vmatmul.mubr.f32.gmra.mxu0 %v2600
    %v2671 = vpop.f32.mrf.mxu0
    %v2672 = vadd.f32 %v2598, %v2671
    %v2673 = vpop.f32.mrf.mxu0
    %2674 = vmatprep.mubr.f32.mxu0 0.0
    %2675 = vmatmul.mubr.f32.gmra.mxu0 %v2603
    %v2676 = vpop.f32.mrf.mxu0
    %v2677 = vadd.f32 %v2598, %v2676
    %v2678 = vpop.f32.mrf.mxu0
    %2679 = vdwg.mxu0
    %v2680 = vadd.f32 %v2672, %v2476
    %v2681 = vadd.f32 %v2677, %v2477
    %v2682 = vld [vmem:[#allocation2 + $0x19e] sm:$0x1]
    %v2683 = vld [vmem:[#allocation2 + $0x19f] sm:$0x1]
    %v2684 = vsel %vm136, %v2680, 0.0
    %2685 = vadd.xlane.f32.xlu0 %v2684
    %v2686 = vpop.xlane.xlu0 %2685
    %v2687 = vsel %vm136, %v2681, 0.0
    %2688 = vadd.xlane.f32.xlu0 %v2687
    %v2689 = vpop.xlane.xlu0 %2688
    %v2690 = vmul.f32 %v2686, %v143
    %v2691 = vmul.f32 %v2689, %v143
    %v2692 = vsub.f32 %v2680, %v2690
    %v2693 = vsub.f32 %v2681, %v2691
    %v2694 = vmul.f32 %v2692, %v2692
    %v2695 = vmul.f32 %v2693, %v2693
    %v2696 = vsel %vm136, %v2694, 0.0
    %2697 = vadd.xlane.f32.xlu0 %v2696
    %v2698 = vpop.xlane.xlu0 %2697
    %v2699 = vsel %vm136, %v2695, 0.0
    %2700 = vadd.xlane.f32.xlu0 %v2699
    %v2701 = vpop.xlane.xlu0 %2700
    %v2702 = vmul.f32 %v2698, %v143
    %v2703 = vmul.f32 %v2701, %v143
    %v2704 = vadd.f32 %v2702, 1e-12
    %v2705 = vadd.f32 %v2703, 1e-12
    %v2706 = vrsqrt.pop %v2704
    %v2707 = vrsqrt.pop %v2705
    %v2708 = vmul.f32 %v2692, %v2706
    %v2709 = vmul.f32 %v2693, %v2707
    %v2710 = vlaneseq
    %v2711 = vshrl.u32 %v2710, 7
    %v2712 = vsub.s32 0, %v2711
    %v2713 = vrot.slane %v2682, %v2712
    %v2714 = vmul.f32 %v2708, %v2713
    %v2715 = vmul.f32 %v2709, %v2713
    %v2716 = vlaneseq
    %v2717 = vshrl.u32 %v2716, 7
    %v2718 = vsub.s32 0, %v2717
    %v2719 = vrot.slane %v2683, %v2718
    %v2720 = vadd.f32 %v2714, %v2719
    %v2721 = vadd.f32 %v2715, %v2719
    %v2722 = vld [vmem:[#allocation2 + $0x1e4] sm:$0x3]
    %v2724 = vsel %vm388, %v2722, 0
    %2726 = vmatprep.subr.mxu0 0.0
    %2727 = vmatpush1.msra.mxu0 0.0
    %2728 = vmatprep.subr.mxu0 0.0
    %2729 = vmatpush1.msra.mxu0 0.0
    %2730 = vmatprep.subr.mxu0 0.0
    %2731 = vmatpush1.msra.mxu0 0.0
    %2732 = vmatprep.subr.mxu0 0.0
    %2733 = vmatpush1.msra.mxu0 0.0
    %2734 = vmatprep.subr.mxu0 0.0
    %2735 = vmatpush1.msra.mxu0 0.0
    %2736 = vmatprep.subr.mxu0 0.0
    %2737 = vmatpush1.msra.mxu0 0.0
    %2738 = vmatprep.subr.mxu0 0.0
    %2739 = vmatpush1.msra.mxu0 0.0
    %2740 = vmatprep.subr.mxu0 0.0
    %2741 = vmatpush1.msra.mxu0 0.0
    %2742 = vmatprep.subr.mxu0 0.0
    %2743 = vmatpush1.msra.mxu0 0.0
    %2744 = vmatprep.subr.mxu0 0.0
    %2745 = vmatpush1.msra.mxu0 0.0
    %2746 = vmatprep.subr.mxu0 0.0
    %2747 = vmatpush1.msra.mxu0 0.0
    %2748 = vmatprep.subr.mxu0 0.0
    %2749 = vmatpush1.msra.mxu0 0.0
    %2750 = vmatprep.subr.mxu0 0.0
    %2751 = vmatpush1.msra.mxu0 0.0
    %2752 = vmatprep.subr.mxu0 0.0
    %2753 = vmatpush1.msra.mxu0 0.0
    %2754 = vmatprep.subr.mxu0 0.0
    %2755 = vmatpush1.msra.mxu0 %v2721
    %2756 = vmatprep.subr.mxu0 0.0
    %2757 = vmatpush1.msra.mxu0 %v2720
    %2758 = vmatprep.subr.mxu0 0.0
    %2759 = vmatpush2.msra.mxu0 0.0
    %2760 = vmatprep.subr.mxu0 0.0
    %2761 = vmatpush2.msra.mxu0 0.0
    %2762 = vmatprep.subr.mxu0 0.0
    %2763 = vmatpush2.msra.mxu0 0.0
    %2764 = vmatprep.subr.mxu0 0.0
    %2765 = vmatpush2.msra.mxu0 0.0
    %2766 = vmatprep.subr.mxu0 0.0
    %2767 = vmatpush2.msra.mxu0 0.0
    %2768 = vmatprep.subr.mxu0 0.0
    %2769 = vmatpush2.msra.mxu0 0.0
    %2770 = vmatprep.subr.mxu0 0.0
    %2771 = vmatpush2.msra.mxu0 0.0
    %2772 = vmatprep.subr.mxu0 0.0
    %2773 = vmatpush2.msra.mxu0 0.0
    %2774 = vmatprep.subr.mxu0 0.0
    %2775 = vmatpush2.msra.mxu0 0.0
    %2776 = vmatprep.subr.mxu0 0.0
    %2777 = vmatpush2.msra.mxu0 0.0
    %2778 = vmatprep.subr.mxu0 0.0
    %2779 = vmatpush2.msra.mxu0 0.0
    %2780 = vmatprep.subr.mxu0 0.0
    %2781 = vmatpush2.msra.mxu0 0.0
    %2782 = vmatprep.subr.mxu0 0.0
    %2783 = vmatpush2.msra.mxu0 0.0
    %2784 = vmatprep.subr.mxu0 0.0
    %2785 = vmatpush2.msra.mxu0 0.0
    %2786 = vmatprep.subr.mxu0 0.0
    %2787 = vmatpush2.msra.mxu0 0.0
    %2788 = vmatprep.subr.mxu0 0.0
    %2789 = vmatpush2.msra.mxu0 0.0
    %2790 = vmatprep.mubr.f32.mxu0 0.0
    %2791 = vmatmul.mubr.f32.gmra.mxu0 %v2724
    %v2792 = vpop.f32.mrf.mxu0
    %v2793 = vadd.f32 0.0, %v2792
    %v2794 = vpop.f32.mrf.mxu0
    %2795 = vdwg.mxu0
    %v2796 = vld [vmem:[#allocation2 + $0x1a2] sm:$0xff]
    %v2797 = vld [vmem:[#allocation2 + $0x1aa] sm:$0xff]
    %v2798 = vld [vmem:[#allocation2 + $0x1b2] sm:$0xff]
    %v2799 = vld [vmem:[#allocation2 + $0x1ba] sm:$0xff]
    %v2800 = vld [vmem:[#allocation2 + $0x1c2] sm:$0x1]
    %v2801 = vlaneseq
    %v2802 = vshrl.u32 %v2801, 7
    %v2803 = vsub.s32 0, %v2802
    %v2804 = vrot.slane %v2800, %v2803
    %v2806 = vsel %vm136, %v2793, 0
    %2808 = vmatprep.subr.mxu0 0.0
    %2809 = vmatpush1.msra.mxu0 0.0
    %2810 = vmatprep.subr.mxu0 0.0
    %2811 = vmatpush1.msra.mxu0 0.0
    %2812 = vmatprep.subr.mxu0 0.0
    %2813 = vmatpush1.msra.mxu0 0.0
    %2814 = vmatprep.subr.mxu0 0.0
    %2815 = vmatpush1.msra.mxu0 0.0
    %2816 = vmatprep.subr.mxu0 0.0
    %2817 = vmatpush1.msra.mxu0 0.0
    %2818 = vmatprep.subr.mxu0 0.0
    %2819 = vmatpush1.msra.mxu0 0.0
    %2820 = vmatprep.subr.mxu0 0.0
    %2821 = vmatpush1.msra.mxu0 0.0
    %2822 = vmatprep.subr.mxu0 0.0
    %2823 = vmatpush1.msra.mxu0 0.0
    %2824 = vmatprep.subr.mxu0 0.0
    %2825 = vmatpush1.msra.mxu0 0.0
    %2826 = vmatprep.subr.mxu0 0.0
    %2827 = vmatpush1.msra.mxu0 0.0
    %2828 = vmatprep.subr.mxu0 0.0
    %2829 = vmatpush1.msra.mxu0 0.0
    %2830 = vmatprep.subr.mxu0 0.0
    %2831 = vmatpush1.msra.mxu0 0.0
    %2832 = vmatprep.subr.mxu0 0.0
    %2833 = vmatpush1.msra.mxu0 %v2799
    %2834 = vmatprep.subr.mxu0 0.0
    %2835 = vmatpush1.msra.mxu0 %v2798
    %2836 = vmatprep.subr.mxu0 0.0
    %2837 = vmatpush1.msra.mxu0 %v2797
    %2838 = vmatprep.subr.mxu0 0.0
    %2839 = vmatpush1.msra.mxu0 %v2796
    %2840 = vmatprep.subr.mxu0 0.0
    %2841 = vmatpush2.msra.mxu0 0.0
    %2842 = vmatprep.subr.mxu0 0.0
    %2843 = vmatpush2.msra.mxu0 0.0
    %2844 = vmatprep.subr.mxu0 0.0
    %2845 = vmatpush2.msra.mxu0 0.0
    %2846 = vmatprep.subr.mxu0 0.0
    %2847 = vmatpush2.msra.mxu0 0.0
    %2848 = vmatprep.subr.mxu0 0.0
    %2849 = vmatpush2.msra.mxu0 0.0
    %2850 = vmatprep.subr.mxu0 0.0
    %2851 = vmatpush2.msra.mxu0 0.0
    %2852 = vmatprep.subr.mxu0 0.0
    %2853 = vmatpush2.msra.mxu0 0.0
    %2854 = vmatprep.subr.mxu0 0.0
    %2855 = vmatpush2.msra.mxu0 0.0
    %2856 = vmatprep.subr.mxu0 0.0
    %2857 = vmatpush2.msra.mxu0 0.0
    %2858 = vmatprep.subr.mxu0 0.0
    %2859 = vmatpush2.msra.mxu0 0.0
    %2860 = vmatprep.subr.mxu0 0.0
    %2861 = vmatpush2.msra.mxu0 0.0
    %2862 = vmatprep.subr.mxu0 0.0
    %2863 = vmatpush2.msra.mxu0 0.0
    %2864 = vmatprep.subr.mxu0 0.0
    %2865 = vmatpush2.msra.mxu0 0.0
    %2866 = vmatprep.subr.mxu0 0.0
    %2867 = vmatpush2.msra.mxu0 0.0
    %2868 = vmatprep.subr.mxu0 0.0
    %2869 = vmatpush2.msra.mxu0 0.0
    %2870 = vmatprep.subr.mxu0 0.0
    %2871 = vmatpush2.msra.mxu0 0.0
    %2872 = vmatprep.mubr.f32.mxu0 0.0
    %2873 = vmatmul.mubr.f32.gmra.mxu0 %v2806
    %v2874 = vpop.f32.mrf.mxu0
    %v2875 = vadd.f32 %v2804, %v2874
    %v2876 = vpop.f32.mrf.mxu0
    %2877 = vdwg.mxu0
    %v2878 = vtanh.pop %v2875
    %v2879 = vld [vmem:[#allocation2 + $0x1c3] sm:$0xff]
    %v2880 = vld [vmem:[#allocation2 + $0x1cb] sm:$0xff]
    %v2881 = vld [vmem:[#allocation2 + $0x1d3] sm:$0xff]
    %v2882 = vld [vmem:[#allocation2 + $0x1db] sm:$0xff]
    %v2883 = vld [vmem:[#allocation2 + $0x1e3] sm:$0x1]
    %v2884 = vlaneseq
    %v2885 = vshrl.u32 %v2884, 7
    %v2886 = vsub.s32 0, %v2885
    %v2887 = vrot.slane %v2883, %v2886
    %v2889 = vsel %vm136, %v2878, 0
    %2891 = vmatprep.subr.mxu0 0.0
    %2892 = vmatpush1.msra.mxu0 0.0
    %2893 = vmatprep.subr.mxu0 0.0
    %2894 = vmatpush1.msra.mxu0 0.0
    %2895 = vmatprep.subr.mxu0 0.0
    %2896 = vmatpush1.msra.mxu0 0.0
    %2897 = vmatprep.subr.mxu0 0.0
    %2898 = vmatpush1.msra.mxu0 0.0
    %2899 = vmatprep.subr.mxu0 0.0
    %2900 = vmatpush1.msra.mxu0 0.0
    %2901 = vmatprep.subr.mxu0 0.0
    %2902 = vmatpush1.msra.mxu0 0.0
    %2903 = vmatprep.subr.mxu0 0.0
    %2904 = vmatpush1.msra.mxu0 0.0
    %2905 = vmatprep.subr.mxu0 0.0
    %2906 = vmatpush1.msra.mxu0 0.0
    %2907 = vmatprep.subr.mxu0 0.0
    %2908 = vmatpush1.msra.mxu0 0.0
    %2909 = vmatprep.subr.mxu0 0.0
    %2910 = vmatpush1.msra.mxu0 0.0
    %2911 = vmatprep.subr.mxu0 0.0
    %2912 = vmatpush1.msra.mxu0 0.0
    %2913 = vmatprep.subr.mxu0 0.0
    %2914 = vmatpush1.msra.mxu0 0.0
    %2915 = vmatprep.subr.mxu0 0.0
    %2916 = vmatpush1.msra.mxu0 %v2882
    %2917 = vmatprep.subr.mxu0 0.0
    %2918 = vmatpush1.msra.mxu0 %v2881
    %2919 = vmatprep.subr.mxu0 0.0
    %2920 = vmatpush1.msra.mxu0 %v2880
    %2921 = vmatprep.subr.mxu0 0.0
    %2922 = vmatpush1.msra.mxu0 %v2879
    %2923 = vmatprep.subr.mxu0 0.0
    %2924 = vmatpush2.msra.mxu0 0.0
    %2925 = vmatprep.subr.mxu0 0.0
    %2926 = vmatpush2.msra.mxu0 0.0
    %2927 = vmatprep.subr.mxu0 0.0
    %2928 = vmatpush2.msra.mxu0 0.0
    %2929 = vmatprep.subr.mxu0 0.0
    %2930 = vmatpush2.msra.mxu0 0.0
    %2931 = vmatprep.subr.mxu0 0.0
    %2932 = vmatpush2.msra.mxu0 0.0
    %2933 = vmatprep.subr.mxu0 0.0
    %2934 = vmatpush2.msra.mxu0 0.0
    %2935 = vmatprep.subr.mxu0 0.0
    %2936 = vmatpush2.msra.mxu0 0.0
    %2937 = vmatprep.subr.mxu0 0.0
    %2938 = vmatpush2.msra.mxu0 0.0
    %2939 = vmatprep.subr.mxu0 0.0
    %2940 = vmatpush2.msra.mxu0 0.0
    %2941 = vmatprep.subr.mxu0 0.0
    %2942 = vmatpush2.msra.mxu0 0.0
    %2943 = vmatprep.subr.mxu0 0.0
    %2944 = vmatpush2.msra.mxu0 0.0
    %2945 = vmatprep.subr.mxu0 0.0
    %2946 = vmatpush2.msra.mxu0 0.0
    %2947 = vmatprep.subr.mxu0 0.0
    %2948 = vmatpush2.msra.mxu0 0.0
    %2949 = vmatprep.subr.mxu0 0.0
    %2950 = vmatpush2.msra.mxu0 0.0
    %2951 = vmatprep.subr.mxu0 0.0
    %2952 = vmatpush2.msra.mxu0 0.0
    %2953 = vmatprep.subr.mxu0 0.0
    %2954 = vmatpush2.msra.mxu0 0.0
    %2955 = vmatprep.mubr.f32.mxu0 0.0
    %2956 = vmatmul.mubr.f32.gmra.mxu0 %v2889
    %v2957 = vpop.f32.mrf.mxu0
    %v2958 = vadd.f32 %v2887, %v2957
    %v2959 = vpop.f32.mrf.mxu0
    %2960 = vdwg.mxu0
    %v2961 = vxor.u32 %v2958, 2147483648
    %v2962 = vmul.f32 %v2961, 1.442695
    %v2963 = vpow.pop %v2962
    %v2964 = vadd.f32 %v2963, 1.0
    %v2965 = vrcp.pop %v2964
    %v2966 = vmul.f32 1.0, %v2965
    %vm2967 = vcmask 1024
    %2968 = vst.msk [vmem:[%s3] sm:$0x3] %vm2967, %v2966
    // Predicated region
    $region18: #{sentiment_forward.1} parent=1 // pred_check
      _
    $region19: #{sentiment_forward.1} parent=1 // pred_check_branch
      %2970 = sbr.rel (0) target = $region21
    $region20: #{sentiment_forward.1} parent=1 // pred_region
      _
    $region21: #{sentiment_forward.1} parent=1 // pred_fallthru
      _
    // Predicated region
    $region22: #{sentiment_forward.1} parent=1 // pred_check
      _
    $region23: #{sentiment_forward.1} parent=1 // pred_check_branch
      %2972 = sbr.rel (0) target = $region25
    $region24: #{sentiment_forward.1} parent=1 // pred_region
      _
    $region25: #{sentiment_forward.1} parent=1 // pred_fallthru
      _
    %2973 = vsyncpa [#allocation3], 1

</llo_original>
